<compile_context>
chip_gen: v6e
topology: v6e:2x2x1
jax: 0.10.0
libtpu: 0.0.40
codegen_flags: <defaults>
</compile_context>

<pallas_src>
import math

import jax
import jax.numpy as jnp
from jax import lax
from jax.experimental import pallas as pl
from jax.experimental.pallas import tpu as pltpu


# ----------------------------------------------------------------------------
# helpers
# ----------------------------------------------------------------------------
def _bcast_spec(shape):
    """Full-array block, same block for every grid step (weights / biases)."""
    nd = len(shape)
    return pl.BlockSpec(tuple(shape), lambda i, _nd=nd: (0,) * _nd)


def _pad_rows(n, granule=8):
    return -(-n // granule) * granule


def _split_batch(n, granule=8, min_tile=16, max_grid=8):
    """(tile, grid) with tile*grid == n, tile % granule == 0, tile >= min_tile.

    Gives a 'parallel' grid axis (v7x megacore / pipelining) when the batch
    axis is big enough; otherwise a single whole-array program.
    """
    for g in range(max_grid, 1, -1):
        if n % g:
            continue
        t = n // g
        if t >= min_tile and t % granule == 0:
            return t, g
    return n, 1


# ----------------------------------------------------------------------------
# Pallas kernel 1: LSTM (num_layers) + attention + two LayerNorms
# ----------------------------------------------------------------------------
def _lstm_attn_kernel(x_ref, *refs):
    num_layers = (len(refs) - 7) // 3
    layer_refs = [refs[3 * i:3 * i + 3] for i in range(num_layers)]
    ln1_w, ln1_b, ln2_w, ln2_b = refs[3 * num_layers:3 * num_layers + 4]
    enc_ref = refs[3 * num_layers + 4]
    attn_ref = refs[3 * num_layers + 5]
    seq_ref = refs[3 * num_layers + 6]          # VMEM scratch (T, BMt, H) f32

    T, BMt, _ = x_ref.shape
    H = ln1_w.shape[-1]

    layer_in = x_ref[...]                       # (T, BMt, Fin) f32
    h = jnp.zeros((BMt, H), jnp.float32)
    for li, (wih_ref, whh_ref, b_ref) in enumerate(layer_refs):
        wih = wih_ref[...]                      # (Fin, 4H) bf16
        whh = whh_ref[...]                      # (H,   4H) bf16
        bias = b_ref[...]                       # (1,   4H) f32
        fin = layer_in.shape[-1]

        # hoisted input projection: ONE (T*BMt, Fin)@(Fin, 4H) MXU matmul for
        # all timesteps (layout-preserving reshape: BMt % 8 == 0 by padding).
        gx = jnp.dot(layer_in.reshape(T * BMt, fin).astype(jnp.bfloat16), wih,
                     preferred_element_type=jnp.float32) + bias   # (T*BMt, 4H)

        h = jnp.zeros((BMt, H), jnp.float32)
        c = jnp.zeros((BMt, H), jnp.float32)
        for t in range(T):                      # serial recurrence: only h@Whh
            g = gx[t * BMt:(t + 1) * BMt, :] + jnp.dot(
                h.astype(jnp.bfloat16), whh, preferred_element_type=jnp.float32)
            i_g = jax.nn.sigmoid(g[:, 0:H])
            f_g = jax.nn.sigmoid(g[:, H:2 * H])
            g_g = jnp.tanh(g[:, 2 * H:3 * H])
            o_g = jax.nn.sigmoid(g[:, 3 * H:4 * H])
            c = f_g * c + i_g * g_g
            h = o_g * jnp.tanh(c)
            seq_ref[t] = h                      # stacked outputs, no Python lists
        if li + 1 < num_layers:
            layer_in = seq_ref[...]             # next layer reads stacked scratch

    # attention: score_t = <o_t, h_last>, softmax over time, weighted context.
    seq = seq_ref[...]                                              # (T, BMt, H)
    scores = jnp.sum(seq * h[None, :, :], axis=-1, keepdims=True)   # (T, BMt, 1)
    mx = jnp.max(scores, axis=0, keepdims=True)
    ex = jnp.exp(scores - mx)
    attn = ex / jnp.sum(ex, axis=0, keepdims=True)                  # (T, BMt, 1)
    attn_ref[0] = attn

    ctx = jnp.sum(seq * attn, axis=0)                               # (BMt, H)

    def _layernorm(v, w, b, eps=1e-5):
        mu = jnp.mean(v, axis=-1, keepdims=True)
        var = jnp.mean((v - mu) ** 2, axis=-1, keepdims=True)
        return (v - mu) * jax.lax.rsqrt(var + eps) * w + b

    ctx = _layernorm(ctx, ln1_w[...], ln1_b[...])            # LSTMAttention.lnorm
    enc_ref[...] = _layernorm(ctx, ln2_w[...], ln2_b[...])   # MetaModel.layer_norm


def lstm_attention_encode(x, lstm_layers, ln1_w, ln1_b, ln2_w, ln2_b):
    """x: (BM, T, I) f32 -> encoded (BM, H) f32, attn (BM, T) f32."""
    BM, T, I = x.shape
    H = ln1_w.shape[0]
    BMp = _pad_rows(BM, 8)
    xt = jnp.transpose(x.astype(jnp.float32), (1, 0, 2))     # time-major (T, BM, I)
    if BMp != BM:
        xt = jnp.pad(xt, ((0, 0), (0, BMp - BM), (0, 0)))
    bm_tile, grid = _split_batch(BMp, granule=8, min_tile=16)

    ins = [xt]
    in_specs = [pl.BlockSpec((T, bm_tile, I), lambda i: (0, i, 0))]
    for (w_ih, w_hh, b_ih, b_hh) in lstm_layers:
        for a in (jnp.transpose(w_ih).astype(jnp.bfloat16),        # (in, 4H)
                  jnp.transpose(w_hh).astype(jnp.bfloat16),        # (H,  4H)
                  (b_ih + b_hh).reshape(1, -1).astype(jnp.float32)):
            ins.append(a)
            in_specs.append(_bcast_spec(a.shape))
    for a in (ln1_w, ln1_b, ln2_w, ln2_b):
        a2 = a.reshape(1, -1).astype(jnp.float32)
        ins.append(a2)
        in_specs.append(_bcast_spec(a2.shape))

    # TODO(synk): at much larger BM/T, set pltpu.CompilerParams(vmem_limit_bytes=...)
    # and shrink bm_tile for v7x's 64 MiB VMEM.
    enc, attn = pl.pallas_call(
        _lstm_attn_kernel,
        grid=(grid,),
        in_specs=in_specs,
        out_specs=(pl.BlockSpec((bm_tile, H), lambda i: (i, 0)),
                   pl.BlockSpec((1, T, bm_tile, 1), lambda i: (i, 0, 0, 0))),
        out_shape=(jax.ShapeDtypeStruct((BMp, H), jnp.float32),
                   jax.ShapeDtypeStruct((grid, T, bm_tile, 1), jnp.float32)),
        scratch_shapes=[pltpu.VMEM((T, bm_tile, H), jnp.float32)],
        compiler_params=pltpu.CompilerParams(
            dimension_semantics=("parallel",)),
    )(*ins)
    # (grid, T, bm_tile, 1) -> (BMp, T): layout plumbing outside the kernel.
    attn = attn.reshape(grid, T, bm_tile).transpose(0, 2, 1).reshape(BMp, T)
    return enc[:BM], attn[:BM]


# ----------------------------------------------------------------------------
# Pallas kernel 2: encoder Linear + ELU + mean over K (single matmul)
# ----------------------------------------------------------------------------
def _encoder_mean_kernel(x_ref, wT_ref, b_ref, out_ref):
    K, BNt, E = x_ref.shape
    x2 = x_ref[...].reshape(K * BNt, E).astype(jnp.bfloat16)       # aligned merge
    y = jnp.dot(x2, wT_ref[...], preferred_element_type=jnp.float32) + b_ref[...]
    y = jnp.where(y > 0, y, jnp.exp(jnp.minimum(y, 0.0)) - 1.0)    # ELU(alpha=1)
    out_ref[...] = jnp.mean(y.reshape(K, BNt, y.shape[-1]), axis=0)


def encoder_elu_mean(l_reshape, enc_w, enc_b):
    """l_reshape: (BN, K, E) -> (BN, 2E) = mean_K ELU(l @ W^T + b)."""
    BN, K, E = l_reshape.shape
    F = enc_w.shape[0]
    BNp = _pad_rows(BN, 8)
    xt = jnp.transpose(l_reshape.astype(jnp.float32), (1, 0, 2))   # (K, BN, E)
    if BNp != BN:
        xt = jnp.pad(xt, ((0, 0), (0, BNp - BN), (0, 0)))
    bn_tile, grid = _split_batch(BNp, granule=8, min_tile=8)
    out = pl.pallas_call(
        _encoder_mean_kernel,
        grid=(grid,),
        in_specs=[pl.BlockSpec((K, bn_tile, E), lambda i: (0, i, 0)),
                  _bcast_spec((E, F)), _bcast_spec((1, F))],
        out_specs=pl.BlockSpec((bn_tile, F), lambda i: (i, 0)),
        out_shape=jax.ShapeDtypeStruct((BNp, F), jnp.float32),
        compiler_params=pltpu.CompilerParams(dimension_semantics=("parallel",)),
    )(xt, jnp.transpose(enc_w).astype(jnp.bfloat16),
      enc_b.reshape(1, -1).astype(jnp.float32))
    return out[:BN]


# ----------------------------------------------------------------------------
# Pallas kernel 3: prediction head (scores + log_softmax + argmax), parallel
# over the task batch.  NLL mean / L2 are trivial XLA reductions in the wrapper.
# ----------------------------------------------------------------------------
def _predict_kernel(l_ref, p_ref, logp_ref, preds_ref):
    l = l_ref[0]                                # (M, E) bf16
    p = p_ref[0]                                # (N, E) bf16
    s = lax.dot_general(l, p, (((1,), (1,)), ((), ())),
                        preferred_element_type=jnp.float32)        # (M, N), no transpose
    mx = jnp.max(s, axis=-1, keepdims=True)
    lse = jnp.log(jnp.sum(jnp.exp(s - mx), axis=-1, keepdims=True)) + mx
    logp_ref[0] = s - lse
    M, N = s.shape
    cls = jax.lax.broadcasted_iota(jnp.int32, (M, N), 1)
    pred = jnp.min(jnp.where(s >= mx, cls, N), axis=-1, keepdims=True)  # first max
    preds_ref[0] = pred.astype(jnp.int32)


def predict_head(l, parameters, labels):
    """l: (B, M, E), parameters: (B, N, E), labels: int (B*M,)."""
    B, M, E = l.shape
    N = parameters.shape[1]
    logp, preds = pl.pallas_call(
        _predict_kernel,
        grid=(B,),
        in_specs=[pl.BlockSpec((1, M, E), lambda b: (b, 0, 0)),
                  pl.BlockSpec((1, N, E), lambda b: (b, 0, 0))],
        out_specs=(pl.BlockSpec((1, M, N), lambda b: (b, 0, 0)),
                   pl.BlockSpec((1, M, 1), lambda b: (b, 0, 0))),
        out_shape=(jax.ShapeDtypeStruct((B, M, N), jnp.float32),
                   jax.ShapeDtypeStruct((B, M, 1), jnp.int32)),
        compiler_params=pltpu.CompilerParams(dimension_semantics=("parallel",)),
    )(l.astype(jnp.bfloat16), parameters.astype(jnp.bfloat16))
    onehot = jax.nn.one_hot(labels.reshape(B, M), N, dtype=jnp.float32)
    nll = -jnp.mean(jnp.sum(logp * onehot, axis=-1))
    l2 = jnp.mean(parameters.astype(jnp.float32) ** 2)
    return nll, preds.reshape(-1), l2


# ----------------------------------------------------------------------------
# Parameter init (deterministic, PyTorch-default-like)
# ----------------------------------------------------------------------------
def init_params(key, feature_size, embed_size, n_classes, num_layers, inner_lr_init):
    del n_classes
    H = embed_size
    keys = jax.random.split(key, 4 * num_layers + 3)
    ki = 0
    bound = 1.0 / math.sqrt(H)
    lstm = []
    for layer in range(num_layers):
        in_dim = feature_size if layer == 0 else H
        w_ih = jax.random.uniform(keys[ki], (4 * H, in_dim), jnp.float32, -bound, bound); ki += 1
        w_hh = jax.random.uniform(keys[ki], (4 * H, H), jnp.float32, -bound, bound); ki += 1
        b_ih = jax.random.uniform(keys[ki], (4 * H,), jnp.float32, -bound, bound); ki += 1
        b_hh = jax.random.uniform(keys[ki], (4 * H,), jnp.float32, -bound, bound); ki += 1
        lstm.append((w_ih, w_hh, b_ih, b_hh))
    kb = 1.0 / math.sqrt(H)
    enc_w = jax.random.uniform(keys[ki], (2 * H, H), jnp.float32, -kb, kb); ki += 1
    enc_b = jax.random.uniform(keys[ki], (2 * H,), jnp.float32, -kb, kb); ki += 1
    dec_w = jax.random.uniform(keys[ki], (2 * H, H), jnp.float32, -kb, kb); ki += 1
    return {
        "lstm": lstm,
        "ln1_w": jnp.ones((H,), jnp.float32), "ln1_b": jnp.zeros((H,), jnp.float32),
        "ln2_w": jnp.ones((H,), jnp.float32), "ln2_b": jnp.zeros((H,), jnp.float32),
        "enc_w": enc_w, "enc_b": enc_b,
        "dec_w": dec_w,
        "inner_lr": jnp.array([inner_lr_init], jnp.float32),
    }


# ----------------------------------------------------------------------------
# MetaModel.forward (LEO-style) built on the Pallas kernels
# ----------------------------------------------------------------------------
def make_meta_forward(*, n_classes, embed_size, param_l2_lambda, n_inner_step,
                      beta, gamma, lambda2, rt_attn):
    E = embed_size
    N = n_classes

    def encode_lstm(params, inputs):
        B, M, T, I = inputs.shape
        x = inputs.reshape(B * M, T, I).astype(jnp.float32)
        # TODO(synk): nn.Dropout(drop_rate) omitted — drop_rate=0.0 (identity).
        enc, attn = lstm_attention_encode(
            x, params["lstm"], params["ln1_w"], params["ln1_b"],
            params["ln2_w"], params["ln2_b"])
        return enc.reshape(B, M, E), attn.reshape(B, M, T)

    def sample(dist_params, std_offset, key):
        mean = dist_params[..., :E]
        log_std = dist_params[..., E:]
        std = jnp.maximum(jnp.exp(log_std) - (1.0 - std_offset), 1e-10)
        eps = jax.random.normal(key, mean.shape, jnp.float32)
        z = mean + std * eps
        log2pi = math.log(2.0 * math.pi)
        logq = -0.5 * eps ** 2 - jnp.log(std) - 0.5 * log2pi
        logp = -0.5 * z ** 2 - 0.5 * log2pi
        return z, jnp.mean(logq - logp)

    def forward_encoder(params, inputs, key):
        l, attn = encode_lstm(params, inputs)
        B, M, _ = l.shape
        if M > 1:
            K = M // N
            attn_out = attn.reshape(B, N, K, -1)
            hs = encoder_elu_mean(l.reshape(B * N, K, E), params["enc_w"], params["enc_b"])
            z, kld = sample(hs.reshape(B, N, 2 * E), 0.0, key)
            return l, z, kld, attn_out
        return l, None, None, attn

    def decode_with_noise(dec_w, z, eps):
        param_hs = jnp.einsum("bne,fe->bnf", z, dec_w)        # Linear(E, 2E, bias=False)
        std_offset = math.sqrt(2.0 / (N + E))
        mean = param_hs[..., :E]
        log_std = param_hs[..., E:]
        std = jnp.maximum(jnp.exp(log_std) - (1.0 - std_offset), 1e-10)
        return mean + std * eps

    def predict_jax(l, parameters, onehot):
        scores = jnp.einsum("bme,bne->bmn", l, parameters)
        logp = jax.nn.log_softmax(scores, axis=-1)
        nll = -jnp.mean(jnp.sum(logp * onehot, axis=-1))
        l2 = jnp.mean(parameters ** 2)
        return nll, l2

    def inner_loop(params, s_inputs, s_labels, key):
        key_enc, key_loop = jax.random.split(key)
        s_l, s_z, kld, s_attn = forward_encoder(params, s_inputs, key_enc)
        B, M, _ = s_l.shape
        onehot = jax.nn.one_hot(s_labels.reshape(B, M), N, dtype=jnp.float32)
        s_l_const = jax.lax.stop_gradient(s_l)

        def loss_fn(z, eps):
            p = decode_with_noise(params["dec_w"], z, eps)
            nll, l2 = predict_jax(s_l_const, p, onehot)
            return nll + param_l2_lambda * l2

        grad_fn = jax.grad(loss_fn)
        lr = params["inner_lr"][0]
        b1, b2, adam_eps = 0.9, 0.999, 1e-8
        z = jax.lax.stop_gradient(s_z)           # z_prime = s_z.detach()
        m = jnp.zeros_like(z)
        v = jnp.zeros_like(z)
        keys = jax.random.split(key_loop, n_inner_step + 1)
        for i in range(n_inner_step):            # manual torch.optim.Adam on z_prime
            eps = jax.random.normal(keys[i], z.shape, jnp.float32)
            g = grad_fn(z, eps)
            m = b1 * m + (1.0 - b1) * g
            v = b2 * v + (1.0 - b2) * g * g
            mhat = m / (1.0 - b1 ** (i + 1))
            vhat = v / (1.0 - b2 ** (i + 1))
            z = z - lr * mhat / (jnp.sqrt(vhat) + adam_eps)
        eps_fin = jax.random.normal(keys[-1], z.shape, jnp.float32)
        parameters = decode_with_noise(params["dec_w"], z, eps_fin)
        z_loss = jnp.mean((z - s_z) ** 2)
        return parameters, kld, z_loss, s_attn

    def query_validate(params, q_inputs, q_labels, parameters):
        q_l, _, _, q_attn = forward_encoder(params, q_inputs, None)   # M == 1 path
        pred_loss, preds, l2 = predict_head(q_l, parameters, q_labels)
        return pred_loss + param_l2_lambda * l2, preds, q_attn

    def orthogonality(w):
        p_dot = jnp.dot(w, w.T)
        p_norm = jnp.sqrt(jnp.sum(w * w, axis=1, keepdims=True)) + 1e-15
        corr = jnp.clip(p_dot / jnp.dot(p_norm, p_norm.T), -1.0, 1.0)
        eye = jnp.eye(corr.shape[0], dtype=corr.dtype)
        return jnp.mean((corr - eye) ** 2)

    def meta_forward(params, data, key):
        parameters, kld, z_loss, s_attn = inner_loop(
            params, data["support"], data["support_labels"], key)
        q_loss, q_preds, q_attn = query_validate(
            params, data["query"], data["query_labels"], parameters)
        ortho = orthogonality(params["dec_w"])
        total = q_loss + beta * kld + gamma * z_loss + lambda2 * ortho
        if rt_attn:
            return total, q_preds, s_attn, q_attn
        return total, q_preds, None, None

    return jax.jit(meta_forward)


# ----------------------------------------------------------------------------
if __name__ == "__main__":
    # B batches, N classes, K shots, T window, I features, E embed size
    B, N, K, T, I, E = 2, 2, 3, 8, 8, 16
    num_layers = 1

    root = jax.random.PRNGKey(0)
    k_param, k_sup, k_q, k_sl, k_ql, k_fwd = jax.random.split(root, 6)

    params = init_params(k_param, feature_size=I, embed_size=E, n_classes=N,
                         num_layers=num_layers, inner_lr_init=1e-3)
    data = {
        "support": jax.random.normal(k_sup, (B, N * K, T, I), jnp.float32),
        "support_labels": jax.random.randint(k_sl, (B * N * K,), 0, N, jnp.int32),
        "query": jax.random.normal(k_q, (B, 1, T, I), jnp.float32),
        "query_labels": jax.random.randint(k_ql, (B,), 0, N, jnp.int32),
    }

    meta_forward = make_meta_forward(
        n_classes=N, embed_size=E, param_l2_lambda=0.1, n_inner_step=5,
        beta=0.001, gamma=1e-9, lambda2=0.1, rt_attn=True)

    total_loss, q_preds, s_attn, q_attn = meta_forward(params, data, k_fwd)
    jax.block_until_ready(total_loss)

    assert total_loss.shape == () and bool(jnp.isfinite(total_loss))
    assert q_preds.shape == (B,)
    assert s_attn.shape == (B, N, K, T)
    assert q_attn.shape == (B, 1, T)
    print("KERNEL_OK")
</pallas_src>

<mosaic_0001>
module attributes {stable_mosaic.version = 11 : i64} {
  func.func @_lstm_attn_kernel(%arg0: i32, %arg1: memref<8x16x8xf32, #tpu.memory_space<vmem>>, %arg2: memref<8x64xbf16, #tpu.memory_space<vmem>>, %arg3: memref<16x64xbf16, #tpu.memory_space<vmem>>, %arg4: memref<1x64xf32, #tpu.memory_space<vmem>>, %arg5: memref<1x16xf32, #tpu.memory_space<vmem>>, %arg6: memref<1x16xf32, #tpu.memory_space<vmem>>, %arg7: memref<1x16xf32, #tpu.memory_space<vmem>>, %arg8: memref<1x16xf32, #tpu.memory_space<vmem>>, %arg9: memref<16x16xf32, #tpu.memory_space<vmem>>, %arg10: memref<1x8x16x1xf32, #tpu.memory_space<vmem>>, %arg11: memref<8x16x16xf32, #tpu.memory_space<vmem>>) attributes {dimension_semantics = [#tpu.dimension_semantics<parallel>], iteration_bounds = array<i64: 1>, scalar_prefetch = 0 : i64, scratch_operands = 1 : i64, tpu.core_type = #tpu.core_type<tc>, window_params = [{transform_indices = @transform_0, window_bounds = array<i64: 8, 16, 8>}, {pipeline_mode = #tpu.pipeline_mode<synchronous>, transform_indices = @transform_1, window_bounds = array<i64: 8, 64>}, {pipeline_mode = #tpu.pipeline_mode<synchronous>, transform_indices = @transform_2, window_bounds = array<i64: 16, 64>}, {pipeline_mode = #tpu.pipeline_mode<synchronous>, transform_indices = @transform_3, window_bounds = array<i64: 1, 64>}, {pipeline_mode = #tpu.pipeline_mode<synchronous>, transform_indices = @transform_4, window_bounds = array<i64: 1, 16>}, {pipeline_mode = #tpu.pipeline_mode<synchronous>, transform_indices = @transform_5, window_bounds = array<i64: 1, 16>}, {pipeline_mode = #tpu.pipeline_mode<synchronous>, transform_indices = @transform_6, window_bounds = array<i64: 1, 16>}, {pipeline_mode = #tpu.pipeline_mode<synchronous>, transform_indices = @transform_7, window_bounds = array<i64: 1, 16>}, {transform_indices = @transform_8, window_bounds = array<i64: 16, 16>}, {transform_indices = @transform_9, window_bounds = array<i64: 1, 8, 16, 1>}]} {
    %c0 = arith.constant 0 : index
    %c0_0 = arith.constant 0 : index
    %c0_1 = arith.constant 0 : index
    %0 = vector.load %arg1[%c0, %c0_0, %c0_1] : memref<8x16x8xf32, #tpu.memory_space<vmem>>, vector<8x16x8xf32>
    %c0_2 = arith.constant 0 : index
    %c0_3 = arith.constant 0 : index
    %1 = vector.load %arg2[%c0_2, %c0_3] : memref<8x64xbf16, #tpu.memory_space<vmem>>, vector<8x64xbf16>
    %c0_4 = arith.constant 0 : index
    %c0_5 = arith.constant 0 : index
    %2 = vector.load %arg3[%c0_4, %c0_5] : memref<16x64xbf16, #tpu.memory_space<vmem>>, vector<16x64xbf16>
    %c0_6 = arith.constant 0 : index
    %c0_7 = arith.constant 0 : index
    %3 = vector.load %arg4[%c0_6, %c0_7] : memref<1x64xf32, #tpu.memory_space<vmem>>, vector<1x64xf32>
    %4 = vector.shape_cast %0 : vector<8x16x8xf32> to vector<128x8xf32>
    %5 = arith.truncf %4 : vector<128x8xf32> to vector<128x8xbf16>
    %cst = arith.constant dense<0.000000e+00> : vector<128x64xf32>
    %6 = tpu.matmul %5, %1, %cst {dimension_numbers = #tpu.dot_dimension_numbers<[1], [0], [0], [1], [0, 0, 1, 1], [], []>} : vector<128x8xbf16>, vector<8x64xbf16>, vector<128x64xf32> -> vector<128x64xf32>
    %7 = vector.broadcast %3 : vector<1x64xf32> to vector<128x64xf32>
    %8 = arith.addf %6, %7 : vector<128x64xf32>
    %cst_8 = arith.constant 0.000000e+00 : f32
    %9 = vector.broadcast %cst_8 : f32 to vector<16x16xf32>
    %cst_9 = arith.constant 0.000000e+00 : f32
    %10 = vector.broadcast %cst_9 : f32 to vector<16x16xf32>
    %11 = vector.extract_strided_slice %8 {offsets = [0, 0], sizes = [16, 64], strides = [1, 1]} : vector<128x64xf32> to vector<16x64xf32>
    %12 = arith.truncf %9 : vector<16x16xf32> to vector<16x16xbf16>
    %cst_10 = arith.constant dense<0.000000e+00> : vector<16x64xf32>
    %13 = tpu.matmul %12, %2, %cst_10 {dimension_numbers = #tpu.dot_dimension_numbers<[1], [0], [0], [1], [0, 0, 1, 1], [], []>} : vector<16x16xbf16>, vector<16x64xbf16>, vector<16x64xf32> -> vector<16x64xf32>
    %14 = arith.addf %11, %13 : vector<16x64xf32>
    %15 = vector.extract_strided_slice %14 {offsets = [0, 0], sizes = [16, 16], strides = [1, 1]} : vector<16x64xf32> to vector<16x16xf32>
    %16 = arith.negf %15 : vector<16x16xf32>
    %17 = math.exp %16 : vector<16x16xf32>
    %cst_11 = arith.constant 1.000000e+00 : f32
    %18 = vector.broadcast %cst_11 : f32 to vector<16x16xf32>
    %19 = arith.addf %18, %17 : vector<16x16xf32>
    %20 = arith.divf %18, %19 : vector<16x16xf32>
    %21 = vector.extract_strided_slice %14 {offsets = [0, 16], sizes = [16, 16], strides = [1, 1]} : vector<16x64xf32> to vector<16x16xf32>
    %22 = arith.negf %21 : vector<16x16xf32>
    %23 = math.exp %22 : vector<16x16xf32>
    %cst_12 = arith.constant 1.000000e+00 : f32
    %24 = vector.broadcast %cst_12 : f32 to vector<16x16xf32>
    %25 = arith.addf %24, %23 : vector<16x16xf32>
    %26 = arith.divf %24, %25 : vector<16x16xf32>
    %27 = vector.extract_strided_slice %14 {offsets = [0, 32], sizes = [16, 16], strides = [1, 1]} : vector<16x64xf32> to vector<16x16xf32>
    %28 = math.tanh %27 : vector<16x16xf32>
    %29 = vector.extract_strided_slice %14 {offsets = [0, 48], sizes = [16, 16], strides = [1, 1]} : vector<16x64xf32> to vector<16x16xf32>
    %30 = arith.negf %29 : vector<16x16xf32>
    %31 = math.exp %30 : vector<16x16xf32>
    %cst_13 = arith.constant 1.000000e+00 : f32
    %32 = vector.broadcast %cst_13 : f32 to vector<16x16xf32>
    %33 = arith.addf %32, %31 : vector<16x16xf32>
    %34 = arith.divf %32, %33 : vector<16x16xf32>
    %35 = arith.mulf %26, %10 : vector<16x16xf32>
    %36 = arith.mulf %20, %28 : vector<16x16xf32>
    %37 = arith.addf %35, %36 : vector<16x16xf32>
    %38 = math.tanh %37 : vector<16x16xf32>
    %39 = arith.mulf %34, %38 : vector<16x16xf32>
    %c0_14 = arith.constant 0 : index
    %c0_15 = arith.constant 0 : index
    %c0_16 = arith.constant 0 : index
    %40 = vector.load %arg11[%c0_14, %c0_15, %c0_16] : memref<8x16x16xf32, #tpu.memory_space<vmem>>, vector<1x16x16xf32>
    %41 = vector.shape_cast %40 : vector<1x16x16xf32> to vector<16x16xf32>
    %42 = vector.shape_cast %39 : vector<16x16xf32> to vector<1x16x16xf32>
    tpu.vector_store %arg11[%c0_14, %c0_15, %c0_16], %42 {strides = array<i32>} : memref<8x16x16xf32, #tpu.memory_space<vmem>>, vector<1x16x16xf32>,
    %43 = vector.extract_strided_slice %8 {offsets = [16, 0], sizes = [16, 64], strides = [1, 1]} : vector<128x64xf32> to vector<16x64xf32>
    %44 = arith.truncf %39 : vector<16x16xf32> to vector<16x16xbf16>
    %cst_17 = arith.constant dense<0.000000e+00> : vector<16x64xf32>
    %45 = tpu.matmul %44, %2, %cst_17 {dimension_numbers = #tpu.dot_dimension_numbers<[1], [0], [0], [1], [0, 0, 1, 1], [], []>} : vector<16x16xbf16>, vector<16x64xbf16>, vector<16x64xf32> -> vector<16x64xf32>
    %46 = arith.addf %43, %45 : vector<16x64xf32>
    %47 = vector.extract_strided_slice %46 {offsets = [0, 0], sizes = [16, 16], strides = [1, 1]} : vector<16x64xf32> to vector<16x16xf32>
    %48 = arith.negf %47 : vector<16x16xf32>
    %49 = math.exp %48 : vector<16x16xf32>
    %cst_18 = arith.constant 1.000000e+00 : f32
    %50 = vector.broadcast %cst_18 : f32 to vector<16x16xf32>
    %51 = arith.addf %50, %49 : vector<16x16xf32>
    %52 = arith.divf %50, %51 : vector<16x16xf32>
    %53 = vector.extract_strided_slice %46 {offsets = [0, 16], sizes = [16, 16], strides = [1, 1]} : vector<16x64xf32> to vector<16x16xf32>
    %54 = arith.negf %53 : vector<16x16xf32>
    %55 = math.exp %54 : vector<16x16xf32>
    %cst_19 = arith.constant 1.000000e+00 : f32
    %56 = vector.broadcast %cst_19 : f32 to vector<16x16xf32>
    %57 = arith.addf %56, %55 : vector<16x16xf32>
    %58 = arith.divf %56, %57 : vector<16x16xf32>
    %59 = vector.extract_strided_slice %46 {offsets = [0, 32], sizes = [16, 16], strides = [1, 1]} : vector<16x64xf32> to vector<16x16xf32>
    %60 = math.tanh %59 : vector<16x16xf32>
    %61 = vector.extract_strided_slice %46 {offsets = [0, 48], sizes = [16, 16], strides = [1, 1]} : vector<16x64xf32> to vector<16x16xf32>
    %62 = arith.negf %61 : vector<16x16xf32>
    %63 = math.exp %62 : vector<16x16xf32>
    %cst_20 = arith.constant 1.000000e+00 : f32
    %64 = vector.broadcast %cst_20 : f32 to vector<16x16xf32>
    %65 = arith.addf %64, %63 : vector<16x16xf32>
    %66 = arith.divf %64, %65 : vector<16x16xf32>
    %67 = arith.mulf %58, %37 : vector<16x16xf32>
    %68 = arith.mulf %52, %60 : vector<16x16xf32>
    %69 = arith.addf %67, %68 : vector<16x16xf32>
    %70 = math.tanh %69 : vector<16x16xf32>
    %71 = arith.mulf %66, %70 : vector<16x16xf32>
    %c1 = arith.constant 1 : index
    %c0_21 = arith.constant 0 : index
    %c0_22 = arith.constant 0 : index
    %72 = vector.load %arg11[%c1, %c0_21, %c0_22] : memref<8x16x16xf32, #tpu.memory_space<vmem>>, vector<1x16x16xf32>
    %73 = vector.shape_cast %72 : vector<1x16x16xf32> to vector<16x16xf32>
    %74 = vector.shape_cast %71 : vector<16x16xf32> to vector<1x16x16xf32>
    tpu.vector_store %arg11[%c1, %c0_21, %c0_22], %74 {strides = array<i32>} : memref<8x16x16xf32, #tpu.memory_space<vmem>>, vector<1x16x16xf32>,
    %75 = vector.extract_strided_slice %8 {offsets = [32, 0], sizes = [16, 64], strides = [1, 1]} : vector<128x64xf32> to vector<16x64xf32>
    %76 = arith.truncf %71 : vector<16x16xf32> to vector<16x16xbf16>
    %cst_23 = arith.constant dense<0.000000e+00> : vector<16x64xf32>
    %77 = tpu.matmul %76, %2, %cst_23 {dimension_numbers = #tpu.dot_dimension_numbers<[1], [0], [0], [1], [0, 0, 1, 1], [], []>} : vector<16x16xbf16>, vector<16x64xbf16>, vector<16x64xf32> -> vector<16x64xf32>
    %78 = arith.addf %75, %77 : vector<16x64xf32>
    %79 = vector.extract_strided_slice %78 {offsets = [0, 0], sizes = [16, 16], strides = [1, 1]} : vector<16x64xf32> to vector<16x16xf32>
    %80 = arith.negf %79 : vector<16x16xf32>
    %81 = math.exp %80 : vector<16x16xf32>
    %cst_24 = arith.constant 1.000000e+00 : f32
    %82 = vector.broadcast %cst_24 : f32 to vector<16x16xf32>
    %83 = arith.addf %82, %81 : vector<16x16xf32>
    %84 = arith.divf %82, %83 : vector<16x16xf32>
    %85 = vector.extract_strided_slice %78 {offsets = [0, 16], sizes = [16, 16], strides = [1, 1]} : vector<16x64xf32> to vector<16x16xf32>
    %86 = arith.negf %85 : vector<16x16xf32>
    %87 = math.exp %86 : vector<16x16xf32>
    %cst_25 = arith.constant 1.000000e+00 : f32
    %88 = vector.broadcast %cst_25 : f32 to vector<16x16xf32>
    %89 = arith.addf %88, %87 : vector<16x16xf32>
    %90 = arith.divf %88, %89 : vector<16x16xf32>
    %91 = vector.extract_strided_slice %78 {offsets = [0, 32], sizes = [16, 16], strides = [1, 1]} : vector<16x64xf32> to vector<16x16xf32>
    %92 = math.tanh %91 : vector<16x16xf32>
    %93 = vector.extract_strided_slice %78 {offsets = [0, 48], sizes = [16, 16], strides = [1, 1]} : vector<16x64xf32> to vector<16x16xf32>
    %94 = arith.negf %93 : vector<16x16xf32>
    %95 = math.exp %94 : vector<16x16xf32>
    %cst_26 = arith.constant 1.000000e+00 : f32
    %96 = vector.broadcast %cst_26 : f32 to vector<16x16xf32>
    %97 = arith.addf %96, %95 : vector<16x16xf32>
    %98 = arith.divf %96, %97 : vector<16x16xf32>
    %99 = arith.mulf %90, %69 : vector<16x16xf32>
    %100 = arith.mulf %84, %92 : vector<16x16xf32>
    %101 = arith.addf %99, %100 : vector<16x16xf32>
    %102 = math.tanh %101 : vector<16x16xf32>
    %103 = arith.mulf %98, %102 : vector<16x16xf32>
    %c2 = arith.constant 2 : index
    %c0_27 = arith.constant 0 : index
    %c0_28 = arith.constant 0 : index
    %104 = vector.load %arg11[%c2, %c0_27, %c0_28] : memref<8x16x16xf32, #tpu.memory_space<vmem>>, vector<1x16x16xf32>
    %105 = vector.shape_cast %104 : vector<1x16x16xf32> to vector<16x16xf32>
    %106 = vector.shape_cast %103 : vector<16x16xf32> to vector<1x16x16xf32>
    tpu.vector_store %arg11[%c2, %c0_27, %c0_28], %106 {strides = array<i32>} : memref<8x16x16xf32, #tpu.memory_space<vmem>>, vector<1x16x16xf32>,
    %107 = vector.extract_strided_slice %8 {offsets = [48, 0], sizes = [16, 64], strides = [1, 1]} : vector<128x64xf32> to vector<16x64xf32>
    %108 = arith.truncf %103 : vector<16x16xf32> to vector<16x16xbf16>
    %cst_29 = arith.constant dense<0.000000e+00> : vector<16x64xf32>
    %109 = tpu.matmul %108, %2, %cst_29 {dimension_numbers = #tpu.dot_dimension_numbers<[1], [0], [0], [1], [0, 0, 1, 1], [], []>} : vector<16x16xbf16>, vector<16x64xbf16>, vector<16x64xf32> -> vector<16x64xf32>
    %110 = arith.addf %107, %109 : vector<16x64xf32>
    %111 = vector.extract_strided_slice %110 {offsets = [0, 0], sizes = [16, 16], strides = [1, 1]} : vector<16x64xf32> to vector<16x16xf32>
    %112 = arith.negf %111 : vector<16x16xf32>
    %113 = math.exp %112 : vector<16x16xf32>
    %cst_30 = arith.constant 1.000000e+00 : f32
    %114 = vector.broadcast %cst_30 : f32 to vector<16x16xf32>
    %115 = arith.addf %114, %113 : vector<16x16xf32>
    %116 = arith.divf %114, %115 : vector<16x16xf32>
    %117 = vector.extract_strided_slice %110 {offsets = [0, 16], sizes = [16, 16], strides = [1, 1]} : vector<16x64xf32> to vector<16x16xf32>
    %118 = arith.negf %117 : vector<16x16xf32>
    %119 = math.exp %118 : vector<16x16xf32>
    %cst_31 = arith.constant 1.000000e+00 : f32
    %120 = vector.broadcast %cst_31 : f32 to vector<16x16xf32>
    %121 = arith.addf %120, %119 : vector<16x16xf32>
    %122 = arith.divf %120, %121 : vector<16x16xf32>
    %123 = vector.extract_strided_slice %110 {offsets = [0, 32], sizes = [16, 16], strides = [1, 1]} : vector<16x64xf32> to vector<16x16xf32>
    %124 = math.tanh %123 : vector<16x16xf32>
    %125 = vector.extract_strided_slice %110 {offsets = [0, 48], sizes = [16, 16], strides = [1, 1]} : vector<16x64xf32> to vector<16x16xf32>
    %126 = arith.negf %125 : vector<16x16xf32>
    %127 = math.exp %126 : vector<16x16xf32>
    %cst_32 = arith.constant 1.000000e+00 : f32
    %128 = vector.broadcast %cst_32 : f32 to vector<16x16xf32>
    %129 = arith.addf %128, %127 : vector<16x16xf32>
    %130 = arith.divf %128, %129 : vector<16x16xf32>
    %131 = arith.mulf %122, %101 : vector<16x16xf32>
    %132 = arith.mulf %116, %124 : vector<16x16xf32>
    %133 = arith.addf %131, %132 : vector<16x16xf32>
    %134 = math.tanh %133 : vector<16x16xf32>
    %135 = arith.mulf %130, %134 : vector<16x16xf32>
    %c3 = arith.constant 3 : index
    %c0_33 = arith.constant 0 : index
    %c0_34 = arith.constant 0 : index
    %136 = vector.load %arg11[%c3, %c0_33, %c0_34] : memref<8x16x16xf32, #tpu.memory_space<vmem>>, vector<1x16x16xf32>
    %137 = vector.shape_cast %136 : vector<1x16x16xf32> to vector<16x16xf32>
    %138 = vector.shape_cast %135 : vector<16x16xf32> to vector<1x16x16xf32>
    tpu.vector_store %arg11[%c3, %c0_33, %c0_34], %138 {strides = array<i32>} : memref<8x16x16xf32, #tpu.memory_space<vmem>>, vector<1x16x16xf32>,
    %139 = vector.extract_strided_slice %8 {offsets = [64, 0], sizes = [16, 64], strides = [1, 1]} : vector<128x64xf32> to vector<16x64xf32>
    %140 = arith.truncf %135 : vector<16x16xf32> to vector<16x16xbf16>
    %cst_35 = arith.constant dense<0.000000e+00> : vector<16x64xf32>
    %141 = tpu.matmul %140, %2, %cst_35 {dimension_numbers = #tpu.dot_dimension_numbers<[1], [0], [0], [1], [0, 0, 1, 1], [], []>} : vector<16x16xbf16>, vector<16x64xbf16>, vector<16x64xf32> -> vector<16x64xf32>
    %142 = arith.addf %139, %141 : vector<16x64xf32>
    %143 = vector.extract_strided_slice %142 {offsets = [0, 0], sizes = [16, 16], strides = [1, 1]} : vector<16x64xf32> to vector<16x16xf32>
    %144 = arith.negf %143 : vector<16x16xf32>
    %145 = math.exp %144 : vector<16x16xf32>
    %cst_36 = arith.constant 1.000000e+00 : f32
    %146 = vector.broadcast %cst_36 : f32 to vector<16x16xf32>
    %147 = arith.addf %146, %145 : vector<16x16xf32>
    %148 = arith.divf %146, %147 : vector<16x16xf32>
    %149 = vector.extract_strided_slice %142 {offsets = [0, 16], sizes = [16, 16], strides = [1, 1]} : vector<16x64xf32> to vector<16x16xf32>
    %150 = arith.negf %149 : vector<16x16xf32>
    %151 = math.exp %150 : vector<16x16xf32>
    %cst_37 = arith.constant 1.000000e+00 : f32
    %152 = vector.broadcast %cst_37 : f32 to vector<16x16xf32>
    %153 = arith.addf %152, %151 : vector<16x16xf32>
    %154 = arith.divf %152, %153 : vector<16x16xf32>
    %155 = vector.extract_strided_slice %142 {offsets = [0, 32], sizes = [16, 16], strides = [1, 1]} : vector<16x64xf32> to vector<16x16xf32>
    %156 = math.tanh %155 : vector<16x16xf32>
    %157 = vector.extract_strided_slice %142 {offsets = [0, 48], sizes = [16, 16], strides = [1, 1]} : vector<16x64xf32> to vector<16x16xf32>
    %158 = arith.negf %157 : vector<16x16xf32>
    %159 = math.exp %158 : vector<16x16xf32>
    %cst_38 = arith.constant 1.000000e+00 : f32
    %160 = vector.broadcast %cst_38 : f32 to vector<16x16xf32>
    %161 = arith.addf %160, %159 : vector<16x16xf32>
    %162 = arith.divf %160, %161 : vector<16x16xf32>
    %163 = arith.mulf %154, %133 : vector<16x16xf32>
    %164 = arith.mulf %148, %156 : vector<16x16xf32>
    %165 = arith.addf %163, %164 : vector<16x16xf32>
    %166 = math.tanh %165 : vector<16x16xf32>
    %167 = arith.mulf %162, %166 : vector<16x16xf32>
    %c4 = arith.constant 4 : index
    %c0_39 = arith.constant 0 : index
    %c0_40 = arith.constant 0 : index
    %168 = vector.load %arg11[%c4, %c0_39, %c0_40] : memref<8x16x16xf32, #tpu.memory_space<vmem>>, vector<1x16x16xf32>
    %169 = vector.shape_cast %168 : vector<1x16x16xf32> to vector<16x16xf32>
    %170 = vector.shape_cast %167 : vector<16x16xf32> to vector<1x16x16xf32>
    tpu.vector_store %arg11[%c4, %c0_39, %c0_40], %170 {strides = array<i32>} : memref<8x16x16xf32, #tpu.memory_space<vmem>>, vector<1x16x16xf32>,
    %171 = vector.extract_strided_slice %8 {offsets = [80, 0], sizes = [16, 64], strides = [1, 1]} : vector<128x64xf32> to vector<16x64xf32>
    %172 = arith.truncf %167 : vector<16x16xf32> to vector<16x16xbf16>
    %cst_41 = arith.constant dense<0.000000e+00> : vector<16x64xf32>
    %173 = tpu.matmul %172, %2, %cst_41 {dimension_numbers = #tpu.dot_dimension_numbers<[1], [0], [0], [1], [0, 0, 1, 1], [], []>} : vector<16x16xbf16>, vector<16x64xbf16>, vector<16x64xf32> -> vector<16x64xf32>
    %174 = arith.addf %171, %173 : vector<16x64xf32>
    %175 = vector.extract_strided_slice %174 {offsets = [0, 0], sizes = [16, 16], strides = [1, 1]} : vector<16x64xf32> to vector<16x16xf32>
    %176 = arith.negf %175 : vector<16x16xf32>
    %177 = math.exp %176 : vector<16x16xf32>
    %cst_42 = arith.constant 1.000000e+00 : f32
    %178 = vector.broadcast %cst_42 : f32 to vector<16x16xf32>
    %179 = arith.addf %178, %177 : vector<16x16xf32>
    %180 = arith.divf %178, %179 : vector<16x16xf32>
    %181 = vector.extract_strided_slice %174 {offsets = [0, 16], sizes = [16, 16], strides = [1, 1]} : vector<16x64xf32> to vector<16x16xf32>
    %182 = arith.negf %181 : vector<16x16xf32>
    %183 = math.exp %182 : vector<16x16xf32>
    %cst_43 = arith.constant 1.000000e+00 : f32
    %184 = vector.broadcast %cst_43 : f32 to vector<16x16xf32>
    %185 = arith.addf %184, %183 : vector<16x16xf32>
    %186 = arith.divf %184, %185 : vector<16x16xf32>
    %187 = vector.extract_strided_slice %174 {offsets = [0, 32], sizes = [16, 16], strides = [1, 1]} : vector<16x64xf32> to vector<16x16xf32>
    %188 = math.tanh %187 : vector<16x16xf32>
    %189 = vector.extract_strided_slice %174 {offsets = [0, 48], sizes = [16, 16], strides = [1, 1]} : vector<16x64xf32> to vector<16x16xf32>
    %190 = arith.negf %189 : vector<16x16xf32>
    %191 = math.exp %190 : vector<16x16xf32>
    %cst_44 = arith.constant 1.000000e+00 : f32
    %192 = vector.broadcast %cst_44 : f32 to vector<16x16xf32>
    %193 = arith.addf %192, %191 : vector<16x16xf32>
    %194 = arith.divf %192, %193 : vector<16x16xf32>
    %195 = arith.mulf %186, %165 : vector<16x16xf32>
    %196 = arith.mulf %180, %188 : vector<16x16xf32>
    %197 = arith.addf %195, %196 : vector<16x16xf32>
    %198 = math.tanh %197 : vector<16x16xf32>
    %199 = arith.mulf %194, %198 : vector<16x16xf32>
    %c5 = arith.constant 5 : index
    %c0_45 = arith.constant 0 : index
    %c0_46 = arith.constant 0 : index
    %200 = vector.load %arg11[%c5, %c0_45, %c0_46] : memref<8x16x16xf32, #tpu.memory_space<vmem>>, vector<1x16x16xf32>
    %201 = vector.shape_cast %200 : vector<1x16x16xf32> to vector<16x16xf32>
    %202 = vector.shape_cast %199 : vector<16x16xf32> to vector<1x16x16xf32>
    tpu.vector_store %arg11[%c5, %c0_45, %c0_46], %202 {strides = array<i32>} : memref<8x16x16xf32, #tpu.memory_space<vmem>>, vector<1x16x16xf32>,
    %203 = vector.extract_strided_slice %8 {offsets = [96, 0], sizes = [16, 64], strides = [1, 1]} : vector<128x64xf32> to vector<16x64xf32>
    %204 = arith.truncf %199 : vector<16x16xf32> to vector<16x16xbf16>
    %cst_47 = arith.constant dense<0.000000e+00> : vector<16x64xf32>
    %205 = tpu.matmul %204, %2, %cst_47 {dimension_numbers = #tpu.dot_dimension_numbers<[1], [0], [0], [1], [0, 0, 1, 1], [], []>} : vector<16x16xbf16>, vector<16x64xbf16>, vector<16x64xf32> -> vector<16x64xf32>
    %206 = arith.addf %203, %205 : vector<16x64xf32>
    %207 = vector.extract_strided_slice %206 {offsets = [0, 0], sizes = [16, 16], strides = [1, 1]} : vector<16x64xf32> to vector<16x16xf32>
    %208 = arith.negf %207 : vector<16x16xf32>
    %209 = math.exp %208 : vector<16x16xf32>
    %cst_48 = arith.constant 1.000000e+00 : f32
    %210 = vector.broadcast %cst_48 : f32 to vector<16x16xf32>
    %211 = arith.addf %210, %209 : vector<16x16xf32>
    %212 = arith.divf %210, %211 : vector<16x16xf32>
    %213 = vector.extract_strided_slice %206 {offsets = [0, 16], sizes = [16, 16], strides = [1, 1]} : vector<16x64xf32> to vector<16x16xf32>
    %214 = arith.negf %213 : vector<16x16xf32>
    %215 = math.exp %214 : vector<16x16xf32>
    %cst_49 = arith.constant 1.000000e+00 : f32
    %216 = vector.broadcast %cst_49 : f32 to vector<16x16xf32>
    %217 = arith.addf %216, %215 : vector<16x16xf32>
    %218 = arith.divf %216, %217 : vector<16x16xf32>
    %219 = vector.extract_strided_slice %206 {offsets = [0, 32], sizes = [16, 16], strides = [1, 1]} : vector<16x64xf32> to vector<16x16xf32>
    %220 = math.tanh %219 : vector<16x16xf32>
    %221 = vector.extract_strided_slice %206 {offsets = [0, 48], sizes = [16, 16], strides = [1, 1]} : vector<16x64xf32> to vector<16x16xf32>
    %222 = arith.negf %221 : vector<16x16xf32>
    %223 = math.exp %222 : vector<16x16xf32>
    %cst_50 = arith.constant 1.000000e+00 : f32
    %224 = vector.broadcast %cst_50 : f32 to vector<16x16xf32>
    %225 = arith.addf %224, %223 : vector<16x16xf32>
    %226 = arith.divf %224, %225 : vector<16x16xf32>
    %227 = arith.mulf %218, %197 : vector<16x16xf32>
    %228 = arith.mulf %212, %220 : vector<16x16xf32>
    %229 = arith.addf %227, %228 : vector<16x16xf32>
    %230 = math.tanh %229 : vector<16x16xf32>
    %231 = arith.mulf %226, %230 : vector<16x16xf32>
    %c6 = arith.constant 6 : index
    %c0_51 = arith.constant 0 : index
    %c0_52 = arith.constant 0 : index
    %232 = vector.load %arg11[%c6, %c0_51, %c0_52] : memref<8x16x16xf32, #tpu.memory_space<vmem>>, vector<1x16x16xf32>
    %233 = vector.shape_cast %232 : vector<1x16x16xf32> to vector<16x16xf32>
    %234 = vector.shape_cast %231 : vector<16x16xf32> to vector<1x16x16xf32>
    tpu.vector_store %arg11[%c6, %c0_51, %c0_52], %234 {strides = array<i32>} : memref<8x16x16xf32, #tpu.memory_space<vmem>>, vector<1x16x16xf32>,
    %235 = vector.extract_strided_slice %8 {offsets = [112, 0], sizes = [16, 64], strides = [1, 1]} : vector<128x64xf32> to vector<16x64xf32>
    %236 = arith.truncf %231 : vector<16x16xf32> to vector<16x16xbf16>
    %cst_53 = arith.constant dense<0.000000e+00> : vector<16x64xf32>
    %237 = tpu.matmul %236, %2, %cst_53 {dimension_numbers = #tpu.dot_dimension_numbers<[1], [0], [0], [1], [0, 0, 1, 1], [], []>} : vector<16x16xbf16>, vector<16x64xbf16>, vector<16x64xf32> -> vector<16x64xf32>
    %238 = arith.addf %235, %237 : vector<16x64xf32>
    %239 = vector.extract_strided_slice %238 {offsets = [0, 0], sizes = [16, 16], strides = [1, 1]} : vector<16x64xf32> to vector<16x16xf32>
    %240 = arith.negf %239 : vector<16x16xf32>
    %241 = math.exp %240 : vector<16x16xf32>
    %cst_54 = arith.constant 1.000000e+00 : f32
    %242 = vector.broadcast %cst_54 : f32 to vector<16x16xf32>
    %243 = arith.addf %242, %241 : vector<16x16xf32>
    %244 = arith.divf %242, %243 : vector<16x16xf32>
    %245 = vector.extract_strided_slice %238 {offsets = [0, 16], sizes = [16, 16], strides = [1, 1]} : vector<16x64xf32> to vector<16x16xf32>
    %246 = arith.negf %245 : vector<16x16xf32>
    %247 = math.exp %246 : vector<16x16xf32>
    %cst_55 = arith.constant 1.000000e+00 : f32
    %248 = vector.broadcast %cst_55 : f32 to vector<16x16xf32>
    %249 = arith.addf %248, %247 : vector<16x16xf32>
    %250 = arith.divf %248, %249 : vector<16x16xf32>
    %251 = vector.extract_strided_slice %238 {offsets = [0, 32], sizes = [16, 16], strides = [1, 1]} : vector<16x64xf32> to vector<16x16xf32>
    %252 = math.tanh %251 : vector<16x16xf32>
    %253 = vector.extract_strided_slice %238 {offsets = [0, 48], sizes = [16, 16], strides = [1, 1]} : vector<16x64xf32> to vector<16x16xf32>
    %254 = arith.negf %253 : vector<16x16xf32>
    %255 = math.exp %254 : vector<16x16xf32>
    %cst_56 = arith.constant 1.000000e+00 : f32
    %256 = vector.broadcast %cst_56 : f32 to vector<16x16xf32>
    %257 = arith.addf %256, %255 : vector<16x16xf32>
    %258 = arith.divf %256, %257 : vector<16x16xf32>
    %259 = arith.mulf %250, %229 : vector<16x16xf32>
    %260 = arith.mulf %244, %252 : vector<16x16xf32>
    %261 = arith.addf %259, %260 : vector<16x16xf32>
    %262 = math.tanh %261 : vector<16x16xf32>
    %263 = arith.mulf %258, %262 : vector<16x16xf32>
    %c7 = arith.constant 7 : index
    %c0_57 = arith.constant 0 : index
    %c0_58 = arith.constant 0 : index
    %264 = vector.load %arg11[%c7, %c0_57, %c0_58] : memref<8x16x16xf32, #tpu.memory_space<vmem>>, vector<1x16x16xf32>
    %265 = vector.shape_cast %264 : vector<1x16x16xf32> to vector<16x16xf32>
    %266 = vector.shape_cast %263 : vector<16x16xf32> to vector<1x16x16xf32>
    tpu.vector_store %arg11[%c7, %c0_57, %c0_58], %266 {strides = array<i32>} : memref<8x16x16xf32, #tpu.memory_space<vmem>>, vector<1x16x16xf32>,
    %c0_59 = arith.constant 0 : index
    %c0_60 = arith.constant 0 : index
    %c0_61 = arith.constant 0 : index
    %267 = vector.load %arg11[%c0_59, %c0_60, %c0_61] : memref<8x16x16xf32, #tpu.memory_space<vmem>>, vector<8x16x16xf32>
    %268 = vector.shape_cast %263 : vector<16x16xf32> to vector<1x16x16xf32>
    %269 = vector.broadcast %268 : vector<1x16x16xf32> to vector<8x16x16xf32>
    %270 = arith.mulf %267, %269 : vector<8x16x16xf32>
    %cst_62 = arith.constant dense<0.000000e+00> : vector<8x16xf32>
    %271 = vector.multi_reduction <add>, %270, %cst_62 [2] : vector<8x16x16xf32> to vector<8x16xf32>
    %272 = vector.shape_cast %271 : vector<8x16xf32> to vector<8x16x1xf32>
    %cst_63 = arith.constant dense<0xFF800000> : vector<16x1xf32>
    %273 = vector.multi_reduction <maximumf>, %272, %cst_63 [0] : vector<8x16x1xf32> to vector<16x1xf32>
    %274 = vector.shape_cast %273 : vector<16x1xf32> to vector<1x16x1xf32>
    %275 = vector.broadcast %274 : vector<1x16x1xf32> to vector<8x16x1xf32>
    %276 = arith.subf %272, %275 : vector<8x16x1xf32>
    %277 = math.exp %276 : vector<8x16x1xf32>
    %cst_64 = arith.constant dense<0.000000e+00> : vector<16x1xf32>
    %278 = vector.multi_reduction <add>, %277, %cst_64 [0] : vector<8x16x1xf32> to vector<16x1xf32>
    %279 = vector.shape_cast %278 : vector<16x1xf32> to vector<1x16x1xf32>
    %280 = vector.broadcast %279 : vector<1x16x1xf32> to vector<8x16x1xf32>
    %281 = arith.divf %277, %280 : vector<8x16x1xf32>
    %c0_65 = arith.constant 0 : index
    %c0_66 = arith.constant 0 : index
    %c0_67 = arith.constant 0 : index
    %c0_68 = arith.constant 0 : index
    %282 = vector.load %arg10[%c0_65, %c0_66, %c0_67, %c0_68] : memref<1x8x16x1xf32, #tpu.memory_space<vmem>>, vector<1x8x16x1xf32>
    %283 = vector.shape_cast %282 : vector<1x8x16x1xf32> to vector<8x16x1xf32>
    %284 = vector.shape_cast %281 : vector<8x16x1xf32> to vector<1x8x16x1xf32>
    tpu.vector_store %arg10[%c0_65, %c0_66, %c0_67, %c0_68], %284 {strides = array<i32>} : memref<1x8x16x1xf32, #tpu.memory_space<vmem>>, vector<1x8x16x1xf32>,
    %285 = vector.broadcast %281 : vector<8x16x1xf32> to vector<8x16x16xf32>
    %286 = arith.mulf %267, %285 : vector<8x16x16xf32>
    %cst_69 = arith.constant dense<0.000000e+00> : vector<16x16xf32>
    %287 = vector.multi_reduction <add>, %286, %cst_69 [0] : vector<8x16x16xf32> to vector<16x16xf32>
    %c0_70 = arith.constant 0 : index
    %c0_71 = arith.constant 0 : index
    %288 = vector.load %arg5[%c0_70, %c0_71] : memref<1x16xf32, #tpu.memory_space<vmem>>, vector<1x16xf32>
    %c0_72 = arith.constant 0 : index
    %c0_73 = arith.constant 0 : index
    %289 = vector.load %arg6[%c0_72, %c0_73] : memref<1x16xf32, #tpu.memory_space<vmem>>, vector<1x16xf32>
    %cst_74 = arith.constant dense<0.000000e+00> : vector<16xf32>
    %290 = vector.multi_reduction <add>, %287, %cst_74 [1] : vector<16x16xf32> to vector<16xf32>
    %291 = vector.shape_cast %290 : vector<16xf32> to vector<16x1xf32>
    %cst_75 = arith.constant 1.600000e+01 : f32
    %292 = vector.broadcast %cst_75 : f32 to vector<16x1xf32>
    %293 = arith.divf %291, %292 : vector<16x1xf32>
    %294 = vector.broadcast %293 : vector<16x1xf32> to vector<16x16xf32>
    %295 = arith.subf %287, %294 : vector<16x16xf32>
    %296 = arith.mulf %295, %295 : vector<16x16xf32>
    %cst_76 = arith.constant dense<0.000000e+00> : vector<16xf32>
    %297 = vector.multi_reduction <add>, %296, %cst_76 [1] : vector<16x16xf32> to vector<16xf32>
    %298 = vector.shape_cast %297 : vector<16xf32> to vector<16x1xf32>
    %cst_77 = arith.constant 1.600000e+01 : f32
    %299 = vector.broadcast %cst_77 : f32 to vector<16x1xf32>
    %300 = arith.divf %298, %299 : vector<16x1xf32>
    %301 = vector.broadcast %293 : vector<16x1xf32> to vector<16x16xf32>
    %302 = arith.subf %287, %301 : vector<16x16xf32>
    %cst_78 = arith.constant 9.99999974E-6 : f32
    %303 = vector.broadcast %cst_78 : f32 to vector<16x1xf32>
    %304 = arith.addf %300, %303 : vector<16x1xf32>
    %305 = math.rsqrt %304 : vector<16x1xf32>
    %306 = vector.broadcast %305 : vector<16x1xf32> to vector<16x16xf32>
    %307 = arith.mulf %302, %306 : vector<16x16xf32>
    %308 = vector.broadcast %288 : vector<1x16xf32> to vector<16x16xf32>
    %309 = arith.mulf %307, %308 : vector<16x16xf32>
    %310 = vector.broadcast %289 : vector<1x16xf32> to vector<16x16xf32>
    %311 = arith.addf %309, %310 : vector<16x16xf32>
    %c0_79 = arith.constant 0 : index
    %c0_80 = arith.constant 0 : index
    %312 = vector.load %arg7[%c0_79, %c0_80] : memref<1x16xf32, #tpu.memory_space<vmem>>, vector<1x16xf32>
    %c0_81 = arith.constant 0 : index
    %c0_82 = arith.constant 0 : index
    %313 = vector.load %arg8[%c0_81, %c0_82] : memref<1x16xf32, #tpu.memory_space<vmem>>, vector<1x16xf32>
    %cst_83 = arith.constant dense<0.000000e+00> : vector<16xf32>
    %314 = vector.multi_reduction <add>, %311, %cst_83 [1] : vector<16x16xf32> to vector<16xf32>
    %315 = vector.shape_cast %314 : vector<16xf32> to vector<16x1xf32>
    %cst_84 = arith.constant 1.600000e+01 : f32
    %316 = vector.broadcast %cst_84 : f32 to vector<16x1xf32>
    %317 = arith.divf %315, %316 : vector<16x1xf32>
    %318 = vector.broadcast %317 : vector<16x1xf32> to vector<16x16xf32>
    %319 = arith.subf %311, %318 : vector<16x16xf32>
    %320 = arith.mulf %319, %319 : vector<16x16xf32>
    %cst_85 = arith.constant dense<0.000000e+00> : vector<16xf32>
    %321 = vector.multi_reduction <add>, %320, %cst_85 [1] : vector<16x16xf32> to vector<16xf32>
    %322 = vector.shape_cast %321 : vector<16xf32> to vector<16x1xf32>
    %cst_86 = arith.constant 1.600000e+01 : f32
    %323 = vector.broadcast %cst_86 : f32 to vector<16x1xf32>
    %324 = arith.divf %322, %323 : vector<16x1xf32>
    %325 = vector.broadcast %317 : vector<16x1xf32> to vector<16x16xf32>
    %326 = arith.subf %311, %325 : vector<16x16xf32>
    %cst_87 = arith.constant 9.99999974E-6 : f32
    %327 = vector.broadcast %cst_87 : f32 to vector<16x1xf32>
    %328 = arith.addf %324, %327 : vector<16x1xf32>
    %329 = math.rsqrt %328 : vector<16x1xf32>
    %330 = vector.broadcast %329 : vector<16x1xf32> to vector<16x16xf32>
    %331 = arith.mulf %326, %330 : vector<16x16xf32>
    %332 = vector.broadcast %312 : vector<1x16xf32> to vector<16x16xf32>
    %333 = arith.mulf %331, %332 : vector<16x16xf32>
    %334 = vector.broadcast %313 : vector<1x16xf32> to vector<16x16xf32>
    %335 = arith.addf %333, %334 : vector<16x16xf32>
    %c0_88 = arith.constant 0 : index
    %c0_89 = arith.constant 0 : index
    %336 = vector.load %arg9[%c0_88, %c0_89] : memref<16x16xf32, #tpu.memory_space<vmem>>, vector<16x16xf32>
    tpu.vector_store %arg9[%c0_88, %c0_89], %335 {strides = array<i32>} : memref<16x16xf32, #tpu.memory_space<vmem>>, vector<16x16xf32>,
    return
  }
  func.func @transform_0(%arg0: i32) -> (i32, i32, i32) {
    %c0_i32 = arith.constant 0 : i32
    %c0_i32_0 = arith.constant 0 : i32
    %c0_i32_1 = arith.constant 0 : i32
    return %c0_i32, %arg0, %c0_i32_0 : i32, i32, i32
  }
  func.func @transform_1(%arg0: i32) -> (i32, i32) {
    %c0_i32 = arith.constant 0 : i32
    %c0_i32_0 = arith.constant 0 : i32
    %c0_i32_1 = arith.constant 0 : i32
    return %c0_i32, %c0_i32_0 : i32, i32
  }
  func.func @transform_2(%arg0: i32) -> (i32, i32) {
    %c0_i32 = arith.constant 0 : i32
    %c0_i32_0 = arith.constant 0 : i32
    %c0_i32_1 = arith.constant 0 : i32
    return %c0_i32, %c0_i32_0 : i32, i32
  }
  func.func @transform_3(%arg0: i32) -> (i32, i32) {
    %c0_i32 = arith.constant 0 : i32
    %c0_i32_0 = arith.constant 0 : i32
    %c0_i32_1 = arith.constant 0 : i32
    return %c0_i32, %c0_i32_0 : i32, i32
  }
  func.func @transform_4(%arg0: i32) -> (i32, i32) {
    %c0_i32 = arith.constant 0 : i32
    %c0_i32_0 = arith.constant 0 : i32
    %c0_i32_1 = arith.constant 0 : i32
    return %c0_i32, %c0_i32_0 : i32, i32
  }
  func.func @transform_5(%arg0: i32) -> (i32, i32) {
    %c0_i32 = arith.constant 0 : i32
    %c0_i32_0 = arith.constant 0 : i32
    %c0_i32_1 = arith.constant 0 : i32
    return %c0_i32, %c0_i32_0 : i32, i32
  }
  func.func @transform_6(%arg0: i32) -> (i32, i32) {
    %c0_i32 = arith.constant 0 : i32
    %c0_i32_0 = arith.constant 0 : i32
    %c0_i32_1 = arith.constant 0 : i32
    return %c0_i32, %c0_i32_0 : i32, i32
  }
  func.func @transform_7(%arg0: i32) -> (i32, i32) {
    %c0_i32 = arith.constant 0 : i32
    %c0_i32_0 = arith.constant 0 : i32
    %c0_i32_1 = arith.constant 0 : i32
    return %c0_i32, %c0_i32_0 : i32, i32
  }
  func.func @transform_8(%arg0: i32) -> (i32, i32) {
    %c0_i32 = arith.constant 0 : i32
    %c0_i32_0 = arith.constant 0 : i32
    return %arg0, %c0_i32 : i32, i32
  }
  func.func @transform_9(%arg0: i32) -> (i32, i32, i32, i32) {
    %c0_i32 = arith.constant 0 : i32
    %c0_i32_0 = arith.constant 0 : i32
    %c0_i32_1 = arith.constant 0 : i32
    %c0_i32_2 = arith.constant 0 : i32
    return %arg0, %c0_i32, %c0_i32_0, %c0_i32_1 : i32, i32, i32, i32
  }
}

module attributes {stable_mosaic.version = 11 : i64} {
  func.func @_encoder_mean_kernel(%arg0: i32, %arg1: memref<3x8x16xf32, #tpu.memory_space<vmem>>, %arg2: memref<16x32xbf16, #tpu.memory_space<vmem>>, %arg3: memref<1x32xf32, #tpu.memory_space<vmem>>, %arg4: memref<8x32xf32, #tpu.memory_space<vmem>>) attributes {dimension_semantics = [#tpu.dimension_semantics<parallel>], iteration_bounds = array<i64: 1>, scalar_prefetch = 0 : i64, scratch_operands = 0 : i64, tpu.core_type = #tpu.core_type<tc>, window_params = [{transform_indices = @transform_0, window_bounds = array<i64: 3, 8, 16>}, {pipeline_mode = #tpu.pipeline_mode<synchronous>, transform_indices = @transform_1, window_bounds = array<i64: 16, 32>}, {pipeline_mode = #tpu.pipeline_mode<synchronous>, transform_indices = @transform_2, window_bounds = array<i64: 1, 32>}, {transform_indices = @transform_3, window_bounds = array<i64: 8, 32>}]} {
    %c0 = arith.constant 0 : index
    %c0_0 = arith.constant 0 : index
    %c0_1 = arith.constant 0 : index
    %0 = vector.load %arg1[%c0, %c0_0, %c0_1] : memref<3x8x16xf32, #tpu.memory_space<vmem>>, vector<3x8x16xf32>
    %1 = vector.shape_cast %0 : vector<3x8x16xf32> to vector<24x16xf32>
    %2 = arith.truncf %1 : vector<24x16xf32> to vector<24x16xbf16>
    %c0_2 = arith.constant 0 : index
    %c0_3 = arith.constant 0 : index
    %3 = vector.load %arg2[%c0_2, %c0_3] : memref<16x32xbf16, #tpu.memory_space<vmem>>, vector<16x32xbf16>
    %cst = arith.constant dense<0.000000e+00> : vector<24x32xf32>
    %4 = tpu.matmul %2, %3, %cst {dimension_numbers = #tpu.dot_dimension_numbers<[1], [0], [0], [1], [0, 0, 1, 1], [], []>} : vector<24x16xbf16>, vector<16x32xbf16>, vector<24x32xf32> -> vector<24x32xf32>
    %c0_4 = arith.constant 0 : index
    %c0_5 = arith.constant 0 : index
    %5 = vector.load %arg3[%c0_4, %c0_5] : memref<1x32xf32, #tpu.memory_space<vmem>>, vector<1x32xf32>
    %6 = vector.broadcast %5 : vector<1x32xf32> to vector<24x32xf32>
    %7 = arith.addf %4, %6 : vector<24x32xf32>
    %cst_6 = arith.constant 0.000000e+00 : f32
    %8 = vector.broadcast %cst_6 : f32 to vector<24x32xf32>
    %9 = arith.cmpf ogt, %7, %8 : vector<24x32xf32>
    %cst_7 = arith.constant 0.000000e+00 : f32
    %10 = vector.broadcast %cst_7 : f32 to vector<24x32xf32>
    %11 = arith.minimumf %7, %10 : vector<24x32xf32>
    %12 = math.exp %11 : vector<24x32xf32>
    %cst_8 = arith.constant 1.000000e+00 : f32
    %13 = vector.broadcast %cst_8 : f32 to vector<24x32xf32>
    %14 = arith.subf %12, %13 : vector<24x32xf32>
    %15 = arith.select %9, %7, %14 : vector<24x32xi1>, vector<24x32xf32>
    %16 = vector.shape_cast %15 : vector<24x32xf32> to vector<3x8x32xf32>
    %cst_9 = arith.constant dense<0.000000e+00> : vector<8x32xf32>
    %17 = vector.multi_reduction <add>, %16, %cst_9 [0] : vector<3x8x32xf32> to vector<8x32xf32>
    %cst_10 = arith.constant 3.000000e+00 : f32
    %18 = vector.broadcast %cst_10 : f32 to vector<8x32xf32>
    %19 = arith.divf %17, %18 : vector<8x32xf32>
    %c0_11 = arith.constant 0 : index
    %c0_12 = arith.constant 0 : index
    %20 = vector.load %arg4[%c0_11, %c0_12] : memref<8x32xf32, #tpu.memory_space<vmem>>, vector<8x32xf32>
    tpu.vector_store %arg4[%c0_11, %c0_12], %19 {strides = array<i32>} : memref<8x32xf32, #tpu.memory_space<vmem>>, vector<8x32xf32>,
    return
  }
  func.func @transform_0(%arg0: i32) -> (i32, i32, i32) {
    %c0_i32 = arith.constant 0 : i32
    %c0_i32_0 = arith.constant 0 : i32
    %c0_i32_1 = arith.constant 0 : i32
    return %c0_i32, %arg0, %c0_i32_0 : i32, i32, i32
  }
  func.func @transform_1(%arg0: i32) -> (i32, i32) {
    %c0_i32 = arith.constant 0 : i32
    %c0_i32_0 = arith.constant 0 : i32
    %c0_i32_1 = arith.constant 0 : i32
    return %c0_i32, %c0_i32_0 : i32, i32
  }
  func.func @transform_2(%arg0: i32) -> (i32, i32) {
    %c0_i32 = arith.constant 0 : i32
    %c0_i32_0 = arith.constant 0 : i32
    %c0_i32_1 = arith.constant 0 : i32
    return %c0_i32, %c0_i32_0 : i32, i32
  }
  func.func @transform_3(%arg0: i32) -> (i32, i32) {
    %c0_i32 = arith.constant 0 : i32
    %c0_i32_0 = arith.constant 0 : i32
    return %arg0, %c0_i32 : i32, i32
  }
}

module attributes {stable_mosaic.version = 11 : i64} {
  func.func @_predict_kernel(%arg0: i32, %arg1: memref<1x1x16xbf16, #tpu.memory_space<vmem>>, %arg2: memref<1x2x16xbf16, #tpu.memory_space<vmem>>, %arg3: memref<1x1x2xf32, #tpu.memory_space<vmem>>, %arg4: memref<1x1x1xi32, #tpu.memory_space<vmem>>) attributes {dimension_semantics = [#tpu.dimension_semantics<parallel>], iteration_bounds = array<i64: 2>, scalar_prefetch = 0 : i64, scratch_operands = 0 : i64, tpu.core_type = #tpu.core_type<tc>, window_params = [{transform_indices = @transform_0, window_bounds = array<i64: 1, 1, 16>}, {transform_indices = @transform_1, window_bounds = array<i64: 1, 2, 16>}, {transform_indices = @transform_2, window_bounds = array<i64: 1, 1, 2>}, {transform_indices = @transform_3, window_bounds = array<i64: 1, 1, 1>}]} {
    %c0 = arith.constant 0 : index
    %c0_0 = arith.constant 0 : index
    %c0_1 = arith.constant 0 : index
    %0 = vector.load %arg1[%c0, %c0_0, %c0_1] : memref<1x1x16xbf16, #tpu.memory_space<vmem>>, vector<1x1x16xbf16>
    %1 = vector.shape_cast %0 : vector<1x1x16xbf16> to vector<1x16xbf16>
    %c0_2 = arith.constant 0 : index
    %c0_3 = arith.constant 0 : index
    %c0_4 = arith.constant 0 : index
    %2 = vector.load %arg2[%c0_2, %c0_3, %c0_4] : memref<1x2x16xbf16, #tpu.memory_space<vmem>>, vector<1x2x16xbf16>
    %3 = vector.shape_cast %2 : vector<1x2x16xbf16> to vector<2x16xbf16>
    %cst = arith.constant dense<0.000000e+00> : vector<1x2xf32>
    %4 = tpu.matmul %1, %3, %cst {dimension_numbers = #tpu.dot_dimension_numbers<[1], [1], [0], [0], [0, 0, 1, 0], [], []>} : vector<1x16xbf16>, vector<2x16xbf16>, vector<1x2xf32> -> vector<1x2xf32>
    %cst_5 = arith.constant dense<0xFF800000> : vector<1xf32>
    %5 = vector.multi_reduction <maximumf>, %4, %cst_5 [1] : vector<1x2xf32> to vector<1xf32>
    %6 = vector.shape_cast %5 : vector<1xf32> to vector<1x1xf32>
    %7 = vector.broadcast %6 : vector<1x1xf32> to vector<1x2xf32>
    %8 = arith.subf %4, %7 : vector<1x2xf32>
    %9 = math.exp %8 : vector<1x2xf32>
    %cst_6 = arith.constant dense<0.000000e+00> : vector<1xf32>
    %10 = vector.multi_reduction <add>, %9, %cst_6 [1] : vector<1x2xf32> to vector<1xf32>
    %11 = vector.shape_cast %10 : vector<1xf32> to vector<1x1xf32>
    %12 = math.log %11 : vector<1x1xf32>
    %13 = arith.addf %12, %6 : vector<1x1xf32>
    %14 = vector.broadcast %13 : vector<1x1xf32> to vector<1x2xf32>
    %15 = arith.subf %4, %14 : vector<1x2xf32>
    %c0_7 = arith.constant 0 : index
    %c0_8 = arith.constant 0 : index
    %c0_9 = arith.constant 0 : index
    %16 = vector.load %arg3[%c0_7, %c0_8, %c0_9] : memref<1x1x2xf32, #tpu.memory_space<vmem>>, vector<1x1x2xf32>
    %17 = vector.shape_cast %16 : vector<1x1x2xf32> to vector<1x2xf32>
    %18 = vector.shape_cast %15 : vector<1x2xf32> to vector<1x1x2xf32>
    tpu.vector_store %arg3[%c0_7, %c0_8, %c0_9], %18 {strides = array<i32>} : memref<1x1x2xf32, #tpu.memory_space<vmem>>, vector<1x1x2xf32>,
    %19 = tpu.iota {dimensions = array<i32: 1>} : vector<1x2xi32>
    %20 = vector.broadcast %6 : vector<1x1xf32> to vector<1x2xf32>
    %21 = arith.cmpf oge, %4, %20 : vector<1x2xf32>
    %c2_i32 = arith.constant 2 : i32
    %22 = vector.broadcast %c2_i32 : i32 to vector<1x2xi32>
    %23 = arith.select %21, %19, %22 : vector<1x2xi1>, vector<1x2xi32>
    %cst_10 = arith.constant dense<2147483647> : vector<1xi32>
    %24 = vector.multi_reduction <minsi>, %23, %cst_10 [1] : vector<1x2xi32> to vector<1xi32>
    %25 = vector.shape_cast %24 : vector<1xi32> to vector<1x1xi32>
    %c0_11 = arith.constant 0 : index
    %c0_12 = arith.constant 0 : index
    %c0_13 = arith.constant 0 : index
    %26 = vector.load %arg4[%c0_11, %c0_12, %c0_13] : memref<1x1x1xi32, #tpu.memory_space<vmem>>, vector<1x1x1xi32>
    %27 = vector.shape_cast %26 : vector<1x1x1xi32> to vector<1x1xi32>
    %28 = vector.shape_cast %25 : vector<1x1xi32> to vector<1x1x1xi32>
    tpu.vector_store %arg4[%c0_11, %c0_12, %c0_13], %28 {strides = array<i32>} : memref<1x1x1xi32, #tpu.memory_space<vmem>>, vector<1x1x1xi32>,
    return
  }
  func.func @transform_0(%arg0: i32) -> (i32, i32, i32) {
    %c0_i32 = arith.constant 0 : i32
    %c0_i32_0 = arith.constant 0 : i32
    %c0_i32_1 = arith.constant 0 : i32
    return %arg0, %c0_i32, %c0_i32_0 : i32, i32, i32
  }
  func.func @transform_1(%arg0: i32) -> (i32, i32, i32) {
    %c0_i32 = arith.constant 0 : i32
    %c0_i32_0 = arith.constant 0 : i32
    %c0_i32_1 = arith.constant 0 : i32
    return %arg0, %c0_i32, %c0_i32_0 : i32, i32, i32
  }
  func.func @transform_2(%arg0: i32) -> (i32, i32, i32) {
    %c0_i32 = arith.constant 0 : i32
    %c0_i32_0 = arith.constant 0 : i32
    %c0_i32_1 = arith.constant 0 : i32
    return %arg0, %c0_i32, %c0_i32_0 : i32, i32, i32
  }
  func.func @transform_3(%arg0: i32) -> (i32, i32, i32) {
    %c0_i32 = arith.constant 0 : i32
    %c0_i32_0 = arith.constant 0 : i32
    %c0_i32_1 = arith.constant 0 : i32
    return %arg0, %c0_i32, %c0_i32_0 : i32, i32, i32
  }
}

module attributes {stable_mosaic.version = 11 : i64} {
  func.func @_lstm_attn_kernel(%arg0: i32, %arg1: memref<8x8x8xf32, #tpu.memory_space<vmem>>, %arg2: memref<8x64xbf16, #tpu.memory_space<vmem>>, %arg3: memref<16x64xbf16, #tpu.memory_space<vmem>>, %arg4: memref<1x64xf32, #tpu.memory_space<vmem>>, %arg5: memref<1x16xf32, #tpu.memory_space<vmem>>, %arg6: memref<1x16xf32, #tpu.memory_space<vmem>>, %arg7: memref<1x16xf32, #tpu.memory_space<vmem>>, %arg8: memref<1x16xf32, #tpu.memory_space<vmem>>, %arg9: memref<8x16xf32, #tpu.memory_space<vmem>>, %arg10: memref<1x8x8x1xf32, #tpu.memory_space<vmem>>, %arg11: memref<8x8x16xf32, #tpu.memory_space<vmem>>) attributes {dimension_semantics = [#tpu.dimension_semantics<parallel>], iteration_bounds = array<i64: 1>, scalar_prefetch = 0 : i64, scratch_operands = 1 : i64, tpu.core_type = #tpu.core_type<tc>, window_params = [{transform_indices = @transform_0, window_bounds = array<i64: 8, 8, 8>}, {pipeline_mode = #tpu.pipeline_mode<synchronous>, transform_indices = @transform_1, window_bounds = array<i64: 8, 64>}, {pipeline_mode = #tpu.pipeline_mode<synchronous>, transform_indices = @transform_2, window_bounds = array<i64: 16, 64>}, {pipeline_mode = #tpu.pipeline_mode<synchronous>, transform_indices = @transform_3, window_bounds = array<i64: 1, 64>}, {pipeline_mode = #tpu.pipeline_mode<synchronous>, transform_indices = @transform_4, window_bounds = array<i64: 1, 16>}, {pipeline_mode = #tpu.pipeline_mode<synchronous>, transform_indices = @transform_5, window_bounds = array<i64: 1, 16>}, {pipeline_mode = #tpu.pipeline_mode<synchronous>, transform_indices = @transform_6, window_bounds = array<i64: 1, 16>}, {pipeline_mode = #tpu.pipeline_mode<synchronous>, transform_indices = @transform_7, window_bounds = array<i64: 1, 16>}, {transform_indices = @transform_8, window_bounds = array<i64: 8, 16>}, {transform_indices = @transform_9, window_bounds = array<i64: 1, 8, 8, 1>}]} {
    %c0 = arith.constant 0 : index
    %c0_0 = arith.constant 0 : index
    %c0_1 = arith.constant 0 : index
    %0 = vector.load %arg1[%c0, %c0_0, %c0_1] : memref<8x8x8xf32, #tpu.memory_space<vmem>>, vector<8x8x8xf32>
    %c0_2 = arith.constant 0 : index
    %c0_3 = arith.constant 0 : index
    %1 = vector.load %arg2[%c0_2, %c0_3] : memref<8x64xbf16, #tpu.memory_space<vmem>>, vector<8x64xbf16>
    %c0_4 = arith.constant 0 : index
    %c0_5 = arith.constant 0 : index
    %2 = vector.load %arg3[%c0_4, %c0_5] : memref<16x64xbf16, #tpu.memory_space<vmem>>, vector<16x64xbf16>
    %c0_6 = arith.constant 0 : index
    %c0_7 = arith.constant 0 : index
    %3 = vector.load %arg4[%c0_6, %c0_7] : memref<1x64xf32, #tpu.memory_space<vmem>>, vector<1x64xf32>
    %4 = vector.shape_cast %0 : vector<8x8x8xf32> to vector<64x8xf32>
    %5 = arith.truncf %4 : vector<64x8xf32> to vector<64x8xbf16>
    %cst = arith.constant dense<0.000000e+00> : vector<64x64xf32>
    %6 = tpu.matmul %5, %1, %cst {dimension_numbers = #tpu.dot_dimension_numbers<[1], [0], [0], [1], [0, 0, 1, 1], [], []>} : vector<64x8xbf16>, vector<8x64xbf16>, vector<64x64xf32> -> vector<64x64xf32>
    %7 = vector.broadcast %3 : vector<1x64xf32> to vector<64x64xf32>
    %8 = arith.addf %6, %7 : vector<64x64xf32>
    %cst_8 = arith.constant 0.000000e+00 : f32
    %9 = vector.broadcast %cst_8 : f32 to vector<8x16xf32>
    %cst_9 = arith.constant 0.000000e+00 : f32
    %10 = vector.broadcast %cst_9 : f32 to vector<8x16xf32>
    %11 = vector.extract_strided_slice %8 {offsets = [0, 0], sizes = [8, 64], strides = [1, 1]} : vector<64x64xf32> to vector<8x64xf32>
    %12 = arith.truncf %9 : vector<8x16xf32> to vector<8x16xbf16>
    %cst_10 = arith.constant dense<0.000000e+00> : vector<8x64xf32>
    %13 = tpu.matmul %12, %2, %cst_10 {dimension_numbers = #tpu.dot_dimension_numbers<[1], [0], [0], [1], [0, 0, 1, 1], [], []>} : vector<8x16xbf16>, vector<16x64xbf16>, vector<8x64xf32> -> vector<8x64xf32>
    %14 = arith.addf %11, %13 : vector<8x64xf32>
    %15 = vector.extract_strided_slice %14 {offsets = [0, 0], sizes = [8, 16], strides = [1, 1]} : vector<8x64xf32> to vector<8x16xf32>
    %16 = arith.negf %15 : vector<8x16xf32>
    %17 = math.exp %16 : vector<8x16xf32>
    %cst_11 = arith.constant 1.000000e+00 : f32
    %18 = vector.broadcast %cst_11 : f32 to vector<8x16xf32>
    %19 = arith.addf %18, %17 : vector<8x16xf32>
    %20 = arith.divf %18, %19 : vector<8x16xf32>
    %21 = vector.extract_strided_slice %14 {offsets = [0, 16], sizes = [8, 16], strides = [1, 1]} : vector<8x64xf32> to vector<8x16xf32>
    %22 = arith.negf %21 : vector<8x16xf32>
    %23 = math.exp %22 : vector<8x16xf32>
    %cst_12 = arith.constant 1.000000e+00 : f32
    %24 = vector.broadcast %cst_12 : f32 to vector<8x16xf32>
    %25 = arith.addf %24, %23 : vector<8x16xf32>
    %26 = arith.divf %24, %25 : vector<8x16xf32>
    %27 = vector.extract_strided_slice %14 {offsets = [0, 32], sizes = [8, 16], strides = [1, 1]} : vector<8x64xf32> to vector<8x16xf32>
    %28 = math.tanh %27 : vector<8x16xf32>
    %29 = vector.extract_strided_slice %14 {offsets = [0, 48], sizes = [8, 16], strides = [1, 1]} : vector<8x64xf32> to vector<8x16xf32>
    %30 = arith.negf %29 : vector<8x16xf32>
    %31 = math.exp %30 : vector<8x16xf32>
    %cst_13 = arith.constant 1.000000e+00 : f32
    %32 = vector.broadcast %cst_13 : f32 to vector<8x16xf32>
    %33 = arith.addf %32, %31 : vector<8x16xf32>
    %34 = arith.divf %32, %33 : vector<8x16xf32>
    %35 = arith.mulf %26, %10 : vector<8x16xf32>
    %36 = arith.mulf %20, %28 : vector<8x16xf32>
    %37 = arith.addf %35, %36 : vector<8x16xf32>
    %38 = math.tanh %37 : vector<8x16xf32>
    %39 = arith.mulf %34, %38 : vector<8x16xf32>
    %c0_14 = arith.constant 0 : index
    %c0_15 = arith.constant 0 : index
    %c0_16 = arith.constant 0 : index
    %40 = vector.load %arg11[%c0_14, %c0_15, %c0_16] : memref<8x8x16xf32, #tpu.memory_space<vmem>>, vector<1x8x16xf32>
    %41 = vector.shape_cast %40 : vector<1x8x16xf32> to vector<8x16xf32>
    %42 = vector.shape_cast %39 : vector<8x16xf32> to vector<1x8x16xf32>
    tpu.vector_store %arg11[%c0_14, %c0_15, %c0_16], %42 {strides = array<i32>} : memref<8x8x16xf32, #tpu.memory_space<vmem>>, vector<1x8x16xf32>,
    %43 = vector.extract_strided_slice %8 {offsets = [8, 0], sizes = [8, 64], strides = [1, 1]} : vector<64x64xf32> to vector<8x64xf32>
    %44 = arith.truncf %39 : vector<8x16xf32> to vector<8x16xbf16>
    %cst_17 = arith.constant dense<0.000000e+00> : vector<8x64xf32>
    %45 = tpu.matmul %44, %2, %cst_17 {dimension_numbers = #tpu.dot_dimension_numbers<[1], [0], [0], [1], [0, 0, 1, 1], [], []>} : vector<8x16xbf16>, vector<16x64xbf16>, vector<8x64xf32> -> vector<8x64xf32>
    %46 = arith.addf %43, %45 : vector<8x64xf32>
    %47 = vector.extract_strided_slice %46 {offsets = [0, 0], sizes = [8, 16], strides = [1, 1]} : vector<8x64xf32> to vector<8x16xf32>
    %48 = arith.negf %47 : vector<8x16xf32>
    %49 = math.exp %48 : vector<8x16xf32>
    %cst_18 = arith.constant 1.000000e+00 : f32
    %50 = vector.broadcast %cst_18 : f32 to vector<8x16xf32>
    %51 = arith.addf %50, %49 : vector<8x16xf32>
    %52 = arith.divf %50, %51 : vector<8x16xf32>
    %53 = vector.extract_strided_slice %46 {offsets = [0, 16], sizes = [8, 16], strides = [1, 1]} : vector<8x64xf32> to vector<8x16xf32>
    %54 = arith.negf %53 : vector<8x16xf32>
    %55 = math.exp %54 : vector<8x16xf32>
    %cst_19 = arith.constant 1.000000e+00 : f32
    %56 = vector.broadcast %cst_19 : f32 to vector<8x16xf32>
    %57 = arith.addf %56, %55 : vector<8x16xf32>
    %58 = arith.divf %56, %57 : vector<8x16xf32>
    %59 = vector.extract_strided_slice %46 {offsets = [0, 32], sizes = [8, 16], strides = [1, 1]} : vector<8x64xf32> to vector<8x16xf32>
    %60 = math.tanh %59 : vector<8x16xf32>
    %61 = vector.extract_strided_slice %46 {offsets = [0, 48], sizes = [8, 16], strides = [1, 1]} : vector<8x64xf32> to vector<8x16xf32>
    %62 = arith.negf %61 : vector<8x16xf32>
    %63 = math.exp %62 : vector<8x16xf32>
    %cst_20 = arith.constant 1.000000e+00 : f32
    %64 = vector.broadcast %cst_20 : f32 to vector<8x16xf32>
    %65 = arith.addf %64, %63 : vector<8x16xf32>
    %66 = arith.divf %64, %65 : vector<8x16xf32>
    %67 = arith.mulf %58, %37 : vector<8x16xf32>
    %68 = arith.mulf %52, %60 : vector<8x16xf32>
    %69 = arith.addf %67, %68 : vector<8x16xf32>
    %70 = math.tanh %69 : vector<8x16xf32>
    %71 = arith.mulf %66, %70 : vector<8x16xf32>
    %c1 = arith.constant 1 : index
    %c0_21 = arith.constant 0 : index
    %c0_22 = arith.constant 0 : index
    %72 = vector.load %arg11[%c1, %c0_21, %c0_22] : memref<8x8x16xf32, #tpu.memory_space<vmem>>, vector<1x8x16xf32>
    %73 = vector.shape_cast %72 : vector<1x8x16xf32> to vector<8x16xf32>
    %74 = vector.shape_cast %71 : vector<8x16xf32> to vector<1x8x16xf32>
    tpu.vector_store %arg11[%c1, %c0_21, %c0_22], %74 {strides = array<i32>} : memref<8x8x16xf32, #tpu.memory_space<vmem>>, vector<1x8x16xf32>,
    %75 = vector.extract_strided_slice %8 {offsets = [16, 0], sizes = [8, 64], strides = [1, 1]} : vector<64x64xf32> to vector<8x64xf32>
    %76 = arith.truncf %71 : vector<8x16xf32> to vector<8x16xbf16>
    %cst_23 = arith.constant dense<0.000000e+00> : vector<8x64xf32>
    %77 = tpu.matmul %76, %2, %cst_23 {dimension_numbers = #tpu.dot_dimension_numbers<[1], [0], [0], [1], [0, 0, 1, 1], [], []>} : vector<8x16xbf16>, vector<16x64xbf16>, vector<8x64xf32> -> vector<8x64xf32>
    %78 = arith.addf %75, %77 : vector<8x64xf32>
    %79 = vector.extract_strided_slice %78 {offsets = [0, 0], sizes = [8, 16], strides = [1, 1]} : vector<8x64xf32> to vector<8x16xf32>
    %80 = arith.negf %79 : vector<8x16xf32>
    %81 = math.exp %80 : vector<8x16xf32>
    %cst_24 = arith.constant 1.000000e+00 : f32
    %82 = vector.broadcast %cst_24 : f32 to vector<8x16xf32>
    %83 = arith.addf %82, %81 : vector<8x16xf32>
    %84 = arith.divf %82, %83 : vector<8x16xf32>
    %85 = vector.extract_strided_slice %78 {offsets = [0, 16], sizes = [8, 16], strides = [1, 1]} : vector<8x64xf32> to vector<8x16xf32>
    %86 = arith.negf %85 : vector<8x16xf32>
    %87 = math.exp %86 : vector<8x16xf32>
    %cst_25 = arith.constant 1.000000e+00 : f32
    %88 = vector.broadcast %cst_25 : f32 to vector<8x16xf32>
    %89 = arith.addf %88, %87 : vector<8x16xf32>
    %90 = arith.divf %88, %89 : vector<8x16xf32>
    %91 = vector.extract_strided_slice %78 {offsets = [0, 32], sizes = [8, 16], strides = [1, 1]} : vector<8x64xf32> to vector<8x16xf32>
    %92 = math.tanh %91 : vector<8x16xf32>
    %93 = vector.extract_strided_slice %78 {offsets = [0, 48], sizes = [8, 16], strides = [1, 1]} : vector<8x64xf32> to vector<8x16xf32>
    %94 = arith.negf %93 : vector<8x16xf32>
    %95 = math.exp %94 : vector<8x16xf32>
    %cst_26 = arith.constant 1.000000e+00 : f32
    %96 = vector.broadcast %cst_26 : f32 to vector<8x16xf32>
    %97 = arith.addf %96, %95 : vector<8x16xf32>
    %98 = arith.divf %96, %97 : vector<8x16xf32>
    %99 = arith.mulf %90, %69 : vector<8x16xf32>
    %100 = arith.mulf %84, %92 : vector<8x16xf32>
    %101 = arith.addf %99, %100 : vector<8x16xf32>
    %102 = math.tanh %101 : vector<8x16xf32>
    %103 = arith.mulf %98, %102 : vector<8x16xf32>
    %c2 = arith.constant 2 : index
    %c0_27 = arith.constant 0 : index
    %c0_28 = arith.constant 0 : index
    %104 = vector.load %arg11[%c2, %c0_27, %c0_28] : memref<8x8x16xf32, #tpu.memory_space<vmem>>, vector<1x8x16xf32>
    %105 = vector.shape_cast %104 : vector<1x8x16xf32> to vector<8x16xf32>
    %106 = vector.shape_cast %103 : vector<8x16xf32> to vector<1x8x16xf32>
    tpu.vector_store %arg11[%c2, %c0_27, %c0_28], %106 {strides = array<i32>} : memref<8x8x16xf32, #tpu.memory_space<vmem>>, vector<1x8x16xf32>,
    %107 = vector.extract_strided_slice %8 {offsets = [24, 0], sizes = [8, 64], strides = [1, 1]} : vector<64x64xf32> to vector<8x64xf32>
    %108 = arith.truncf %103 : vector<8x16xf32> to vector<8x16xbf16>
    %cst_29 = arith.constant dense<0.000000e+00> : vector<8x64xf32>
    %109 = tpu.matmul %108, %2, %cst_29 {dimension_numbers = #tpu.dot_dimension_numbers<[1], [0], [0], [1], [0, 0, 1, 1], [], []>} : vector<8x16xbf16>, vector<16x64xbf16>, vector<8x64xf32> -> vector<8x64xf32>
    %110 = arith.addf %107, %109 : vector<8x64xf32>
    %111 = vector.extract_strided_slice %110 {offsets = [0, 0], sizes = [8, 16], strides = [1, 1]} : vector<8x64xf32> to vector<8x16xf32>
    %112 = arith.negf %111 : vector<8x16xf32>
    %113 = math.exp %112 : vector<8x16xf32>
    %cst_30 = arith.constant 1.000000e+00 : f32
    %114 = vector.broadcast %cst_30 : f32 to vector<8x16xf32>
    %115 = arith.addf %114, %113 : vector<8x16xf32>
    %116 = arith.divf %114, %115 : vector<8x16xf32>
    %117 = vector.extract_strided_slice %110 {offsets = [0, 16], sizes = [8, 16], strides = [1, 1]} : vector<8x64xf32> to vector<8x16xf32>
    %118 = arith.negf %117 : vector<8x16xf32>
    %119 = math.exp %118 : vector<8x16xf32>
    %cst_31 = arith.constant 1.000000e+00 : f32
    %120 = vector.broadcast %cst_31 : f32 to vector<8x16xf32>
    %121 = arith.addf %120, %119 : vector<8x16xf32>
    %122 = arith.divf %120, %121 : vector<8x16xf32>
    %123 = vector.extract_strided_slice %110 {offsets = [0, 32], sizes = [8, 16], strides = [1, 1]} : vector<8x64xf32> to vector<8x16xf32>
    %124 = math.tanh %123 : vector<8x16xf32>
    %125 = vector.extract_strided_slice %110 {offsets = [0, 48], sizes = [8, 16], strides = [1, 1]} : vector<8x64xf32> to vector<8x16xf32>
    %126 = arith.negf %125 : vector<8x16xf32>
    %127 = math.exp %126 : vector<8x16xf32>
    %cst_32 = arith.constant 1.000000e+00 : f32
    %128 = vector.broadcast %cst_32 : f32 to vector<8x16xf32>
    %129 = arith.addf %128, %127 : vector<8x16xf32>
    %130 = arith.divf %128, %129 : vector<8x16xf32>
    %131 = arith.mulf %122, %101 : vector<8x16xf32>
    %132 = arith.mulf %116, %124 : vector<8x16xf32>
    %133 = arith.addf %131, %132 : vector<8x16xf32>
    %134 = math.tanh %133 : vector<8x16xf32>
    %135 = arith.mulf %130, %134 : vector<8x16xf32>
    %c3 = arith.constant 3 : index
    %c0_33 = arith.constant 0 : index
    %c0_34 = arith.constant 0 : index
    %136 = vector.load %arg11[%c3, %c0_33, %c0_34] : memref<8x8x16xf32, #tpu.memory_space<vmem>>, vector<1x8x16xf32>
    %137 = vector.shape_cast %136 : vector<1x8x16xf32> to vector<8x16xf32>
    %138 = vector.shape_cast %135 : vector<8x16xf32> to vector<1x8x16xf32>
    tpu.vector_store %arg11[%c3, %c0_33, %c0_34], %138 {strides = array<i32>} : memref<8x8x16xf32, #tpu.memory_space<vmem>>, vector<1x8x16xf32>,
    %139 = vector.extract_strided_slice %8 {offsets = [32, 0], sizes = [8, 64], strides = [1, 1]} : vector<64x64xf32> to vector<8x64xf32>
    %140 = arith.truncf %135 : vector<8x16xf32> to vector<8x16xbf16>
    %cst_35 = arith.constant dense<0.000000e+00> : vector<8x64xf32>
    %141 = tpu.matmul %140, %2, %cst_35 {dimension_numbers = #tpu.dot_dimension_numbers<[1], [0], [0], [1], [0, 0, 1, 1], [], []>} : vector<8x16xbf16>, vector<16x64xbf16>, vector<8x64xf32> -> vector<8x64xf32>
    %142 = arith.addf %139, %141 : vector<8x64xf32>
    %143 = vector.extract_strided_slice %142 {offsets = [0, 0], sizes = [8, 16], strides = [1, 1]} : vector<8x64xf32> to vector<8x16xf32>
    %144 = arith.negf %143 : vector<8x16xf32>
    %145 = math.exp %144 : vector<8x16xf32>
    %cst_36 = arith.constant 1.000000e+00 : f32
    %146 = vector.broadcast %cst_36 : f32 to vector<8x16xf32>
    %147 = arith.addf %146, %145 : vector<8x16xf32>
    %148 = arith.divf %146, %147 : vector<8x16xf32>
    %149 = vector.extract_strided_slice %142 {offsets = [0, 16], sizes = [8, 16], strides = [1, 1]} : vector<8x64xf32> to vector<8x16xf32>
    %150 = arith.negf %149 : vector<8x16xf32>
    %151 = math.exp %150 : vector<8x16xf32>
    %cst_37 = arith.constant 1.000000e+00 : f32
    %152 = vector.broadcast %cst_37 : f32 to vector<8x16xf32>
    %153 = arith.addf %152, %151 : vector<8x16xf32>
    %154 = arith.divf %152, %153 : vector<8x16xf32>
    %155 = vector.extract_strided_slice %142 {offsets = [0, 32], sizes = [8, 16], strides = [1, 1]} : vector<8x64xf32> to vector<8x16xf32>
    %156 = math.tanh %155 : vector<8x16xf32>
    %157 = vector.extract_strided_slice %142 {offsets = [0, 48], sizes = [8, 16], strides = [1, 1]} : vector<8x64xf32> to vector<8x16xf32>
    %158 = arith.negf %157 : vector<8x16xf32>
    %159 = math.exp %158 : vector<8x16xf32>
    %cst_38 = arith.constant 1.000000e+00 : f32
    %160 = vector.broadcast %cst_38 : f32 to vector<8x16xf32>
    %161 = arith.addf %160, %159 : vector<8x16xf32>
    %162 = arith.divf %160, %161 : vector<8x16xf32>
    %163 = arith.mulf %154, %133 : vector<8x16xf32>
    %164 = arith.mulf %148, %156 : vector<8x16xf32>
    %165 = arith.addf %163, %164 : vector<8x16xf32>
    %166 = math.tanh %165 : vector<8x16xf32>
    %167 = arith.mulf %162, %166 : vector<8x16xf32>
    %c4 = arith.constant 4 : index
    %c0_39 = arith.constant 0 : index
    %c0_40 = arith.constant 0 : index
    %168 = vector.load %arg11[%c4, %c0_39, %c0_40] : memref<8x8x16xf32, #tpu.memory_space<vmem>>, vector<1x8x16xf32>
    %169 = vector.shape_cast %168 : vector<1x8x16xf32> to vector<8x16xf32>
    %170 = vector.shape_cast %167 : vector<8x16xf32> to vector<1x8x16xf32>
    tpu.vector_store %arg11[%c4, %c0_39, %c0_40], %170 {strides = array<i32>} : memref<8x8x16xf32, #tpu.memory_space<vmem>>, vector<1x8x16xf32>,
    %171 = vector.extract_strided_slice %8 {offsets = [40, 0], sizes = [8, 64], strides = [1, 1]} : vector<64x64xf32> to vector<8x64xf32>
    %172 = arith.truncf %167 : vector<8x16xf32> to vector<8x16xbf16>
    %cst_41 = arith.constant dense<0.000000e+00> : vector<8x64xf32>
    %173 = tpu.matmul %172, %2, %cst_41 {dimension_numbers = #tpu.dot_dimension_numbers<[1], [0], [0], [1], [0, 0, 1, 1], [], []>} : vector<8x16xbf16>, vector<16x64xbf16>, vector<8x64xf32> -> vector<8x64xf32>
    %174 = arith.addf %171, %173 : vector<8x64xf32>
    %175 = vector.extract_strided_slice %174 {offsets = [0, 0], sizes = [8, 16], strides = [1, 1]} : vector<8x64xf32> to vector<8x16xf32>
    %176 = arith.negf %175 : vector<8x16xf32>
    %177 = math.exp %176 : vector<8x16xf32>
    %cst_42 = arith.constant 1.000000e+00 : f32
    %178 = vector.broadcast %cst_42 : f32 to vector<8x16xf32>
    %179 = arith.addf %178, %177 : vector<8x16xf32>
    %180 = arith.divf %178, %179 : vector<8x16xf32>
    %181 = vector.extract_strided_slice %174 {offsets = [0, 16], sizes = [8, 16], strides = [1, 1]} : vector<8x64xf32> to vector<8x16xf32>
    %182 = arith.negf %181 : vector<8x16xf32>
    %183 = math.exp %182 : vector<8x16xf32>
    %cst_43 = arith.constant 1.000000e+00 : f32
    %184 = vector.broadcast %cst_43 : f32 to vector<8x16xf32>
    %185 = arith.addf %184, %183 : vector<8x16xf32>
    %186 = arith.divf %184, %185 : vector<8x16xf32>
    %187 = vector.extract_strided_slice %174 {offsets = [0, 32], sizes = [8, 16], strides = [1, 1]} : vector<8x64xf32> to vector<8x16xf32>
    %188 = math.tanh %187 : vector<8x16xf32>
    %189 = vector.extract_strided_slice %174 {offsets = [0, 48], sizes = [8, 16], strides = [1, 1]} : vector<8x64xf32> to vector<8x16xf32>
    %190 = arith.negf %189 : vector<8x16xf32>
    %191 = math.exp %190 : vector<8x16xf32>
    %cst_44 = arith.constant 1.000000e+00 : f32
    %192 = vector.broadcast %cst_44 : f32 to vector<8x16xf32>
    %193 = arith.addf %192, %191 : vector<8x16xf32>
    %194 = arith.divf %192, %193 : vector<8x16xf32>
    %195 = arith.mulf %186, %165 : vector<8x16xf32>
    %196 = arith.mulf %180, %188 : vector<8x16xf32>
    %197 = arith.addf %195, %196 : vector<8x16xf32>
    %198 = math.tanh %197 : vector<8x16xf32>
    %199 = arith.mulf %194, %198 : vector<8x16xf32>
    %c5 = arith.constant 5 : index
    %c0_45 = arith.constant 0 : index
    %c0_46 = arith.constant 0 : index
    %200 = vector.load %arg11[%c5, %c0_45, %c0_46] : memref<8x8x16xf32, #tpu.memory_space<vmem>>, vector<1x8x16xf32>
    %201 = vector.shape_cast %200 : vector<1x8x16xf32> to vector<8x16xf32>
    %202 = vector.shape_cast %199 : vector<8x16xf32> to vector<1x8x16xf32>
    tpu.vector_store %arg11[%c5, %c0_45, %c0_46], %202 {strides = array<i32>} : memref<8x8x16xf32, #tpu.memory_space<vmem>>, vector<1x8x16xf32>,
    %203 = vector.extract_strided_slice %8 {offsets = [48, 0], sizes = [8, 64], strides = [1, 1]} : vector<64x64xf32> to vector<8x64xf32>
    %204 = arith.truncf %199 : vector<8x16xf32> to vector<8x16xbf16>
    %cst_47 = arith.constant dense<0.000000e+00> : vector<8x64xf32>
    %205 = tpu.matmul %204, %2, %cst_47 {dimension_numbers = #tpu.dot_dimension_numbers<[1], [0], [0], [1], [0, 0, 1, 1], [], []>} : vector<8x16xbf16>, vector<16x64xbf16>, vector<8x64xf32> -> vector<8x64xf32>
    %206 = arith.addf %203, %205 : vector<8x64xf32>
    %207 = vector.extract_strided_slice %206 {offsets = [0, 0], sizes = [8, 16], strides = [1, 1]} : vector<8x64xf32> to vector<8x16xf32>
    %208 = arith.negf %207 : vector<8x16xf32>
    %209 = math.exp %208 : vector<8x16xf32>
    %cst_48 = arith.constant 1.000000e+00 : f32
    %210 = vector.broadcast %cst_48 : f32 to vector<8x16xf32>
    %211 = arith.addf %210, %209 : vector<8x16xf32>
    %212 = arith.divf %210, %211 : vector<8x16xf32>
    %213 = vector.extract_strided_slice %206 {offsets = [0, 16], sizes = [8, 16], strides = [1, 1]} : vector<8x64xf32> to vector<8x16xf32>
    %214 = arith.negf %213 : vector<8x16xf32>
    %215 = math.exp %214 : vector<8x16xf32>
    %cst_49 = arith.constant 1.000000e+00 : f32
    %216 = vector.broadcast %cst_49 : f32 to vector<8x16xf32>
    %217 = arith.addf %216, %215 : vector<8x16xf32>
    %218 = arith.divf %216, %217 : vector<8x16xf32>
    %219 = vector.extract_strided_slice %206 {offsets = [0, 32], sizes = [8, 16], strides = [1, 1]} : vector<8x64xf32> to vector<8x16xf32>
    %220 = math.tanh %219 : vector<8x16xf32>
    %221 = vector.extract_strided_slice %206 {offsets = [0, 48], sizes = [8, 16], strides = [1, 1]} : vector<8x64xf32> to vector<8x16xf32>
    %222 = arith.negf %221 : vector<8x16xf32>
    %223 = math.exp %222 : vector<8x16xf32>
    %cst_50 = arith.constant 1.000000e+00 : f32
    %224 = vector.broadcast %cst_50 : f32 to vector<8x16xf32>
    %225 = arith.addf %224, %223 : vector<8x16xf32>
    %226 = arith.divf %224, %225 : vector<8x16xf32>
    %227 = arith.mulf %218, %197 : vector<8x16xf32>
    %228 = arith.mulf %212, %220 : vector<8x16xf32>
    %229 = arith.addf %227, %228 : vector<8x16xf32>
    %230 = math.tanh %229 : vector<8x16xf32>
    %231 = arith.mulf %226, %230 : vector<8x16xf32>
    %c6 = arith.constant 6 : index
    %c0_51 = arith.constant 0 : index
    %c0_52 = arith.constant 0 : index
    %232 = vector.load %arg11[%c6, %c0_51, %c0_52] : memref<8x8x16xf32, #tpu.memory_space<vmem>>, vector<1x8x16xf32>
    %233 = vector.shape_cast %232 : vector<1x8x16xf32> to vector<8x16xf32>
    %234 = vector.shape_cast %231 : vector<8x16xf32> to vector<1x8x16xf32>
    tpu.vector_store %arg11[%c6, %c0_51, %c0_52], %234 {strides = array<i32>} : memref<8x8x16xf32, #tpu.memory_space<vmem>>, vector<1x8x16xf32>,
    %235 = vector.extract_strided_slice %8 {offsets = [56, 0], sizes = [8, 64], strides = [1, 1]} : vector<64x64xf32> to vector<8x64xf32>
    %236 = arith.truncf %231 : vector<8x16xf32> to vector<8x16xbf16>
    %cst_53 = arith.constant dense<0.000000e+00> : vector<8x64xf32>
    %237 = tpu.matmul %236, %2, %cst_53 {dimension_numbers = #tpu.dot_dimension_numbers<[1], [0], [0], [1], [0, 0, 1, 1], [], []>} : vector<8x16xbf16>, vector<16x64xbf16>, vector<8x64xf32> -> vector<8x64xf32>
    %238 = arith.addf %235, %237 : vector<8x64xf32>
    %239 = vector.extract_strided_slice %238 {offsets = [0, 0], sizes = [8, 16], strides = [1, 1]} : vector<8x64xf32> to vector<8x16xf32>
    %240 = arith.negf %239 : vector<8x16xf32>
    %241 = math.exp %240 : vector<8x16xf32>
    %cst_54 = arith.constant 1.000000e+00 : f32
    %242 = vector.broadcast %cst_54 : f32 to vector<8x16xf32>
    %243 = arith.addf %242, %241 : vector<8x16xf32>
    %244 = arith.divf %242, %243 : vector<8x16xf32>
    %245 = vector.extract_strided_slice %238 {offsets = [0, 16], sizes = [8, 16], strides = [1, 1]} : vector<8x64xf32> to vector<8x16xf32>
    %246 = arith.negf %245 : vector<8x16xf32>
    %247 = math.exp %246 : vector<8x16xf32>
    %cst_55 = arith.constant 1.000000e+00 : f32
    %248 = vector.broadcast %cst_55 : f32 to vector<8x16xf32>
    %249 = arith.addf %248, %247 : vector<8x16xf32>
    %250 = arith.divf %248, %249 : vector<8x16xf32>
    %251 = vector.extract_strided_slice %238 {offsets = [0, 32], sizes = [8, 16], strides = [1, 1]} : vector<8x64xf32> to vector<8x16xf32>
    %252 = math.tanh %251 : vector<8x16xf32>
    %253 = vector.extract_strided_slice %238 {offsets = [0, 48], sizes = [8, 16], strides = [1, 1]} : vector<8x64xf32> to vector<8x16xf32>
    %254 = arith.negf %253 : vector<8x16xf32>
    %255 = math.exp %254 : vector<8x16xf32>
    %cst_56 = arith.constant 1.000000e+00 : f32
    %256 = vector.broadcast %cst_56 : f32 to vector<8x16xf32>
    %257 = arith.addf %256, %255 : vector<8x16xf32>
    %258 = arith.divf %256, %257 : vector<8x16xf32>
    %259 = arith.mulf %250, %229 : vector<8x16xf32>
    %260 = arith.mulf %244, %252 : vector<8x16xf32>
    %261 = arith.addf %259, %260 : vector<8x16xf32>
    %262 = math.tanh %261 : vector<8x16xf32>
    %263 = arith.mulf %258, %262 : vector<8x16xf32>
    %c7 = arith.constant 7 : index
    %c0_57 = arith.constant 0 : index
    %c0_58 = arith.constant 0 : index
    %264 = vector.load %arg11[%c7, %c0_57, %c0_58] : memref<8x8x16xf32, #tpu.memory_space<vmem>>, vector<1x8x16xf32>
    %265 = vector.shape_cast %264 : vector<1x8x16xf32> to vector<8x16xf32>
    %266 = vector.shape_cast %263 : vector<8x16xf32> to vector<1x8x16xf32>
    tpu.vector_store %arg11[%c7, %c0_57, %c0_58], %266 {strides = array<i32>} : memref<8x8x16xf32, #tpu.memory_space<vmem>>, vector<1x8x16xf32>,
    %c0_59 = arith.constant 0 : index
    %c0_60 = arith.constant 0 : index
    %c0_61 = arith.constant 0 : index
    %267 = vector.load %arg11[%c0_59, %c0_60, %c0_61] : memref<8x8x16xf32, #tpu.memory_space<vmem>>, vector<8x8x16xf32>
    %268 = vector.shape_cast %263 : vector<8x16xf32> to vector<1x8x16xf32>
    %269 = vector.broadcast %268 : vector<1x8x16xf32> to vector<8x8x16xf32>
    %270 = arith.mulf %267, %269 : vector<8x8x16xf32>
    %cst_62 = arith.constant dense<0.000000e+00> : vector<8x8xf32>
    %271 = vector.multi_reduction <add>, %270, %cst_62 [2] : vector<8x8x16xf32> to vector<8x8xf32>
    %272 = vector.shape_cast %271 : vector<8x8xf32> to vector<8x8x1xf32>
    %cst_63 = arith.constant dense<0xFF800000> : vector<8x1xf32>
    %273 = vector.multi_reduction <maximumf>, %272, %cst_63 [0] : vector<8x8x1xf32> to vector<8x1xf32>
    %274 = vector.shape_cast %273 : vector<8x1xf32> to vector<1x8x1xf32>
    %275 = vector.broadcast %274 : vector<1x8x1xf32> to vector<8x8x1xf32>
    %276 = arith.subf %272, %275 : vector<8x8x1xf32>
    %277 = math.exp %276 : vector<8x8x1xf32>
    %cst_64 = arith.constant dense<0.000000e+00> : vector<8x1xf32>
    %278 = vector.multi_reduction <add>, %277, %cst_64 [0] : vector<8x8x1xf32> to vector<8x1xf32>
    %279 = vector.shape_cast %278 : vector<8x1xf32> to vector<1x8x1xf32>
    %280 = vector.broadcast %279 : vector<1x8x1xf32> to vector<8x8x1xf32>
    %281 = arith.divf %277, %280 : vector<8x8x1xf32>
    %c0_65 = arith.constant 0 : index
    %c0_66 = arith.constant 0 : index
    %c0_67 = arith.constant 0 : index
    %c0_68 = arith.constant 0 : index
    %282 = vector.load %arg10[%c0_65, %c0_66, %c0_67, %c0_68] : memref<1x8x8x1xf32, #tpu.memory_space<vmem>>, vector<1x8x8x1xf32>
    %283 = vector.shape_cast %282 : vector<1x8x8x1xf32> to vector<8x8x1xf32>
    %284 = vector.shape_cast %281 : vector<8x8x1xf32> to vector<1x8x8x1xf32>
    tpu.vector_store %arg10[%c0_65, %c0_66, %c0_67, %c0_68], %284 {strides = array<i32>} : memref<1x8x8x1xf32, #tpu.memory_space<vmem>>, vector<1x8x8x1xf32>,
    %285 = vector.broadcast %281 : vector<8x8x1xf32> to vector<8x8x16xf32>
    %286 = arith.mulf %267, %285 : vector<8x8x16xf32>
    %cst_69 = arith.constant dense<0.000000e+00> : vector<8x16xf32>
    %287 = vector.multi_reduction <add>, %286, %cst_69 [0] : vector<8x8x16xf32> to vector<8x16xf32>
    %c0_70 = arith.constant 0 : index
    %c0_71 = arith.constant 0 : index
    %288 = vector.load %arg5[%c0_70, %c0_71] : memref<1x16xf32, #tpu.memory_space<vmem>>, vector<1x16xf32>
    %c0_72 = arith.constant 0 : index
    %c0_73 = arith.constant 0 : index
    %289 = vector.load %arg6[%c0_72, %c0_73] : memref<1x16xf32, #tpu.memory_space<vmem>>, vector<1x16xf32>
    %cst_74 = arith.constant dense<0.000000e+00> : vector<8xf32>
    %290 = vector.multi_reduction <add>, %287, %cst_74 [1] : vector<8x16xf32> to vector<8xf32>
    %291 = vector.shape_cast %290 : vector<8xf32> to vector<8x1xf32>
    %cst_75 = arith.constant 1.600000e+01 : f32
    %292 = vector.broadcast %cst_75 : f32 to vector<8x1xf32>
    %293 = arith.divf %291, %292 : vector<8x1xf32>
    %294 = vector.broadcast %293 : vector<8x1xf32> to vector<8x16xf32>
    %295 = arith.subf %287, %294 : vector<8x16xf32>
    %296 = arith.mulf %295, %295 : vector<8x16xf32>
    %cst_76 = arith.constant dense<0.000000e+00> : vector<8xf32>
    %297 = vector.multi_reduction <add>, %296, %cst_76 [1] : vector<8x16xf32> to vector<8xf32>
    %298 = vector.shape_cast %297 : vector<8xf32> to vector<8x1xf32>
    %cst_77 = arith.constant 1.600000e+01 : f32
    %299 = vector.broadcast %cst_77 : f32 to vector<8x1xf32>
    %300 = arith.divf %298, %299 : vector<8x1xf32>
    %301 = vector.broadcast %293 : vector<8x1xf32> to vector<8x16xf32>
    %302 = arith.subf %287, %301 : vector<8x16xf32>
    %cst_78 = arith.constant 9.99999974E-6 : f32
    %303 = vector.broadcast %cst_78 : f32 to vector<8x1xf32>
    %304 = arith.addf %300, %303 : vector<8x1xf32>
    %305 = math.rsqrt %304 : vector<8x1xf32>
    %306 = vector.broadcast %305 : vector<8x1xf32> to vector<8x16xf32>
    %307 = arith.mulf %302, %306 : vector<8x16xf32>
    %308 = vector.broadcast %288 : vector<1x16xf32> to vector<8x16xf32>
    %309 = arith.mulf %307, %308 : vector<8x16xf32>
    %310 = vector.broadcast %289 : vector<1x16xf32> to vector<8x16xf32>
    %311 = arith.addf %309, %310 : vector<8x16xf32>
    %c0_79 = arith.constant 0 : index
    %c0_80 = arith.constant 0 : index
    %312 = vector.load %arg7[%c0_79, %c0_80] : memref<1x16xf32, #tpu.memory_space<vmem>>, vector<1x16xf32>
    %c0_81 = arith.constant 0 : index
    %c0_82 = arith.constant 0 : index
    %313 = vector.load %arg8[%c0_81, %c0_82] : memref<1x16xf32, #tpu.memory_space<vmem>>, vector<1x16xf32>
    %cst_83 = arith.constant dense<0.000000e+00> : vector<8xf32>
    %314 = vector.multi_reduction <add>, %311, %cst_83 [1] : vector<8x16xf32> to vector<8xf32>
    %315 = vector.shape_cast %314 : vector<8xf32> to vector<8x1xf32>
    %cst_84 = arith.constant 1.600000e+01 : f32
    %316 = vector.broadcast %cst_84 : f32 to vector<8x1xf32>
    %317 = arith.divf %315, %316 : vector<8x1xf32>
    %318 = vector.broadcast %317 : vector<8x1xf32> to vector<8x16xf32>
    %319 = arith.subf %311, %318 : vector<8x16xf32>
    %320 = arith.mulf %319, %319 : vector<8x16xf32>
    %cst_85 = arith.constant dense<0.000000e+00> : vector<8xf32>
    %321 = vector.multi_reduction <add>, %320, %cst_85 [1] : vector<8x16xf32> to vector<8xf32>
    %322 = vector.shape_cast %321 : vector<8xf32> to vector<8x1xf32>
    %cst_86 = arith.constant 1.600000e+01 : f32
    %323 = vector.broadcast %cst_86 : f32 to vector<8x1xf32>
    %324 = arith.divf %322, %323 : vector<8x1xf32>
    %325 = vector.broadcast %317 : vector<8x1xf32> to vector<8x16xf32>
    %326 = arith.subf %311, %325 : vector<8x16xf32>
    %cst_87 = arith.constant 9.99999974E-6 : f32
    %327 = vector.broadcast %cst_87 : f32 to vector<8x1xf32>
    %328 = arith.addf %324, %327 : vector<8x1xf32>
    %329 = math.rsqrt %328 : vector<8x1xf32>
    %330 = vector.broadcast %329 : vector<8x1xf32> to vector<8x16xf32>
    %331 = arith.mulf %326, %330 : vector<8x16xf32>
    %332 = vector.broadcast %312 : vector<1x16xf32> to vector<8x16xf32>
    %333 = arith.mulf %331, %332 : vector<8x16xf32>
    %334 = vector.broadcast %313 : vector<1x16xf32> to vector<8x16xf32>
    %335 = arith.addf %333, %334 : vector<8x16xf32>
    %c0_88 = arith.constant 0 : index
    %c0_89 = arith.constant 0 : index
    %336 = vector.load %arg9[%c0_88, %c0_89] : memref<8x16xf32, #tpu.memory_space<vmem>>, vector<8x16xf32>
    tpu.vector_store %arg9[%c0_88, %c0_89], %335 {strides = array<i32>} : memref<8x16xf32, #tpu.memory_space<vmem>>, vector<8x16xf32>,
    return
  }
  func.func @transform_0(%arg0: i32) -> (i32, i32, i32) {
    %c0_i32 = arith.constant 0 : i32
    %c0_i32_0 = arith.constant 0 : i32
    %c0_i32_1 = arith.constant 0 : i32
    return %c0_i32, %arg0, %c0_i32_0 : i32, i32, i32
  }
  func.func @transform_1(%arg0: i32) -> (i32, i32) {
    %c0_i32 = arith.constant 0 : i32
    %c0_i32_0 = arith.constant 0 : i32
    %c0_i32_1 = arith.constant 0 : i32
    return %c0_i32, %c0_i32_0 : i32, i32
  }
  func.func @transform_2(%arg0: i32) -> (i32, i32) {
    %c0_i32 = arith.constant 0 : i32
    %c0_i32_0 = arith.constant 0 : i32
    %c0_i32_1 = arith.constant 0 : i32
    return %c0_i32, %c0_i32_0 : i32, i32
  }
  func.func @transform_3(%arg0: i32) -> (i32, i32) {
    %c0_i32 = arith.constant 0 : i32
    %c0_i32_0 = arith.constant 0 : i32
    %c0_i32_1 = arith.constant 0 : i32
    return %c0_i32, %c0_i32_0 : i32, i32
  }
  func.func @transform_4(%arg0: i32) -> (i32, i32) {
    %c0_i32 = arith.constant 0 : i32
    %c0_i32_0 = arith.constant 0 : i32
    %c0_i32_1 = arith.constant 0 : i32
    return %c0_i32, %c0_i32_0 : i32, i32
  }
  func.func @transform_5(%arg0: i32) -> (i32, i32) {
    %c0_i32 = arith.constant 0 : i32
    %c0_i32_0 = arith.constant 0 : i32
    %c0_i32_1 = arith.constant 0 : i32
    return %c0_i32, %c0_i32_0 : i32, i32
  }
  func.func @transform_6(%arg0: i32) -> (i32, i32) {
    %c0_i32 = arith.constant 0 : i32
    %c0_i32_0 = arith.constant 0 : i32
    %c0_i32_1 = arith.constant 0 : i32
    return %c0_i32, %c0_i32_0 : i32, i32
  }
  func.func @transform_7(%arg0: i32) -> (i32, i32) {
    %c0_i32 = arith.constant 0 : i32
    %c0_i32_0 = arith.constant 0 : i32
    %c0_i32_1 = arith.constant 0 : i32
    return %c0_i32, %c0_i32_0 : i32, i32
  }
  func.func @transform_8(%arg0: i32) -> (i32, i32) {
    %c0_i32 = arith.constant 0 : i32
    %c0_i32_0 = arith.constant 0 : i32
    return %arg0, %c0_i32 : i32, i32
  }
  func.func @transform_9(%arg0: i32) -> (i32, i32, i32, i32) {
    %c0_i32 = arith.constant 0 : i32
    %c0_i32_0 = arith.constant 0 : i32
    %c0_i32_1 = arith.constant 0 : i32
    %c0_i32_2 = arith.constant 0 : i32
    return %arg0, %c0_i32, %c0_i32_0, %c0_i32_1 : i32, i32, i32, i32
  }
}

</mosaic_0001>

<llo_original>
// kernel: eq.1
$region0: #{eq.1}
  %s0 = inlined_call_operand.vmem [shape: s32[12], index: 0, kind: input, shape index: {}]
  %s1 = inlined_call_operand.vmem [shape: s32[2,6], index: 1, kind: output, shape index: {}]
  $region1: #{eq.1} parent=0
    #allocation0 [shape = 'u8[4096]{0}', space=vmem, size = 0x1000, scoped, tag = 'scoped mem for output reshape']
    #allocation1 [shape = 'u8[4096]{0}', space=vmem, size = 0x1000, scoped, tag = 'scoped mem for input reshape']
    %s3 = sshll.u32 1, 1
    %s4 = ssub.s32 %s3, 1
    %v5 = vld [vmem:[%s0] sm:%s4]
    %6 = vst [vmem:[#allocation1] sm:%s4] %v5
    %v7 = vld [vmem:[#allocation1] sm:$0x1]
    %vm8 = vcmask 48128
    %9 = vst.msk [vmem:[#allocation0] sm:$0x1] %vm8, %v7
    %v10 = vld [vmem:[#allocation1] sm:$0x1]
    %11 = vrot.lane.b32.xlu0 %v10, 122
    %v12 = vpop.permute.xlu0 %11
    %vm13 = vcmask 48128
    %s14 = scalar_lea.vmem [#allocation0], 1
    %15 = vst.msk [vmem:[%s14] sm:$0x1] %vm13, %v12
    %s17 = sshll.u32 1, 2
    %s18 = ssub.s32 %s17, 1
    %v20 = vld [vmem:[#allocation0] sm:%s18]
    %s21 = sshll.u32 1, 2
    %s22 = ssub.s32 %s21, 1
    %23 = vst [vmem:[%s1] sm:%s22] %v20

// kernel: meta_forward.6
$region0: #{meta_forward.6}
  #allocation0 [shape = 'u32[]', space=smem, size = 0x4, offset = 0x4, fixed_abs, tag = 'smem constant byte address 0x4 - core index']
  #allocation1 [shape = 'u32[144,128]{1,0:T(1,128)}', space=vmem, size = 0x12000, scoped, tag = 'internal scratch']
  %s0 = inlined_call_operand.vmem [shape: f32[3,8,16], index: 0, kind: input, shape index: {}]
  %s1 = inlined_call_operand.vmem [shape: bf16[16,32], index: 1, kind: input, shape index: {}]
  %s2 = inlined_call_operand.vmem [shape: f32[1,32], index: 2, kind: input, shape index: {}]
  %s3 = inlined_call_operand.vmem [shape: f32[8,32], index: 3, kind: output, shape index: {}]
  %s4 = sld [smem:[#allocation0]]
  $region22: #{meta_forward.6} parent=0
    _
  %s6 = ssub.s32 1, %s4
  %s7 = scalar_select 0, %s6, %s4
  // Predicated region
  $region2: #{meta_forward.6} parent=0 // pred_check
    _
  $region3: #{meta_forward.6} parent=0 // pred_check_branch
    %9 = sbr.rel (0) target = $region5
  $region4: #{meta_forward.6} parent=0 // pred_region
    _
  $region5: #{meta_forward.6} parent=0 // pred_fallthru
    _
  // Predicated region
  $region6: #{meta_forward.6} parent=0 // pred_check
    _
  $region7: #{meta_forward.6} parent=0 // pred_check_branch
    %11 = sbr.rel (0) target = $region9
  $region8: #{meta_forward.6} parent=0 // pred_region
    _
  $region9: #{meta_forward.6} parent=0 // pred_fallthru
    _
  // Predicated region
  $region10: #{meta_forward.6} parent=0 // pred_check
    _
  $region11: #{meta_forward.6} parent=0 // pred_check_branch
    %13 = sbr.rel (0) target = $region13
  $region12: #{meta_forward.6} parent=0 // pred_region
    _
  $region13: #{meta_forward.6} parent=0 // pred_fallthru
    _
  %v15 = vld [vmem:[%s0] sm:$0xff]
  %v16 = vld [vmem:[%s0 + $0x8] sm:$0xff]
  %v17 = vld [vmem:[%s0 + $0x10] sm:$0xff]
  %v18 = vpack.c.bf16 %v16, %v15
  %v19 = vpack.c.bf16 %v17, %v17
  %v20 = vld [vmem:[%s1] sm:$0xf]
  %v21 = vld [vmem:[%s1 + $0x4] sm:$0xf]
  %v22 = vld [vmem:[%s2] sm:$0x1]
  %v24 = vlaneseq
  %v25 = vshrl.u32 %v24, 7
  %v26 = vsub.s32 0, %v25
  %v27 = vrot.slane %v22, %v26
  %v31 = vunpack.c.l.b16 %v20
  %v32 = vunpack.c.l.b16 %v21
  %v33 = vpack.c.b16 %v32, %v31
  %vm35 = vcmask 130048
  %v37 = vsel %vm35, %v18, 0
  %v40 = vsel %vm35, %v19, 0
  %42 = vmatprep.subr.bf16.mxu0 0
  %43 = vmatpush1.bf16.msra.mxu0 0
  %44 = vmatprep.subr.bf16.mxu0 0
  %45 = vmatpush1.bf16.msra.mxu0 0
  %46 = vmatprep.subr.bf16.mxu0 0
  %47 = vmatpush1.bf16.msra.mxu0 0
  %48 = vmatprep.subr.bf16.mxu0 0
  %49 = vmatpush1.bf16.msra.mxu0 0
  %50 = vmatprep.subr.bf16.mxu0 0
  %51 = vmatpush1.bf16.msra.mxu0 0
  %52 = vmatprep.subr.bf16.mxu0 0
  %53 = vmatpush1.bf16.msra.mxu0 0
  %54 = vmatprep.subr.bf16.mxu0 0
  %55 = vmatpush1.bf16.msra.mxu0 0
  %56 = vmatprep.subr.bf16.mxu0 0
  %57 = vmatpush1.bf16.msra.mxu0 %v33
  %58 = vmatprep.subr.bf16.mxu0 0
  %59 = vmatpush2.bf16.msra.mxu0 0
  %60 = vmatprep.subr.bf16.mxu0 0
  %61 = vmatpush2.bf16.msra.mxu0 0
  %62 = vmatprep.subr.bf16.mxu0 0
  %63 = vmatpush2.bf16.msra.mxu0 0
  %64 = vmatprep.subr.bf16.mxu0 0
  %65 = vmatpush2.bf16.msra.mxu0 0
  %66 = vmatprep.subr.bf16.mxu0 0
  %67 = vmatpush2.bf16.msra.mxu0 0
  %68 = vmatprep.subr.bf16.mxu0 0
  %69 = vmatpush2.bf16.msra.mxu0 0
  %70 = vmatprep.subr.bf16.mxu0 0
  %71 = vmatpush2.bf16.msra.mxu0 0
  %72 = vmatprep.subr.bf16.mxu0 0
  %73 = vmatpush2.bf16.msra.mxu0 0
  %74 = vmatprep.mubr.bf16.mxu0 0
  %75 = vmatmul.mubr.bf16.gmra.mxu0 %v37
  %v76 = vpop.f32.mrf.mxu0
  %v77 = vadd.f32 %v27, %v76
  %v78 = vpop.f32.mrf.mxu0
  %v79 = vpop.f32.mrf.mxu0
  %v80 = vadd.f32 %v27, %v79
  %v81 = vpop.f32.mrf.mxu0
  %82 = vmatprep.mubr.bf16.mxu0 0
  %83 = vmatmul.mubr.bf16.gmra.mxu0 %v40
  %v84 = vpop.f32.mrf.mxu0
  %v85 = vadd.f32 %v27, %v84
  %v86 = vpop.f32.mrf.mxu0
  %v87 = vpop.f32.mrf.mxu0
  %v88 = vpop.f32.mrf.mxu0
  %89 = vdwg.mxu0
  %vm90 = vcmp.gt.f32.partialorder %v77, 0.0
  %vm91 = vcmp.gt.f32.partialorder %v80, 0.0
  %vm92 = vcmp.gt.f32.partialorder %v85, 0.0
  %v93 = vmin.f32 %v77, 0.0
  %v94 = vmin.f32 %v80, 0.0
  %v95 = vmin.f32 %v85, 0.0
  %v96 = vmul.f32 %v93, 1.442695
  %v97 = vpow.pop %v96
  %v98 = vmul.f32 %v94, 1.442695
  %v99 = vpow.pop %v98
  %v100 = vmul.f32 %v95, 1.442695
  %v101 = vpow.pop %v100
  %v102 = vsub.f32 %v97, 1.0
  %v103 = vsub.f32 %v99, 1.0
  %v104 = vsub.f32 %v101, 1.0
  %v105 = vsel %vm90, %v77, %v102
  %v106 = vsel %vm91, %v80, %v103
  %v107 = vsel %vm92, %v85, %v104
  %vm108 = vcmask 261120
  %v109 = vsel %vm108, %v105, 0.0
  %v110 = vsel %vm108, %v106, 0.0
  %v111 = vadd.f32 %v109, %v110
  %v112 = vsel %vm108, %v107, 0.0
  %v113 = vadd.f32 %v111, %v112
  %v114 = vrcp.pop 3.0
  %v115 = vmul.f32 %v113, %v114
  %116 = vst.msk [vmem:[%s3] sm:$0xff] %vm108, %v115
  // Predicated region
  $region14: #{meta_forward.6} parent=0 // pred_check
    _
  $region15: #{meta_forward.6} parent=0 // pred_check_branch
    %118 = sbr.rel (0) target = $region17
  $region16: #{meta_forward.6} parent=0 // pred_region
    _
  $region17: #{meta_forward.6} parent=0 // pred_fallthru
    _
  // Predicated region
  $region18: #{meta_forward.6} parent=0 // pred_check
    _
  $region19: #{meta_forward.6} parent=0 // pred_check_branch
    %120 = sbr.rel (0) target = $region21
  $region20: #{meta_forward.6} parent=0 // pred_region
    _
  $region21: #{meta_forward.6} parent=0 // pred_fallthru
    _

// kernel: meta_forward.5
$region0: #{meta_forward.5}
  #allocation0 [shape = 'u32[]', space=smem, size = 0x4, offset = 0x4, fixed_abs, tag = 'smem constant byte address 0x4 - core index']
  #allocation1 [shape = 'u32[144,128]{1,0:T(1,128)}', space=vmem, size = 0x12000, scoped, tag = 'internal scratch']
  #allocation2 [shape = 'f32[8,16,16]{2,1,0:T(8,128)}', space=vmem, size = 0x10000, scoped, tag = 'scratch operand']
  %s0 = inlined_call_operand.vmem [shape: f32[8,16,8], index: 0, kind: input, shape index: {}]
  %s1 = inlined_call_operand.vmem [shape: bf16[8,64], index: 1, kind: input, shape index: {}]
  %s2 = inlined_call_operand.vmem [shape: bf16[16,64], index: 2, kind: input, shape index: {}]
  %s3 = inlined_call_operand.vmem [shape: f32[1,64], index: 3, kind: input, shape index: {}]
  %s4 = inlined_call_operand.vmem [shape: f32[1,16], index: 4, kind: input, shape index: {}]
  %s5 = inlined_call_operand.vmem [shape: f32[1,16], index: 5, kind: input, shape index: {}]
  %s6 = inlined_call_operand.vmem [shape: f32[1,16], index: 6, kind: input, shape index: {}]
  %s7 = inlined_call_operand.vmem [shape: f32[1,16], index: 7, kind: input, shape index: {}]
  %s8 = inlined_call_operand.vmem [shape: f32[16,16], index: 8, kind: output, shape index: {0}]
  %s9 = inlined_call_operand.vmem [shape: f32[1,8,16,1], index: 9, kind: output, shape index: {1}]
  %10 = xla_tuple %s8, %s9
  %s11 = sld [smem:[#allocation0]]
  $region50: #{meta_forward.5} parent=0
    _
  %s13 = ssub.s32 1, %s11
  %s14 = scalar_select 0, %s13, %s11
  // Predicated region
  $region2: #{meta_forward.5} parent=0 // pred_check
    _
  $region3: #{meta_forward.5} parent=0 // pred_check_branch
    %16 = sbr.rel (0) target = $region5
  $region4: #{meta_forward.5} parent=0 // pred_region
    _
  $region5: #{meta_forward.5} parent=0 // pred_fallthru
    _
  // Predicated region
  $region6: #{meta_forward.5} parent=0 // pred_check
    _
  $region7: #{meta_forward.5} parent=0 // pred_check_branch
    %18 = sbr.rel (0) target = $region9
  $region8: #{meta_forward.5} parent=0 // pred_region
    _
  $region9: #{meta_forward.5} parent=0 // pred_fallthru
    _
  // Predicated region
  $region10: #{meta_forward.5} parent=0 // pred_check
    _
  $region11: #{meta_forward.5} parent=0 // pred_check_branch
    %20 = sbr.rel (0) target = $region13
  $region12: #{meta_forward.5} parent=0 // pred_region
    _
  $region13: #{meta_forward.5} parent=0 // pred_fallthru
    _
  // Predicated region
  $region14: #{meta_forward.5} parent=0 // pred_check
    _
  $region15: #{meta_forward.5} parent=0 // pred_check_branch
    %22 = sbr.rel (0) target = $region17
  $region16: #{meta_forward.5} parent=0 // pred_region
    _
  $region17: #{meta_forward.5} parent=0 // pred_fallthru
    _
  // Predicated region
  $region18: #{meta_forward.5} parent=0 // pred_check
    _
  $region19: #{meta_forward.5} parent=0 // pred_check_branch
    %24 = sbr.rel (0) target = $region21
  $region20: #{meta_forward.5} parent=0 // pred_region
    _
  $region21: #{meta_forward.5} parent=0 // pred_fallthru
    _
  // Predicated region
  $region22: #{meta_forward.5} parent=0 // pred_check
    _
  $region23: #{meta_forward.5} parent=0 // pred_check_branch
    %26 = sbr.rel (0) target = $region25
  $region24: #{meta_forward.5} parent=0 // pred_region
    _
  $region25: #{meta_forward.5} parent=0 // pred_fallthru
    _
  // Predicated region
  $region26: #{meta_forward.5} parent=0 // pred_check
    _
  $region27: #{meta_forward.5} parent=0 // pred_check_branch
    %28 = sbr.rel (0) target = $region29
  $region28: #{meta_forward.5} parent=0 // pred_region
    _
  $region29: #{meta_forward.5} parent=0 // pred_fallthru
    _
  // Predicated region
  $region30: #{meta_forward.5} parent=0 // pred_check
    _
  $region31: #{meta_forward.5} parent=0 // pred_check_branch
    %30 = sbr.rel (0) target = $region33
  $region32: #{meta_forward.5} parent=0 // pred_region
    _
  $region33: #{meta_forward.5} parent=0 // pred_fallthru
    _
  %v32 = vld [vmem:[%s0] sm:$0xff]
  %v33 = vld [vmem:[%s0 + $0x8] sm:$0xff]
  %v34 = vld [vmem:[%s0 + $0x10] sm:$0xff]
  %v35 = vld [vmem:[%s0 + $0x18] sm:$0xff]
  %v36 = vld [vmem:[%s0 + $0x20] sm:$0xff]
  %v37 = vld [vmem:[%s0 + $0x28] sm:$0xff]
  %v38 = vld [vmem:[%s0 + $0x30] sm:$0xff]
  %v39 = vld [vmem:[%s0 + $0x38] sm:$0xff]
  %v40 = vld [vmem:[%s0 + $0x40] sm:$0xff]
  %v41 = vld [vmem:[%s0 + $0x48] sm:$0xff]
  %v42 = vld [vmem:[%s0 + $0x50] sm:$0xff]
  %v43 = vld [vmem:[%s0 + $0x58] sm:$0xff]
  %v44 = vld [vmem:[%s0 + $0x60] sm:$0xff]
  %v45 = vld [vmem:[%s0 + $0x68] sm:$0xff]
  %v46 = vld [vmem:[%s0 + $0x70] sm:$0xff]
  %v47 = vld [vmem:[%s0 + $0x78] sm:$0xff]
  %v48 = vld [vmem:[%s1] sm:$0xf]
  %v49 = vld [vmem:[%s2] sm:$0xf]
  %v50 = vld [vmem:[%s2 + $0x4] sm:$0xf]
  %v51 = vld [vmem:[%s3] sm:$0x1]
  %v52 = vpack.c.bf16 %v33, %v32
  %v53 = vpack.c.bf16 %v35, %v34
  %v54 = vpack.c.bf16 %v37, %v36
  %v55 = vpack.c.bf16 %v39, %v38
  %v56 = vpack.c.bf16 %v41, %v40
  %v57 = vpack.c.bf16 %v43, %v42
  %v58 = vpack.c.bf16 %v45, %v44
  %v59 = vpack.c.bf16 %v47, %v46
  %v61 = vlaneseq
  %v62 = vshrl.u32 %v61, 7
  %v63 = vsub.s32 0, %v62
  %v64 = vrot.slane %v51, %v63
  %vm66 = vcmask 64512
  %v68 = vsel %vm66, %v52, 0
  %v71 = vsel %vm66, %v53, 0
  %v74 = vsel %vm66, %v54, 0
  %v77 = vsel %vm66, %v55, 0
  %v80 = vsel %vm66, %v56, 0
  %v83 = vsel %vm66, %v57, 0
  %v86 = vsel %vm66, %v58, 0
  %v89 = vsel %vm66, %v59, 0
  %vm91 = vcmask 1043456
  %v93 = vsel %vm91, %v48, 0
  %95 = vmatprep.subr.bf16.mxu0 0
  %96 = vmatpush1.bf16.msra.mxu0 0
  %97 = vmatprep.subr.bf16.mxu0 0
  %98 = vmatpush1.bf16.msra.mxu0 0
  %99 = vmatprep.subr.bf16.mxu0 0
  %100 = vmatpush1.bf16.msra.mxu0 0
  %101 = vmatprep.subr.bf16.mxu0 0
  %102 = vmatpush1.bf16.msra.mxu0 0
  %103 = vmatprep.subr.bf16.mxu0 0
  %104 = vmatpush1.bf16.msra.mxu0 0
  %105 = vmatprep.subr.bf16.mxu0 0
  %106 = vmatpush1.bf16.msra.mxu0 0
  %107 = vmatprep.subr.bf16.mxu0 0
  %108 = vmatpush1.bf16.msra.mxu0 0
  %109 = vmatprep.subr.bf16.mxu0 0
  %110 = vmatpush1.bf16.msra.mxu0 %v93
  %111 = vmatprep.subr.bf16.mxu0 0
  %112 = vmatpush2.bf16.msra.mxu0 0
  %113 = vmatprep.subr.bf16.mxu0 0
  %114 = vmatpush2.bf16.msra.mxu0 0
  %115 = vmatprep.subr.bf16.mxu0 0
  %116 = vmatpush2.bf16.msra.mxu0 0
  %117 = vmatprep.subr.bf16.mxu0 0
  %118 = vmatpush2.bf16.msra.mxu0 0
  %119 = vmatprep.subr.bf16.mxu0 0
  %120 = vmatpush2.bf16.msra.mxu0 0
  %121 = vmatprep.subr.bf16.mxu0 0
  %122 = vmatpush2.bf16.msra.mxu0 0
  %123 = vmatprep.subr.bf16.mxu0 0
  %124 = vmatpush2.bf16.msra.mxu0 0
  %125 = vmatprep.subr.bf16.mxu0 0
  %126 = vmatpush2.bf16.msra.mxu0 0
  %127 = vmatprep.mubr.bf16.mxu0 0
  %128 = vmatmul.mubr.bf16.gmra.mxu0 %v68
  %v129 = vpop.f32.mrf.mxu0
  %v130 = vadd.f32 %v64, %v129
  %v131 = vpop.f32.mrf.mxu0
  %v132 = vpop.f32.mrf.mxu0
  %v133 = vadd.f32 %v64, %v132
  %v134 = vpop.f32.mrf.mxu0
  %135 = vmatprep.mubr.bf16.mxu0 0
  %136 = vmatmul.mubr.bf16.gmra.mxu0 %v71
  %v137 = vpop.f32.mrf.mxu0
  %v138 = vadd.f32 %v64, %v137
  %v139 = vpop.f32.mrf.mxu0
  %v140 = vpop.f32.mrf.mxu0
  %v141 = vadd.f32 %v64, %v140
  %v142 = vpop.f32.mrf.mxu0
  %143 = vmatprep.mubr.bf16.mxu0 0
  %144 = vmatmul.mubr.bf16.gmra.mxu0 %v74
  %v145 = vpop.f32.mrf.mxu0
  %v146 = vadd.f32 %v64, %v145
  %v147 = vpop.f32.mrf.mxu0
  %v148 = vpop.f32.mrf.mxu0
  %v149 = vadd.f32 %v64, %v148
  %v150 = vpop.f32.mrf.mxu0
  %151 = vmatprep.mubr.bf16.mxu0 0
  %152 = vmatmul.mubr.bf16.gmra.mxu0 %v77
  %v153 = vpop.f32.mrf.mxu0
  %v154 = vadd.f32 %v64, %v153
  %v155 = vpop.f32.mrf.mxu0
  %v156 = vpop.f32.mrf.mxu0
  %v157 = vadd.f32 %v64, %v156
  %v158 = vpop.f32.mrf.mxu0
  %159 = vmatprep.mubr.bf16.mxu0 0
  %160 = vmatmul.mubr.bf16.gmra.mxu0 %v80
  %v161 = vpop.f32.mrf.mxu0
  %v162 = vadd.f32 %v64, %v161
  %v163 = vpop.f32.mrf.mxu0
  %v164 = vpop.f32.mrf.mxu0
  %v165 = vadd.f32 %v64, %v164
  %v166 = vpop.f32.mrf.mxu0
  %167 = vmatprep.mubr.bf16.mxu0 0
  %168 = vmatmul.mubr.bf16.gmra.mxu0 %v83
  %v169 = vpop.f32.mrf.mxu0
  %v170 = vadd.f32 %v64, %v169
  %v171 = vpop.f32.mrf.mxu0
  %v172 = vpop.f32.mrf.mxu0
  %v173 = vadd.f32 %v64, %v172
  %v174 = vpop.f32.mrf.mxu0
  %175 = vmatprep.mubr.bf16.mxu0 0
  %176 = vmatmul.mubr.bf16.gmra.mxu0 %v86
  %v177 = vpop.f32.mrf.mxu0
  %v178 = vadd.f32 %v64, %v177
  %v179 = vpop.f32.mrf.mxu0
  %v180 = vpop.f32.mrf.mxu0
  %v181 = vadd.f32 %v64, %v180
  %v182 = vpop.f32.mrf.mxu0
  %183 = vmatprep.mubr.bf16.mxu0 0
  %184 = vmatmul.mubr.bf16.gmra.mxu0 %v89
  %v185 = vpop.f32.mrf.mxu0
  %v186 = vadd.f32 %v64, %v185
  %v187 = vpop.f32.mrf.mxu0
  %v188 = vpop.f32.mrf.mxu0
  %v189 = vadd.f32 %v64, %v188
  %v190 = vpop.f32.mrf.mxu0
  %191 = vdwg.mxu0
  %v194 = vunpack.c.l.b16 %v49
  %v195 = vunpack.c.l.b16 %v50
  %v196 = vpack.c.b16 %v195, %v194
  %vm198 = vcmask 130048
  %v200 = vsel %vm198, 0, 0
  %202 = vmatprep.subr.bf16.mxu0 0
  %203 = vmatpush1.bf16.msra.mxu0 0
  %204 = vmatprep.subr.bf16.mxu0 0
  %205 = vmatpush1.bf16.msra.mxu0 0
  %206 = vmatprep.subr.bf16.mxu0 0
  %207 = vmatpush1.bf16.msra.mxu0 0
  %208 = vmatprep.subr.bf16.mxu0 0
  %209 = vmatpush1.bf16.msra.mxu0 0
  %210 = vmatprep.subr.bf16.mxu0 0
  %211 = vmatpush1.bf16.msra.mxu0 0
  %212 = vmatprep.subr.bf16.mxu0 0
  %213 = vmatpush1.bf16.msra.mxu0 0
  %214 = vmatprep.subr.bf16.mxu0 0
  %215 = vmatpush1.bf16.msra.mxu0 0
  %216 = vmatprep.subr.bf16.mxu0 0
  %217 = vmatpush1.bf16.msra.mxu0 %v196
  %218 = vmatprep.subr.bf16.mxu0 0
  %219 = vmatpush2.bf16.msra.mxu0 0
  %220 = vmatprep.subr.bf16.mxu0 0
  %221 = vmatpush2.bf16.msra.mxu0 0
  %222 = vmatprep.subr.bf16.mxu0 0
  %223 = vmatpush2.bf16.msra.mxu0 0
  %224 = vmatprep.subr.bf16.mxu0 0
  %225 = vmatpush2.bf16.msra.mxu0 0
  %226 = vmatprep.subr.bf16.mxu0 0
  %227 = vmatpush2.bf16.msra.mxu0 0
  %228 = vmatprep.subr.bf16.mxu0 0
  %229 = vmatpush2.bf16.msra.mxu0 0
  %230 = vmatprep.subr.bf16.mxu0 0
  %231 = vmatpush2.bf16.msra.mxu0 0
  %232 = vmatprep.subr.bf16.mxu0 0
  %233 = vmatpush2.bf16.msra.mxu0 0
  %234 = vmatprep.mubr.bf16.mxu0 0
  %235 = vmatmul.mubr.bf16.gmra.mxu0 %v200
  %v236 = vpop.f32.mrf.mxu0
  %v237 = vadd.f32 0.0, %v236
  %v238 = vpop.f32.mrf.mxu0
  %v239 = vpop.f32.mrf.mxu0
  %v240 = vadd.f32 0.0, %v239
  %v241 = vpop.f32.mrf.mxu0
  %242 = vdwg.mxu0
  %v243 = vadd.f32 %v130, %v237
  %v244 = vadd.f32 %v133, %v240
  %v245 = vxor.u32 %v243, 2147483648
  %v246 = vxor.u32 %v244, 2147483648
  %v247 = vmul.f32 %v245, 1.442695
  %v248 = vpow.pop %v247
  %v249 = vmul.f32 %v246, 1.442695
  %v250 = vpow.pop %v249
  %v251 = vadd.f32 %v248, 1.0
  %v252 = vadd.f32 %v250, 1.0
  %v253 = vrcp.pop %v251
  %v254 = vmul.f32 1.0, %v253
  %v255 = vrcp.pop %v252
  %v256 = vmul.f32 1.0, %v255
  %v257 = vtanh.pop %v243
  %v258 = vtanh.pop %v244
  %v259 = vmul.f32 %v254, 0.0
  %v260 = vmul.f32 %v256, 0.0
  %263 = vrot.lane.b32.xlu0 %v257, 96
  %v264 = vpop.permute.xlu0 %263
  %265 = vrot.lane.b32.xlu0 %v258, 96
  %v266 = vpop.permute.xlu0 %265
  %v269 = vmul.f32 %v254, %v264
  %v270 = vmul.f32 %v256, %v266
  %273 = vrot.lane.b32.xlu0 %v269, 16
  %v274 = vpop.permute.xlu0 %273
  %275 = vrot.lane.b32.xlu0 %v270, 16
  %v276 = vpop.permute.xlu0 %275
  %v279 = vadd.f32 %v259, %v274
  %v280 = vadd.f32 %v260, %v276
  %v281 = vtanh.pop %v279
  %v282 = vtanh.pop %v280
  %285 = vrot.lane.b32.xlu0 %v281, 32
  %v286 = vpop.permute.xlu0 %285
  %287 = vrot.lane.b32.xlu0 %v282, 32
  %v288 = vpop.permute.xlu0 %287
  %v291 = vmul.f32 %v254, %v286
  %v292 = vmul.f32 %v256, %v288
  %295 = vrot.lane.b32.xlu0 %v291, 80
  %v296 = vpop.permute.xlu0 %295
  %297 = vrot.lane.b32.xlu0 %v292, 80
  %v298 = vpop.permute.xlu0 %297
  %301 = vst.msk [vmem:[#allocation2] sm:$0xff] %vm198, %v296
  %302 = vst.msk [vmem:[#allocation2 + $0x8] sm:$0xff] %vm198, %v298
  %v303 = vpack.c.bf16 %v292, %v291
  %305 = vrot.lane.b32.xlu0 %v303, 80
  %v306 = vpop.permute.xlu0 %305
  %v308 = vsel %vm198, %v306, 0
  %310 = vmatprep.subr.bf16.mxu0 0
  %311 = vmatpush1.bf16.msra.mxu0 0
  %312 = vmatprep.subr.bf16.mxu0 0
  %313 = vmatpush1.bf16.msra.mxu0 0
  %314 = vmatprep.subr.bf16.mxu0 0
  %315 = vmatpush1.bf16.msra.mxu0 0
  %316 = vmatprep.subr.bf16.mxu0 0
  %317 = vmatpush1.bf16.msra.mxu0 0
  %318 = vmatprep.subr.bf16.mxu0 0
  %319 = vmatpush1.bf16.msra.mxu0 0
  %320 = vmatprep.subr.bf16.mxu0 0
  %321 = vmatpush1.bf16.msra.mxu0 0
  %322 = vmatprep.subr.bf16.mxu0 0
  %323 = vmatpush1.bf16.msra.mxu0 0
  %324 = vmatprep.subr.bf16.mxu0 0
  %325 = vmatpush1.bf16.msra.mxu0 %v196
  %326 = vmatprep.subr.bf16.mxu0 0
  %327 = vmatpush2.bf16.msra.mxu0 0
  %328 = vmatprep.subr.bf16.mxu0 0
  %329 = vmatpush2.bf16.msra.mxu0 0
  %330 = vmatprep.subr.bf16.mxu0 0
  %331 = vmatpush2.bf16.msra.mxu0 0
  %332 = vmatprep.subr.bf16.mxu0 0
  %333 = vmatpush2.bf16.msra.mxu0 0
  %334 = vmatprep.subr.bf16.mxu0 0
  %335 = vmatpush2.bf16.msra.mxu0 0
  %336 = vmatprep.subr.bf16.mxu0 0
  %337 = vmatpush2.bf16.msra.mxu0 0
  %338 = vmatprep.subr.bf16.mxu0 0
  %339 = vmatpush2.bf16.msra.mxu0 0
  %340 = vmatprep.subr.bf16.mxu0 0
  %341 = vmatpush2.bf16.msra.mxu0 0
  %342 = vmatprep.mubr.bf16.mxu0 0
  %343 = vmatmul.mubr.bf16.gmra.mxu0 %v308
  %v344 = vpop.f32.mrf.mxu0
  %v345 = vadd.f32 0.0, %v344
  %v346 = vpop.f32.mrf.mxu0
  %v347 = vpop.f32.mrf.mxu0
  %v348 = vadd.f32 0.0, %v347
  %v349 = vpop.f32.mrf.mxu0
  %350 = vdwg.mxu0
  %v351 = vadd.f32 %v138, %v345
  %v352 = vadd.f32 %v141, %v348
  %v353 = vxor.u32 %v351, 2147483648
  %v354 = vxor.u32 %v352, 2147483648
  %v355 = vmul.f32 %v353, 1.442695
  %v356 = vpow.pop %v355
  %v357 = vmul.f32 %v354, 1.442695
  %v358 = vpow.pop %v357
  %v359 = vadd.f32 %v356, 1.0
  %v360 = vadd.f32 %v358, 1.0
  %v361 = vrcp.pop %v359
  %v362 = vmul.f32 1.0, %v361
  %v363 = vrcp.pop %v360
  %v364 = vmul.f32 1.0, %v363
  %v365 = vtanh.pop %v351
  %v366 = vtanh.pop %v352
  %v367 = vmul.f32 %v362, %v279
  %v368 = vmul.f32 %v364, %v280
  %371 = vrot.lane.b32.xlu0 %v365, 96
  %v372 = vpop.permute.xlu0 %371
  %373 = vrot.lane.b32.xlu0 %v366, 96
  %v374 = vpop.permute.xlu0 %373
  %v377 = vmul.f32 %v362, %v372
  %v378 = vmul.f32 %v364, %v374
  %381 = vrot.lane.b32.xlu0 %v377, 16
  %v382 = vpop.permute.xlu0 %381
  %383 = vrot.lane.b32.xlu0 %v378, 16
  %v384 = vpop.permute.xlu0 %383
  %v387 = vadd.f32 %v367, %v382
  %v388 = vadd.f32 %v368, %v384
  %v389 = vtanh.pop %v387
  %v390 = vtanh.pop %v388
  %393 = vrot.lane.b32.xlu0 %v389, 32
  %v394 = vpop.permute.xlu0 %393
  %395 = vrot.lane.b32.xlu0 %v390, 32
  %v396 = vpop.permute.xlu0 %395
  %v399 = vmul.f32 %v362, %v394
  %v400 = vmul.f32 %v364, %v396
  %403 = vrot.lane.b32.xlu0 %v399, 80
  %v404 = vpop.permute.xlu0 %403
  %405 = vrot.lane.b32.xlu0 %v400, 80
  %v406 = vpop.permute.xlu0 %405
  %s409 = scalar_lea.vmem [#allocation2], 16
  %410 = vst.msk [vmem:[%s409] sm:$0xff] %vm198, %v404
  %411 = vst.msk [vmem:[%s409 + $0x8] sm:$0xff] %vm198, %v406
  %v412 = vpack.c.bf16 %v400, %v399
  %414 = vrot.lane.b32.xlu0 %v412, 80
  %v415 = vpop.permute.xlu0 %414
  %v417 = vsel %vm198, %v415, 0
  %419 = vmatprep.subr.bf16.mxu0 0
  %420 = vmatpush1.bf16.msra.mxu0 0
  %421 = vmatprep.subr.bf16.mxu0 0
  %422 = vmatpush1.bf16.msra.mxu0 0
  %423 = vmatprep.subr.bf16.mxu0 0
  %424 = vmatpush1.bf16.msra.mxu0 0
  %425 = vmatprep.subr.bf16.mxu0 0
  %426 = vmatpush1.bf16.msra.mxu0 0
  %427 = vmatprep.subr.bf16.mxu0 0
  %428 = vmatpush1.bf16.msra.mxu0 0
  %429 = vmatprep.subr.bf16.mxu0 0
  %430 = vmatpush1.bf16.msra.mxu0 0
  %431 = vmatprep.subr.bf16.mxu0 0
  %432 = vmatpush1.bf16.msra.mxu0 0
  %433 = vmatprep.subr.bf16.mxu0 0
  %434 = vmatpush1.bf16.msra.mxu0 %v196
  %435 = vmatprep.subr.bf16.mxu0 0
  %436 = vmatpush2.bf16.msra.mxu0 0
  %437 = vmatprep.subr.bf16.mxu0 0
  %438 = vmatpush2.bf16.msra.mxu0 0
  %439 = vmatprep.subr.bf16.mxu0 0
  %440 = vmatpush2.bf16.msra.mxu0 0
  %441 = vmatprep.subr.bf16.mxu0 0
  %442 = vmatpush2.bf16.msra.mxu0 0
  %443 = vmatprep.subr.bf16.mxu0 0
  %444 = vmatpush2.bf16.msra.mxu0 0
  %445 = vmatprep.subr.bf16.mxu0 0
  %446 = vmatpush2.bf16.msra.mxu0 0
  %447 = vmatprep.subr.bf16.mxu0 0
  %448 = vmatpush2.bf16.msra.mxu0 0
  %449 = vmatprep.subr.bf16.mxu0 0
  %450 = vmatpush2.bf16.msra.mxu0 0
  %451 = vmatprep.mubr.bf16.mxu0 0
  %452 = vmatmul.mubr.bf16.gmra.mxu0 %v417
  %v453 = vpop.f32.mrf.mxu0
  %v454 = vadd.f32 0.0, %v453
  %v455 = vpop.f32.mrf.mxu0
  %v456 = vpop.f32.mrf.mxu0
  %v457 = vadd.f32 0.0, %v456
  %v458 = vpop.f32.mrf.mxu0
  %459 = vdwg.mxu0
  %v460 = vadd.f32 %v146, %v454
  %v461 = vadd.f32 %v149, %v457
  %v462 = vxor.u32 %v460, 2147483648
  %v463 = vxor.u32 %v461, 2147483648
  %v464 = vmul.f32 %v462, 1.442695
  %v465 = vpow.pop %v464
  %v466 = vmul.f32 %v463, 1.442695
  %v467 = vpow.pop %v466
  %v468 = vadd.f32 %v465, 1.0
  %v469 = vadd.f32 %v467, 1.0
  %v470 = vrcp.pop %v468
  %v471 = vmul.f32 1.0, %v470
  %v472 = vrcp.pop %v469
  %v473 = vmul.f32 1.0, %v472
  %v474 = vtanh.pop %v460
  %v475 = vtanh.pop %v461
  %v476 = vmul.f32 %v471, %v387
  %v477 = vmul.f32 %v473, %v388
  %480 = vrot.lane.b32.xlu0 %v474, 96
  %v481 = vpop.permute.xlu0 %480
  %482 = vrot.lane.b32.xlu0 %v475, 96
  %v483 = vpop.permute.xlu0 %482
  %v486 = vmul.f32 %v471, %v481
  %v487 = vmul.f32 %v473, %v483
  %490 = vrot.lane.b32.xlu0 %v486, 16
  %v491 = vpop.permute.xlu0 %490
  %492 = vrot.lane.b32.xlu0 %v487, 16
  %v493 = vpop.permute.xlu0 %492
  %v496 = vadd.f32 %v476, %v491
  %v497 = vadd.f32 %v477, %v493
  %v498 = vtanh.pop %v496
  %v499 = vtanh.pop %v497
  %502 = vrot.lane.b32.xlu0 %v498, 32
  %v503 = vpop.permute.xlu0 %502
  %504 = vrot.lane.b32.xlu0 %v499, 32
  %v505 = vpop.permute.xlu0 %504
  %v508 = vmul.f32 %v471, %v503
  %v509 = vmul.f32 %v473, %v505
  %512 = vrot.lane.b32.xlu0 %v508, 80
  %v513 = vpop.permute.xlu0 %512
  %514 = vrot.lane.b32.xlu0 %v509, 80
  %v515 = vpop.permute.xlu0 %514
  %s518 = scalar_lea.vmem [#allocation2], 32
  %519 = vst.msk [vmem:[%s518] sm:$0xff] %vm198, %v513
  %520 = vst.msk [vmem:[%s518 + $0x8] sm:$0xff] %vm198, %v515
  %v521 = vpack.c.bf16 %v509, %v508
  %523 = vrot.lane.b32.xlu0 %v521, 80
  %v524 = vpop.permute.xlu0 %523
  %v526 = vsel %vm198, %v524, 0
  %528 = vmatprep.subr.bf16.mxu0 0
  %529 = vmatpush1.bf16.msra.mxu0 0
  %530 = vmatprep.subr.bf16.mxu0 0
  %531 = vmatpush1.bf16.msra.mxu0 0
  %532 = vmatprep.subr.bf16.mxu0 0
  %533 = vmatpush1.bf16.msra.mxu0 0
  %534 = vmatprep.subr.bf16.mxu0 0
  %535 = vmatpush1.bf16.msra.mxu0 0
  %536 = vmatprep.subr.bf16.mxu0 0
  %537 = vmatpush1.bf16.msra.mxu0 0
  %538 = vmatprep.subr.bf16.mxu0 0
  %539 = vmatpush1.bf16.msra.mxu0 0
  %540 = vmatprep.subr.bf16.mxu0 0
  %541 = vmatpush1.bf16.msra.mxu0 0
  %542 = vmatprep.subr.bf16.mxu0 0
  %543 = vmatpush1.bf16.msra.mxu0 %v196
  %544 = vmatprep.subr.bf16.mxu0 0
  %545 = vmatpush2.bf16.msra.mxu0 0
  %546 = vmatprep.subr.bf16.mxu0 0
  %547 = vmatpush2.bf16.msra.mxu0 0
  %548 = vmatprep.subr.bf16.mxu0 0
  %549 = vmatpush2.bf16.msra.mxu0 0
  %550 = vmatprep.subr.bf16.mxu0 0
  %551 = vmatpush2.bf16.msra.mxu0 0
  %552 = vmatprep.subr.bf16.mxu0 0
  %553 = vmatpush2.bf16.msra.mxu0 0
  %554 = vmatprep.subr.bf16.mxu0 0
  %555 = vmatpush2.bf16.msra.mxu0 0
  %556 = vmatprep.subr.bf16.mxu0 0
  %557 = vmatpush2.bf16.msra.mxu0 0
  %558 = vmatprep.subr.bf16.mxu0 0
  %559 = vmatpush2.bf16.msra.mxu0 0
  %560 = vmatprep.mubr.bf16.mxu0 0
  %561 = vmatmul.mubr.bf16.gmra.mxu0 %v526
  %v562 = vpop.f32.mrf.mxu0
  %v563 = vadd.f32 0.0, %v562
  %v564 = vpop.f32.mrf.mxu0
  %v565 = vpop.f32.mrf.mxu0
  %v566 = vadd.f32 0.0, %v565
  %v567 = vpop.f32.mrf.mxu0
  %568 = vdwg.mxu0
  %v569 = vadd.f32 %v154, %v563
  %v570 = vadd.f32 %v157, %v566
  %v571 = vxor.u32 %v569, 2147483648
  %v572 = vxor.u32 %v570, 2147483648
  %v573 = vmul.f32 %v571, 1.442695
  %v574 = vpow.pop %v573
  %v575 = vmul.f32 %v572, 1.442695
  %v576 = vpow.pop %v575
  %v577 = vadd.f32 %v574, 1.0
  %v578 = vadd.f32 %v576, 1.0
  %v579 = vrcp.pop %v577
  %v580 = vmul.f32 1.0, %v579
  %v581 = vrcp.pop %v578
  %v582 = vmul.f32 1.0, %v581
  %v583 = vtanh.pop %v569
  %v584 = vtanh.pop %v570
  %v585 = vmul.f32 %v580, %v496
  %v586 = vmul.f32 %v582, %v497
  %589 = vrot.lane.b32.xlu0 %v583, 96
  %v590 = vpop.permute.xlu0 %589
  %591 = vrot.lane.b32.xlu0 %v584, 96
  %v592 = vpop.permute.xlu0 %591
  %v595 = vmul.f32 %v580, %v590
  %v596 = vmul.f32 %v582, %v592
  %599 = vrot.lane.b32.xlu0 %v595, 16
  %v600 = vpop.permute.xlu0 %599
  %601 = vrot.lane.b32.xlu0 %v596, 16
  %v602 = vpop.permute.xlu0 %601
  %v605 = vadd.f32 %v585, %v600
  %v606 = vadd.f32 %v586, %v602
  %v607 = vtanh.pop %v605
  %v608 = vtanh.pop %v606
  %611 = vrot.lane.b32.xlu0 %v607, 32
  %v612 = vpop.permute.xlu0 %611
  %613 = vrot.lane.b32.xlu0 %v608, 32
  %v614 = vpop.permute.xlu0 %613
  %v617 = vmul.f32 %v580, %v612
  %v618 = vmul.f32 %v582, %v614
  %621 = vrot.lane.b32.xlu0 %v617, 80
  %v622 = vpop.permute.xlu0 %621
  %623 = vrot.lane.b32.xlu0 %v618, 80
  %v624 = vpop.permute.xlu0 %623
  %s627 = scalar_lea.vmem [#allocation2], 48
  %628 = vst.msk [vmem:[%s627] sm:$0xff] %vm198, %v622
  %629 = vst.msk [vmem:[%s627 + $0x8] sm:$0xff] %vm198, %v624
  %v630 = vpack.c.bf16 %v618, %v617
  %632 = vrot.lane.b32.xlu0 %v630, 80
  %v633 = vpop.permute.xlu0 %632
  %v635 = vsel %vm198, %v633, 0
  %637 = vmatprep.subr.bf16.mxu0 0
  %638 = vmatpush1.bf16.msra.mxu0 0
  %639 = vmatprep.subr.bf16.mxu0 0
  %640 = vmatpush1.bf16.msra.mxu0 0
  %641 = vmatprep.subr.bf16.mxu0 0
  %642 = vmatpush1.bf16.msra.mxu0 0
  %643 = vmatprep.subr.bf16.mxu0 0
  %644 = vmatpush1.bf16.msra.mxu0 0
  %645 = vmatprep.subr.bf16.mxu0 0
  %646 = vmatpush1.bf16.msra.mxu0 0
  %647 = vmatprep.subr.bf16.mxu0 0
  %648 = vmatpush1.bf16.msra.mxu0 0
  %649 = vmatprep.subr.bf16.mxu0 0
  %650 = vmatpush1.bf16.msra.mxu0 0
  %651 = vmatprep.subr.bf16.mxu0 0
  %652 = vmatpush1.bf16.msra.mxu0 %v196
  %653 = vmatprep.subr.bf16.mxu0 0
  %654 = vmatpush2.bf16.msra.mxu0 0
  %655 = vmatprep.subr.bf16.mxu0 0
  %656 = vmatpush2.bf16.msra.mxu0 0
  %657 = vmatprep.subr.bf16.mxu0 0
  %658 = vmatpush2.bf16.msra.mxu0 0
  %659 = vmatprep.subr.bf16.mxu0 0
  %660 = vmatpush2.bf16.msra.mxu0 0
  %661 = vmatprep.subr.bf16.mxu0 0
  %662 = vmatpush2.bf16.msra.mxu0 0
  %663 = vmatprep.subr.bf16.mxu0 0
  %664 = vmatpush2.bf16.msra.mxu0 0
  %665 = vmatprep.subr.bf16.mxu0 0
  %666 = vmatpush2.bf16.msra.mxu0 0
  %667 = vmatprep.subr.bf16.mxu0 0
  %668 = vmatpush2.bf16.msra.mxu0 0
  %669 = vmatprep.mubr.bf16.mxu0 0
  %670 = vmatmul.mubr.bf16.gmra.mxu0 %v635
  %v671 = vpop.f32.mrf.mxu0
  %v672 = vadd.f32 0.0, %v671
  %v673 = vpop.f32.mrf.mxu0
  %v674 = vpop.f32.mrf.mxu0
  %v675 = vadd.f32 0.0, %v674
  %v676 = vpop.f32.mrf.mxu0
  %677 = vdwg.mxu0
  %v678 = vadd.f32 %v162, %v672
  %v679 = vadd.f32 %v165, %v675
  %v680 = vxor.u32 %v678, 2147483648
  %v681 = vxor.u32 %v679, 2147483648
  %v682 = vmul.f32 %v680, 1.442695
  %v683 = vpow.pop %v682
  %v684 = vmul.f32 %v681, 1.442695
  %v685 = vpow.pop %v684
  %v686 = vadd.f32 %v683, 1.0
  %v687 = vadd.f32 %v685, 1.0
  %v688 = vrcp.pop %v686
  %v689 = vmul.f32 1.0, %v688
  %v690 = vrcp.pop %v687
  %v691 = vmul.f32 1.0, %v690
  %v692 = vtanh.pop %v678
  %v693 = vtanh.pop %v679
  %v694 = vmul.f32 %v689, %v605
  %v695 = vmul.f32 %v691, %v606
  %698 = vrot.lane.b32.xlu0 %v692, 96
  %v699 = vpop.permute.xlu0 %698
  %700 = vrot.lane.b32.xlu0 %v693, 96
  %v701 = vpop.permute.xlu0 %700
  %v704 = vmul.f32 %v689, %v699
  %v705 = vmul.f32 %v691, %v701
  %708 = vrot.lane.b32.xlu0 %v704, 16
  %v709 = vpop.permute.xlu0 %708
  %710 = vrot.lane.b32.xlu0 %v705, 16
  %v711 = vpop.permute.xlu0 %710
  %v714 = vadd.f32 %v694, %v709
  %v715 = vadd.f32 %v695, %v711
  %v716 = vtanh.pop %v714
  %v717 = vtanh.pop %v715
  %720 = vrot.lane.b32.xlu0 %v716, 32
  %v721 = vpop.permute.xlu0 %720
  %722 = vrot.lane.b32.xlu0 %v717, 32
  %v723 = vpop.permute.xlu0 %722
  %v726 = vmul.f32 %v689, %v721
  %v727 = vmul.f32 %v691, %v723
  %730 = vrot.lane.b32.xlu0 %v726, 80
  %v731 = vpop.permute.xlu0 %730
  %732 = vrot.lane.b32.xlu0 %v727, 80
  %v733 = vpop.permute.xlu0 %732
  %s736 = scalar_lea.vmem [#allocation2], 64
  %737 = vst.msk [vmem:[%s736] sm:$0xff] %vm198, %v731
  %738 = vst.msk [vmem:[%s736 + $0x8] sm:$0xff] %vm198, %v733
  %v739 = vpack.c.bf16 %v727, %v726
  %741 = vrot.lane.b32.xlu0 %v739, 80
  %v742 = vpop.permute.xlu0 %741
  %v744 = vsel %vm198, %v742, 0
  %746 = vmatprep.subr.bf16.mxu0 0
  %747 = vmatpush1.bf16.msra.mxu0 0
  %748 = vmatprep.subr.bf16.mxu0 0
  %749 = vmatpush1.bf16.msra.mxu0 0
  %750 = vmatprep.subr.bf16.mxu0 0
  %751 = vmatpush1.bf16.msra.mxu0 0
  %752 = vmatprep.subr.bf16.mxu0 0
  %753 = vmatpush1.bf16.msra.mxu0 0
  %754 = vmatprep.subr.bf16.mxu0 0
  %755 = vmatpush1.bf16.msra.mxu0 0
  %756 = vmatprep.subr.bf16.mxu0 0
  %757 = vmatpush1.bf16.msra.mxu0 0
  %758 = vmatprep.subr.bf16.mxu0 0
  %759 = vmatpush1.bf16.msra.mxu0 0
  %760 = vmatprep.subr.bf16.mxu0 0
  %761 = vmatpush1.bf16.msra.mxu0 %v196
  %762 = vmatprep.subr.bf16.mxu0 0
  %763 = vmatpush2.bf16.msra.mxu0 0
  %764 = vmatprep.subr.bf16.mxu0 0
  %765 = vmatpush2.bf16.msra.mxu0 0
  %766 = vmatprep.subr.bf16.mxu0 0
  %767 = vmatpush2.bf16.msra.mxu0 0
  %768 = vmatprep.subr.bf16.mxu0 0
  %769 = vmatpush2.bf16.msra.mxu0 0
  %770 = vmatprep.subr.bf16.mxu0 0
  %771 = vmatpush2.bf16.msra.mxu0 0
  %772 = vmatprep.subr.bf16.mxu0 0
  %773 = vmatpush2.bf16.msra.mxu0 0
  %774 = vmatprep.subr.bf16.mxu0 0
  %775 = vmatpush2.bf16.msra.mxu0 0
  %776 = vmatprep.subr.bf16.mxu0 0
  %777 = vmatpush2.bf16.msra.mxu0 0
  %778 = vmatprep.mubr.bf16.mxu0 0
  %779 = vmatmul.mubr.bf16.gmra.mxu0 %v744
  %v780 = vpop.f32.mrf.mxu0
  %v781 = vadd.f32 0.0, %v780
  %v782 = vpop.f32.mrf.mxu0
  %v783 = vpop.f32.mrf.mxu0
  %v784 = vadd.f32 0.0, %v783
  %v785 = vpop.f32.mrf.mxu0
  %786 = vdwg.mxu0
  %v787 = vadd.f32 %v170, %v781
  %v788 = vadd.f32 %v173, %v784
  %v789 = vxor.u32 %v787, 2147483648
  %v790 = vxor.u32 %v788, 2147483648
  %v791 = vmul.f32 %v789, 1.442695
  %v792 = vpow.pop %v791
  %v793 = vmul.f32 %v790, 1.442695
  %v794 = vpow.pop %v793
  %v795 = vadd.f32 %v792, 1.0
  %v796 = vadd.f32 %v794, 1.0
  %v797 = vrcp.pop %v795
  %v798 = vmul.f32 1.0, %v797
  %v799 = vrcp.pop %v796
  %v800 = vmul.f32 1.0, %v799
  %v801 = vtanh.pop %v787
  %v802 = vtanh.pop %v788
  %v803 = vmul.f32 %v798, %v714
  %v804 = vmul.f32 %v800, %v715
  %807 = vrot.lane.b32.xlu0 %v801, 96
  %v808 = vpop.permute.xlu0 %807
  %809 = vrot.lane.b32.xlu0 %v802, 96
  %v810 = vpop.permute.xlu0 %809
  %v813 = vmul.f32 %v798, %v808
  %v814 = vmul.f32 %v800, %v810
  %817 = vrot.lane.b32.xlu0 %v813, 16
  %v818 = vpop.permute.xlu0 %817
  %819 = vrot.lane.b32.xlu0 %v814, 16
  %v820 = vpop.permute.xlu0 %819
  %v823 = vadd.f32 %v803, %v818
  %v824 = vadd.f32 %v804, %v820
  %v825 = vtanh.pop %v823
  %v826 = vtanh.pop %v824
  %829 = vrot.lane.b32.xlu0 %v825, 32
  %v830 = vpop.permute.xlu0 %829
  %831 = vrot.lane.b32.xlu0 %v826, 32
  %v832 = vpop.permute.xlu0 %831
  %v835 = vmul.f32 %v798, %v830
  %v836 = vmul.f32 %v800, %v832
  %839 = vrot.lane.b32.xlu0 %v835, 80
  %v840 = vpop.permute.xlu0 %839
  %841 = vrot.lane.b32.xlu0 %v836, 80
  %v842 = vpop.permute.xlu0 %841
  %s845 = scalar_lea.vmem [#allocation2], 80
  %846 = vst.msk [vmem:[%s845] sm:$0xff] %vm198, %v840
  %847 = vst.msk [vmem:[%s845 + $0x8] sm:$0xff] %vm198, %v842
  %v848 = vpack.c.bf16 %v836, %v835
  %850 = vrot.lane.b32.xlu0 %v848, 80
  %v851 = vpop.permute.xlu0 %850
  %v853 = vsel %vm198, %v851, 0
  %855 = vmatprep.subr.bf16.mxu0 0
  %856 = vmatpush1.bf16.msra.mxu0 0
  %857 = vmatprep.subr.bf16.mxu0 0
  %858 = vmatpush1.bf16.msra.mxu0 0
  %859 = vmatprep.subr.bf16.mxu0 0
  %860 = vmatpush1.bf16.msra.mxu0 0
  %861 = vmatprep.subr.bf16.mxu0 0
  %862 = vmatpush1.bf16.msra.mxu0 0
  %863 = vmatprep.subr.bf16.mxu0 0
  %864 = vmatpush1.bf16.msra.mxu0 0
  %865 = vmatprep.subr.bf16.mxu0 0
  %866 = vmatpush1.bf16.msra.mxu0 0
  %867 = vmatprep.subr.bf16.mxu0 0
  %868 = vmatpush1.bf16.msra.mxu0 0
  %869 = vmatprep.subr.bf16.mxu0 0
  %870 = vmatpush1.bf16.msra.mxu0 %v196
  %871 = vmatprep.subr.bf16.mxu0 0
  %872 = vmatpush2.bf16.msra.mxu0 0
  %873 = vmatprep.subr.bf16.mxu0 0
  %874 = vmatpush2.bf16.msra.mxu0 0
  %875 = vmatprep.subr.bf16.mxu0 0
  %876 = vmatpush2.bf16.msra.mxu0 0
  %877 = vmatprep.subr.bf16.mxu0 0
  %878 = vmatpush2.bf16.msra.mxu0 0
  %879 = vmatprep.subr.bf16.mxu0 0
  %880 = vmatpush2.bf16.msra.mxu0 0
  %881 = vmatprep.subr.bf16.mxu0 0
  %882 = vmatpush2.bf16.msra.mxu0 0
  %883 = vmatprep.subr.bf16.mxu0 0
  %884 = vmatpush2.bf16.msra.mxu0 0
  %885 = vmatprep.subr.bf16.mxu0 0
  %886 = vmatpush2.bf16.msra.mxu0 0
  %887 = vmatprep.mubr.bf16.mxu0 0
  %888 = vmatmul.mubr.bf16.gmra.mxu0 %v853
  %v889 = vpop.f32.mrf.mxu0
  %v890 = vadd.f32 0.0, %v889
  %v891 = vpop.f32.mrf.mxu0
  %v892 = vpop.f32.mrf.mxu0
  %v893 = vadd.f32 0.0, %v892
  %v894 = vpop.f32.mrf.mxu0
  %895 = vdwg.mxu0
  %v896 = vadd.f32 %v178, %v890
  %v897 = vadd.f32 %v181, %v893
  %v898 = vxor.u32 %v896, 2147483648
  %v899 = vxor.u32 %v897, 2147483648
  %v900 = vmul.f32 %v898, 1.442695
  %v901 = vpow.pop %v900
  %v902 = vmul.f32 %v899, 1.442695
  %v903 = vpow.pop %v902
  %v904 = vadd.f32 %v901, 1.0
  %v905 = vadd.f32 %v903, 1.0
  %v906 = vrcp.pop %v904
  %v907 = vmul.f32 1.0, %v906
  %v908 = vrcp.pop %v905
  %v909 = vmul.f32 1.0, %v908
  %v910 = vtanh.pop %v896
  %v911 = vtanh.pop %v897
  %v912 = vmul.f32 %v907, %v823
  %v913 = vmul.f32 %v909, %v824
  %916 = vrot.lane.b32.xlu0 %v910, 96
  %v917 = vpop.permute.xlu0 %916
  %918 = vrot.lane.b32.xlu0 %v911, 96
  %v919 = vpop.permute.xlu0 %918
  %v922 = vmul.f32 %v907, %v917
  %v923 = vmul.f32 %v909, %v919
  %926 = vrot.lane.b32.xlu0 %v922, 16
  %v927 = vpop.permute.xlu0 %926
  %928 = vrot.lane.b32.xlu0 %v923, 16
  %v929 = vpop.permute.xlu0 %928
  %v932 = vadd.f32 %v912, %v927
  %v933 = vadd.f32 %v913, %v929
  %v934 = vtanh.pop %v932
  %v935 = vtanh.pop %v933
  %938 = vrot.lane.b32.xlu0 %v934, 32
  %v939 = vpop.permute.xlu0 %938
  %940 = vrot.lane.b32.xlu0 %v935, 32
  %v941 = vpop.permute.xlu0 %940
  %v944 = vmul.f32 %v907, %v939
  %v945 = vmul.f32 %v909, %v941
  %948 = vrot.lane.b32.xlu0 %v944, 80
  %v949 = vpop.permute.xlu0 %948
  %950 = vrot.lane.b32.xlu0 %v945, 80
  %v951 = vpop.permute.xlu0 %950
  %s954 = scalar_lea.vmem [#allocation2], 96
  %955 = vst.msk [vmem:[%s954] sm:$0xff] %vm198, %v949
  %956 = vst.msk [vmem:[%s954 + $0x8] sm:$0xff] %vm198, %v951
  %v957 = vpack.c.bf16 %v945, %v944
  %959 = vrot.lane.b32.xlu0 %v957, 80
  %v960 = vpop.permute.xlu0 %959
  %v962 = vsel %vm198, %v960, 0
  %964 = vmatprep.subr.bf16.mxu0 0
  %965 = vmatpush1.bf16.msra.mxu0 0
  %966 = vmatprep.subr.bf16.mxu0 0
  %967 = vmatpush1.bf16.msra.mxu0 0
  %968 = vmatprep.subr.bf16.mxu0 0
  %969 = vmatpush1.bf16.msra.mxu0 0
  %970 = vmatprep.subr.bf16.mxu0 0
  %971 = vmatpush1.bf16.msra.mxu0 0
  %972 = vmatprep.subr.bf16.mxu0 0
  %973 = vmatpush1.bf16.msra.mxu0 0
  %974 = vmatprep.subr.bf16.mxu0 0
  %975 = vmatpush1.bf16.msra.mxu0 0
  %976 = vmatprep.subr.bf16.mxu0 0
  %977 = vmatpush1.bf16.msra.mxu0 0
  %978 = vmatprep.subr.bf16.mxu0 0
  %979 = vmatpush1.bf16.msra.mxu0 %v196
  %980 = vmatprep.subr.bf16.mxu0 0
  %981 = vmatpush2.bf16.msra.mxu0 0
  %982 = vmatprep.subr.bf16.mxu0 0
  %983 = vmatpush2.bf16.msra.mxu0 0
  %984 = vmatprep.subr.bf16.mxu0 0
  %985 = vmatpush2.bf16.msra.mxu0 0
  %986 = vmatprep.subr.bf16.mxu0 0
  %987 = vmatpush2.bf16.msra.mxu0 0
  %988 = vmatprep.subr.bf16.mxu0 0
  %989 = vmatpush2.bf16.msra.mxu0 0
  %990 = vmatprep.subr.bf16.mxu0 0
  %991 = vmatpush2.bf16.msra.mxu0 0
  %992 = vmatprep.subr.bf16.mxu0 0
  %993 = vmatpush2.bf16.msra.mxu0 0
  %994 = vmatprep.subr.bf16.mxu0 0
  %995 = vmatpush2.bf16.msra.mxu0 0
  %996 = vmatprep.mubr.bf16.mxu0 0
  %997 = vmatmul.mubr.bf16.gmra.mxu0 %v962
  %v998 = vpop.f32.mrf.mxu0
  %v999 = vadd.f32 0.0, %v998
  %v1000 = vpop.f32.mrf.mxu0
  %v1001 = vpop.f32.mrf.mxu0
  %v1002 = vadd.f32 0.0, %v1001
  %v1003 = vpop.f32.mrf.mxu0
  %1004 = vdwg.mxu0
  %v1005 = vadd.f32 %v186, %v999
  %v1006 = vadd.f32 %v189, %v1002
  %v1007 = vxor.u32 %v1005, 2147483648
  %v1008 = vxor.u32 %v1006, 2147483648
  %v1009 = vmul.f32 %v1007, 1.442695
  %v1010 = vpow.pop %v1009
  %v1011 = vmul.f32 %v1008, 1.442695
  %v1012 = vpow.pop %v1011
  %v1013 = vadd.f32 %v1010, 1.0
  %v1014 = vadd.f32 %v1012, 1.0
  %v1015 = vrcp.pop %v1013
  %v1016 = vmul.f32 1.0, %v1015
  %v1017 = vrcp.pop %v1014
  %v1018 = vmul.f32 1.0, %v1017
  %v1019 = vtanh.pop %v1005
  %v1020 = vtanh.pop %v1006
  %v1021 = vmul.f32 %v1016, %v932
  %v1022 = vmul.f32 %v1018, %v933
  %1025 = vrot.lane.b32.xlu0 %v1019, 96
  %v1026 = vpop.permute.xlu0 %1025
  %1027 = vrot.lane.b32.xlu0 %v1020, 96
  %v1028 = vpop.permute.xlu0 %1027
  %v1031 = vmul.f32 %v1016, %v1026
  %v1032 = vmul.f32 %v1018, %v1028
  %1035 = vrot.lane.b32.xlu0 %v1031, 16
  %v1036 = vpop.permute.xlu0 %1035
  %1037 = vrot.lane.b32.xlu0 %v1032, 16
  %v1038 = vpop.permute.xlu0 %1037
  %v1041 = vadd.f32 %v1021, %v1036
  %v1042 = vadd.f32 %v1022, %v1038
  %v1043 = vtanh.pop %v1041
  %v1044 = vtanh.pop %v1042
  %1047 = vrot.lane.b32.xlu0 %v1043, 32
  %v1048 = vpop.permute.xlu0 %1047
  %1049 = vrot.lane.b32.xlu0 %v1044, 32
  %v1050 = vpop.permute.xlu0 %1049
  %v1053 = vmul.f32 %v1016, %v1048
  %v1054 = vmul.f32 %v1018, %v1050
  %1057 = vrot.lane.b32.xlu0 %v1053, 80
  %v1058 = vpop.permute.xlu0 %1057
  %1059 = vrot.lane.b32.xlu0 %v1054, 80
  %v1060 = vpop.permute.xlu0 %1059
  %s1063 = scalar_lea.vmem [#allocation2], 112
  %1064 = vst.msk [vmem:[%s1063] sm:$0xff] %vm198, %v1058
  %1065 = vst.msk [vmem:[%s1063 + $0x8] sm:$0xff] %vm198, %v1060
  %v1066 = vld [vmem:[#allocation2] sm:$0xff]
  %v1067 = vld [vmem:[#allocation2 + $0x8] sm:$0xff]
  %v1068 = vld [vmem:[#allocation2 + $0x10] sm:$0xff]
  %v1069 = vld [vmem:[#allocation2 + $0x18] sm:$0xff]
  %v1070 = vld [vmem:[#allocation2 + $0x20] sm:$0xff]
  %v1071 = vld [vmem:[#allocation2 + $0x28] sm:$0xff]
  %v1072 = vld [vmem:[#allocation2 + $0x30] sm:$0xff]
  %v1073 = vld [vmem:[#allocation2 + $0x38] sm:$0xff]
  %v1074 = vld [vmem:[#allocation2 + $0x40] sm:$0xff]
  %v1075 = vld [vmem:[#allocation2 + $0x48] sm:$0xff]
  %v1076 = vld [vmem:[#allocation2 + $0x50] sm:$0xff]
  %v1077 = vld [vmem:[#allocation2 + $0x58] sm:$0xff]
  %v1078 = vld [vmem:[#allocation2 + $0x60] sm:$0xff]
  %v1079 = vld [vmem:[#allocation2 + $0x68] sm:$0xff]
  %v1080 = vld [vmem:[#allocation2 + $0x70] sm:$0xff]
  %v1081 = vld [vmem:[#allocation2 + $0x78] sm:$0xff]
  %v1082 = vmul.f32 %v1066, %v1058
  %v1083 = vmul.f32 %v1067, %v1060
  %v1084 = vmul.f32 %v1068, %v1058
  %v1085 = vmul.f32 %v1069, %v1060
  %v1086 = vmul.f32 %v1070, %v1058
  %v1087 = vmul.f32 %v1071, %v1060
  %v1088 = vmul.f32 %v1072, %v1058
  %v1089 = vmul.f32 %v1073, %v1060
  %v1090 = vmul.f32 %v1074, %v1058
  %v1091 = vmul.f32 %v1075, %v1060
  %v1092 = vmul.f32 %v1076, %v1058
  %v1093 = vmul.f32 %v1077, %v1060
  %v1094 = vmul.f32 %v1078, %v1058
  %v1095 = vmul.f32 %v1079, %v1060
  %v1096 = vmul.f32 %v1080, %v1058
  %v1097 = vmul.f32 %v1081, %v1060
  %v1098 = vsel %vm198, %v1082, 0.0
  %1099 = vadd.xlane.f32.xlu0 %v1098
  %v1100 = vpop.xlane.xlu0 %1099
  %v1101 = vsel %vm198, %v1083, 0.0
  %1102 = vadd.xlane.f32.xlu0 %v1101
  %v1103 = vpop.xlane.xlu0 %1102
  %v1104 = vsel %vm198, %v1084, 0.0
  %1105 = vadd.xlane.f32.xlu0 %v1104
  %v1106 = vpop.xlane.xlu0 %1105
  %v1107 = vsel %vm198, %v1085, 0.0
  %1108 = vadd.xlane.f32.xlu0 %v1107
  %v1109 = vpop.xlane.xlu0 %1108
  %v1110 = vsel %vm198, %v1086, 0.0
  %1111 = vadd.xlane.f32.xlu0 %v1110
  %v1112 = vpop.xlane.xlu0 %1111
  %v1113 = vsel %vm198, %v1087, 0.0
  %1114 = vadd.xlane.f32.xlu0 %v1113
  %v1115 = vpop.xlane.xlu0 %1114
  %v1116 = vsel %vm198, %v1088, 0.0
  %1117 = vadd.xlane.f32.xlu0 %v1116
  %v1118 = vpop.xlane.xlu0 %1117
  %v1119 = vsel %vm198, %v1089, 0.0
  %1120 = vadd.xlane.f32.xlu0 %v1119
  %v1121 = vpop.xlane.xlu0 %1120
  %v1122 = vsel %vm198, %v1090, 0.0
  %1123 = vadd.xlane.f32.xlu0 %v1122
  %v1124 = vpop.xlane.xlu0 %1123
  %v1125 = vsel %vm198, %v1091, 0.0
  %1126 = vadd.xlane.f32.xlu0 %v1125
  %v1127 = vpop.xlane.xlu0 %1126
  %v1128 = vsel %vm198, %v1092, 0.0
  %1129 = vadd.xlane.f32.xlu0 %v1128
  %v1130 = vpop.xlane.xlu0 %1129
  %v1131 = vsel %vm198, %v1093, 0.0
  %1132 = vadd.xlane.f32.xlu0 %v1131
  %v1133 = vpop.xlane.xlu0 %1132
  %v1134 = vsel %vm198, %v1094, 0.0
  %1135 = vadd.xlane.f32.xlu0 %v1134
  %v1136 = vpop.xlane.xlu0 %1135
  %v1137 = vsel %vm198, %v1095, 0.0
  %1138 = vadd.xlane.f32.xlu0 %v1137
  %v1139 = vpop.xlane.xlu0 %1138
  %v1140 = vsel %vm198, %v1096, 0.0
  %1141 = vadd.xlane.f32.xlu0 %v1140
  %v1142 = vpop.xlane.xlu0 %1141
  %v1143 = vsel %vm198, %v1097, 0.0
  %1144 = vadd.xlane.f32.xlu0 %v1143
  %v1145 = vpop.xlane.xlu0 %1144
  %v1146 = vmax.f32 %v1100, %v1112
  %v1147 = vmax.f32 %v1106, %v1118
  %v1148 = vmax.f32 %v1146, %v1124
  %v1149 = vmax.f32 %v1147, %v1130
  %v1150 = vmax.f32 %v1148, %v1136
  %v1151 = vmax.f32 %v1149, %v1142
  %v1152 = vmax.f32 %v1150, %v1151
  %v1153 = vmax.f32 %v1103, %v1115
  %v1154 = vmax.f32 %v1109, %v1121
  %v1155 = vmax.f32 %v1153, %v1127
  %v1156 = vmax.f32 %v1154, %v1133
  %v1157 = vmax.f32 %v1155, %v1139
  %v1158 = vmax.f32 %v1156, %v1145
  %v1159 = vmax.f32 %v1157, %v1158
  %v1160 = vsub.f32 %v1100, %v1152
  %v1161 = vsub.f32 %v1103, %v1159
  %v1162 = vsub.f32 %v1106, %v1152
  %v1163 = vsub.f32 %v1109, %v1159
  %v1164 = vsub.f32 %v1112, %v1152
  %v1165 = vsub.f32 %v1115, %v1159
  %v1166 = vsub.f32 %v1118, %v1152
  %v1167 = vsub.f32 %v1121, %v1159
  %v1168 = vsub.f32 %v1124, %v1152
  %v1169 = vsub.f32 %v1127, %v1159
  %v1170 = vsub.f32 %v1130, %v1152
  %v1171 = vsub.f32 %v1133, %v1159
  %v1172 = vsub.f32 %v1136, %v1152
  %v1173 = vsub.f32 %v1139, %v1159
  %v1174 = vsub.f32 %v1142, %v1152
  %v1175 = vsub.f32 %v1145, %v1159
  %v1176 = vmul.f32 %v1160, 1.442695
  %v1177 = vpow.pop %v1176
  %v1178 = vmul.f32 %v1161, 1.442695
  %v1179 = vpow.pop %v1178
  %v1180 = vmul.f32 %v1162, 1.442695
  %v1181 = vpow.pop %v1180
  %v1182 = vmul.f32 %v1163, 1.442695
  %v1183 = vpow.pop %v1182
  %v1184 = vmul.f32 %v1164, 1.442695
  %v1185 = vpow.pop %v1184
  %v1186 = vmul.f32 %v1165, 1.442695
  %v1187 = vpow.pop %v1186
  %v1188 = vmul.f32 %v1166, 1.442695
  %v1189 = vpow.pop %v1188
  %v1190 = vmul.f32 %v1167, 1.442695
  %v1191 = vpow.pop %v1190
  %v1192 = vmul.f32 %v1168, 1.442695
  %v1193 = vpow.pop %v1192
  %v1194 = vmul.f32 %v1169, 1.442695
  %v1195 = vpow.pop %v1194
  %v1196 = vmul.f32 %v1170, 1.442695
  %v1197 = vpow.pop %v1196
  %v1198 = vmul.f32 %v1171, 1.442695
  %v1199 = vpow.pop %v1198
  %v1200 = vmul.f32 %v1172, 1.442695
  %v1201 = vpow.pop %v1200
  %v1202 = vmul.f32 %v1173, 1.442695
  %v1203 = vpow.pop %v1202
  %v1204 = vmul.f32 %v1174, 1.442695
  %v1205 = vpow.pop %v1204
  %v1206 = vmul.f32 %v1175, 1.442695
  %v1207 = vpow.pop %v1206
  %v1208 = vadd.f32 %v1177, %v1181
  %v1209 = vadd.f32 %v1208, %v1185
  %v1210 = vadd.f32 %v1209, %v1189
  %v1211 = vadd.f32 %v1210, %v1193
  %v1212 = vadd.f32 %v1211, %v1197
  %v1213 = vadd.f32 %v1212, %v1201
  %v1214 = vadd.f32 %v1213, %v1205
  %v1215 = vadd.f32 %v1179, %v1183
  %v1216 = vadd.f32 %v1215, %v1187
  %v1217 = vadd.f32 %v1216, %v1191
  %v1218 = vadd.f32 %v1217, %v1195
  %v1219 = vadd.f32 %v1218, %v1199
  %v1220 = vadd.f32 %v1219, %v1203
  %v1221 = vadd.f32 %v1220, %v1207
  %v1222 = vrcp.pop %v1214
  %v1223 = vmul.f32 %v1177, %v1222
  %v1224 = vrcp.pop %v1221
  %v1225 = vmul.f32 %v1179, %v1224
  %v1226 = vmul.f32 %v1181, %v1222
  %v1227 = vmul.f32 %v1183, %v1224
  %v1228 = vmul.f32 %v1185, %v1222
  %v1229 = vmul.f32 %v1187, %v1224
  %v1230 = vmul.f32 %v1189, %v1222
  %v1231 = vmul.f32 %v1191, %v1224
  %v1232 = vmul.f32 %v1193, %v1222
  %v1233 = vmul.f32 %v1195, %v1224
  %v1234 = vmul.f32 %v1197, %v1222
  %v1235 = vmul.f32 %v1199, %v1224
  %v1236 = vmul.f32 %v1201, %v1222
  %v1237 = vmul.f32 %v1203, %v1224
  %v1238 = vmul.f32 %v1205, %v1222
  %v1239 = vmul.f32 %v1207, %v1224
  %vm1240 = vcmask 7168
  %1241 = vst.msk [vmem:[%s9] sm:$0xff] %vm1240, %v1223
  %1242 = vst.msk [vmem:[%s9 + $0x8] sm:$0xff] %vm1240, %v1225
  %1243 = vst.msk [vmem:[%s9 + $0x10] sm:$0xff] %vm1240, %v1226
  %1244 = vst.msk [vmem:[%s9 + $0x18] sm:$0xff] %vm1240, %v1227
  %1245 = vst.msk [vmem:[%s9 + $0x20] sm:$0xff] %vm1240, %v1228
  %1246 = vst.msk [vmem:[%s9 + $0x28] sm:$0xff] %vm1240, %v1229
  %1247 = vst.msk [vmem:[%s9 + $0x30] sm:$0xff] %vm1240, %v1230
  %1248 = vst.msk [vmem:[%s9 + $0x38] sm:$0xff] %vm1240, %v1231
  %1249 = vst.msk [vmem:[%s9 + $0x40] sm:$0xff] %vm1240, %v1232
  %1250 = vst.msk [vmem:[%s9 + $0x48] sm:$0xff] %vm1240, %v1233
  %1251 = vst.msk [vmem:[%s9 + $0x50] sm:$0xff] %vm1240, %v1234
  %1252 = vst.msk [vmem:[%s9 + $0x58] sm:$0xff] %vm1240, %v1235
  %1253 = vst.msk [vmem:[%s9 + $0x60] sm:$0xff] %vm1240, %v1236
  %1254 = vst.msk [vmem:[%s9 + $0x68] sm:$0xff] %vm1240, %v1237
  %1255 = vst.msk [vmem:[%s9 + $0x70] sm:$0xff] %vm1240, %v1238
  %1256 = vst.msk [vmem:[%s9 + $0x78] sm:$0xff] %vm1240, %v1239
  %v1257 = vmul.f32 %v1066, %v1223
  %v1258 = vmul.f32 %v1067, %v1225
  %v1259 = vmul.f32 %v1068, %v1226
  %v1260 = vmul.f32 %v1069, %v1227
  %v1261 = vmul.f32 %v1070, %v1228
  %v1262 = vmul.f32 %v1071, %v1229
  %v1263 = vmul.f32 %v1072, %v1230
  %v1264 = vmul.f32 %v1073, %v1231
  %v1265 = vmul.f32 %v1074, %v1232
  %v1266 = vmul.f32 %v1075, %v1233
  %v1267 = vmul.f32 %v1076, %v1234
  %v1268 = vmul.f32 %v1077, %v1235
  %v1269 = vmul.f32 %v1078, %v1236
  %v1270 = vmul.f32 %v1079, %v1237
  %v1271 = vmul.f32 %v1080, %v1238
  %v1272 = vmul.f32 %v1081, %v1239
  %v1273 = vsel %vm198, %v1257, 0.0
  %v1274 = vsel %vm198, %v1259, 0.0
  %v1275 = vadd.f32 %v1273, %v1274
  %v1276 = vsel %vm198, %v1261, 0.0
  %v1277 = vadd.f32 %v1275, %v1276
  %v1278 = vsel %vm198, %v1263, 0.0
  %v1279 = vadd.f32 %v1277, %v1278
  %v1280 = vsel %vm198, %v1265, 0.0
  %v1281 = vadd.f32 %v1279, %v1280
  %v1282 = vsel %vm198, %v1267, 0.0
  %v1283 = vadd.f32 %v1281, %v1282
  %v1284 = vsel %vm198, %v1269, 0.0
  %v1285 = vadd.f32 %v1283, %v1284
  %v1286 = vsel %vm198, %v1271, 0.0
  %v1287 = vadd.f32 %v1285, %v1286
  %v1288 = vsel %vm198, %v1258, 0.0
  %v1289 = vsel %vm198, %v1260, 0.0
  %v1290 = vadd.f32 %v1288, %v1289
  %v1291 = vsel %vm198, %v1262, 0.0
  %v1292 = vadd.f32 %v1290, %v1291
  %v1293 = vsel %vm198, %v1264, 0.0
  %v1294 = vadd.f32 %v1292, %v1293
  %v1295 = vsel %vm198, %v1266, 0.0
  %v1296 = vadd.f32 %v1294, %v1295
  %v1297 = vsel %vm198, %v1268, 0.0
  %v1298 = vadd.f32 %v1296, %v1297
  %v1299 = vsel %vm198, %v1270, 0.0
  %v1300 = vadd.f32 %v1298, %v1299
  %v1301 = vsel %vm198, %v1272, 0.0
  %v1302 = vadd.f32 %v1300, %v1301
  %v1303 = vld [vmem:[%s4] sm:$0x1]
  %v1304 = vld [vmem:[%s5] sm:$0x1]
  %v1305 = vsel %vm198, %v1287, 0.0
  %1306 = vadd.xlane.f32.xlu0 %v1305
  %v1307 = vpop.xlane.xlu0 %1306
  %v1308 = vsel %vm198, %v1302, 0.0
  %1309 = vadd.xlane.f32.xlu0 %v1308
  %v1310 = vpop.xlane.xlu0 %1309
  %v1311 = vrcp.pop 16.0
  %v1312 = vmul.f32 %v1307, %v1311
  %v1313 = vmul.f32 %v1310, %v1311
  %v1314 = vsub.f32 %v1287, %v1312
  %v1315 = vsub.f32 %v1302, %v1313
  %v1316 = vmul.f32 %v1314, %v1314
  %v1317 = vmul.f32 %v1315, %v1315
  %v1318 = vsel %vm198, %v1316, 0.0
  %1319 = vadd.xlane.f32.xlu0 %v1318
  %v1320 = vpop.xlane.xlu0 %1319
  %v1321 = vsel %vm198, %v1317, 0.0
  %1322 = vadd.xlane.f32.xlu0 %v1321
  %v1323 = vpop.xlane.xlu0 %1322
  %v1324 = vmul.f32 %v1320, %v1311
  %v1325 = vmul.f32 %v1323, %v1311
  %v1326 = vadd.f32 %v1324, 1e-05
  %v1327 = vadd.f32 %v1325, 1e-05
  %v1328 = vrsqrt.pop %v1326
  %v1329 = vrsqrt.pop %v1327
  %v1330 = vmul.f32 %v1314, %v1328
  %v1331 = vmul.f32 %v1315, %v1329
  %v1333 = vlaneseq
  %v1334 = vshrl.u32 %v1333, 7
  %v1335 = vsub.s32 0, %v1334
  %v1336 = vrot.slane %v1303, %v1335
  %v1338 = vmul.f32 %v1330, %v1336
  %v1339 = vmul.f32 %v1331, %v1336
  %v1341 = vlaneseq
  %v1342 = vshrl.u32 %v1341, 7
  %v1343 = vsub.s32 0, %v1342
  %v1344 = vrot.slane %v1304, %v1343
  %v1346 = vadd.f32 %v1338, %v1344
  %v1347 = vadd.f32 %v1339, %v1344
  %v1348 = vld [vmem:[%s6] sm:$0x1]
  %v1349 = vld [vmem:[%s7] sm:$0x1]
  %v1350 = vsel %vm198, %v1346, 0.0
  %1351 = vadd.xlane.f32.xlu0 %v1350
  %v1352 = vpop.xlane.xlu0 %1351
  %v1353 = vsel %vm198, %v1347, 0.0
  %1354 = vadd.xlane.f32.xlu0 %v1353
  %v1355 = vpop.xlane.xlu0 %1354
  %v1356 = vmul.f32 %v1352, %v1311
  %v1357 = vmul.f32 %v1355, %v1311
  %v1358 = vsub.f32 %v1346, %v1356
  %v1359 = vsub.f32 %v1347, %v1357
  %v1360 = vmul.f32 %v1358, %v1358
  %v1361 = vmul.f32 %v1359, %v1359
  %v1362 = vsel %vm198, %v1360, 0.0
  %1363 = vadd.xlane.f32.xlu0 %v1362
  %v1364 = vpop.xlane.xlu0 %1363
  %v1365 = vsel %vm198, %v1361, 0.0
  %1366 = vadd.xlane.f32.xlu0 %v1365
  %v1367 = vpop.xlane.xlu0 %1366
  %v1368 = vmul.f32 %v1364, %v1311
  %v1369 = vmul.f32 %v1367, %v1311
  %v1370 = vadd.f32 %v1368, 1e-05
  %v1371 = vadd.f32 %v1369, 1e-05
  %v1372 = vrsqrt.pop %v1370
  %v1373 = vrsqrt.pop %v1371
  %v1374 = vmul.f32 %v1358, %v1372
  %v1375 = vmul.f32 %v1359, %v1373
  %v1377 = vlaneseq
  %v1378 = vshrl.u32 %v1377, 7
  %v1379 = vsub.s32 0, %v1378
  %v1380 = vrot.slane %v1348, %v1379
  %v1382 = vmul.f32 %v1374, %v1380
  %v1383 = vmul.f32 %v1375, %v1380
  %v1385 = vlaneseq
  %v1386 = vshrl.u32 %v1385, 7
  %v1387 = vsub.s32 0, %v1386
  %v1388 = vrot.slane %v1349, %v1387
  %v1390 = vadd.f32 %v1382, %v1388
  %v1391 = vadd.f32 %v1383, %v1388
  %1392 = vst.msk [vmem:[%s8] sm:$0xff] %vm198, %v1390
  %1393 = vst.msk [vmem:[%s8 + $0x8] sm:$0xff] %vm198, %v1391
  // Predicated region
  $region34: #{meta_forward.5} parent=0 // pred_check
    _
  $region35: #{meta_forward.5} parent=0 // pred_check_branch
    %1395 = sbr.rel (0) target = $region37
  $region36: #{meta_forward.5} parent=0 // pred_region
    _
  $region37: #{meta_forward.5} parent=0 // pred_fallthru
    _
  // Predicated region
  $region38: #{meta_forward.5} parent=0 // pred_check
    _
  $region39: #{meta_forward.5} parent=0 // pred_check_branch
    %1397 = sbr.rel (0) target = $region41
  $region40: #{meta_forward.5} parent=0 // pred_region
    _
  $region41: #{meta_forward.5} parent=0 // pred_fallthru
    _
  // Predicated region
  $region42: #{meta_forward.5} parent=0 // pred_check
    _
  $region43: #{meta_forward.5} parent=0 // pred_check_branch
    %1399 = sbr.rel (0) target = $region45
  $region44: #{meta_forward.5} parent=0 // pred_region
    _
  $region45: #{meta_forward.5} parent=0 // pred_fallthru
    _
  // Predicated region
  $region46: #{meta_forward.5} parent=0 // pred_check
    _
  $region47: #{meta_forward.5} parent=0 // pred_check_branch
    %1401 = sbr.rel (0) target = $region49
  $region48: #{meta_forward.5} parent=0 // pred_region
    _
  $region49: #{meta_forward.5} parent=0 // pred_fallthru
    _

// kernel: meta_forward.7
$region0: #{meta_forward.7}
  #allocation0 [shape = 'u32[]', space=smem, size = 0x4, offset = 0x4, fixed_abs, tag = 'smem constant byte address 0x4 - core index']
  #allocation1 [shape = 'u32[144,128]{1,0:T(1,128)}', space=vmem, size = 0x12000, scoped, tag = 'internal scratch']
  %s0 = inlined_call_operand.vmem [shape: bf16[2,1,16], index: 0, kind: input, shape index: {}]
  %s1 = inlined_call_operand.vmem [shape: bf16[2,2,16], index: 1, kind: input, shape index: {}]
  %s2 = inlined_call_operand.vmem [shape: f32[2,1,2], index: 2, kind: output, shape index: {0}]
  %s3 = inlined_call_operand.vmem [shape: s32[2,1,1], index: 3, kind: output, shape index: {1}]
  %4 = xla_tuple %s2, %s3
  %s5 = sld [smem:[#allocation0]]
  $region49: #{meta_forward.7} parent=0
    _
  %s7 = ssub.s32 1, %s5
  %s8 = scalar_select 0, %s7, %s5
  loop: start=0, step=1, limit=4
  $region2: #{meta_forward.7} parent=0 // loop_pre_header
    _
  $region3: #{meta_forward.7} parent=0 // loop_header
    %s10 = sphi 0, %s14
    %p11 = scmp.ge.s32.totalorder %s10, 4
    %s20 = sphi 0, %s22
    %s23 = sphi 0, %s20
    %s24 = sphi 0, %s23
    %s40 = sphi 0, %s24
    %s46 = sphi 0, %s48
    %s49 = sphi 0, %s46
    %s50 = sphi 0, %s49
    %s66 = sphi 0, %s50
    %s72 = sphi 0, %s74
    %s75 = sphi 0, %s72
    %s76 = sphi 0, %s75
    %s92 = sphi 0, %s76
    %s98 = sphi 0, %s100
    %s101 = sphi 0, %s98
    %s102 = sphi 0, %s101
    %s118 = sphi 0, %s102
  $region4: #{meta_forward.7} parent=0 // loop_header_branch
    %13 = sbr.rel (%p11) target = $region8
  $region5: #{meta_forward.7} parent=0 // loop_body
    %s15 = ssub.s32 %s10, 1
    %s16 = ssub.s32 %s10, 2
    %s17 = sadd.s32 %s10, 1
    %s18 = ssub.s32 %s10, %s17
    %p19 = scmp.eq.s32.totalorder %s18, 0
    %s21 = sadd.s32 %s20, 1
    %s22 = scalar_select %p19, %s20, %s21
    %p25 = pneg %p19
    %p26 = scmp.eq.s32.totalorder %s10, 1
    %p27 = por %p25, %p26
    %p28 = scmp.ne.s32.totalorder %s20, %s23
    %p29 = scmp.eq.s32.totalorder %s10, 0
    %p30 = por %p28, %p29
    %p31 = scmp.ne.s32.totalorder %s20, %s23
    %p32 = scmp.eq.s32.totalorder %s15, 1
    %p33 = por %p31, %p32
    %p34 = scmp.ne.s32.totalorder %s23, %s24
    %p35 = scmp.eq.s32.totalorder %s15, 0
    %p36 = por %p34, %p35
    %p37 = scmp.ne.s32.totalorder %s23, %s24
    %p38 = scmp.eq.s32.totalorder %s16, 1
    %p39 = por %p37, %p38
    %p41 = scmp.ne.s32.totalorder %s24, %s40
    %p42 = scmp.eq.s32.totalorder %s16, 0
    %p43 = por %p41, %p42
    %s44 = ssub.s32 %s10, %s17
    %p45 = scmp.eq.s32.totalorder %s44, 0
    %s47 = sadd.s32 %s46, 1
    %s48 = scalar_select %p45, %s46, %s47
    %p51 = pneg %p45
    %p52 = scmp.eq.s32.totalorder %s10, 1
    %p53 = por %p51, %p52
    %p54 = scmp.ne.s32.totalorder %s46, %s49
    %p55 = scmp.eq.s32.totalorder %s10, 0
    %p56 = por %p54, %p55
    %p57 = scmp.ne.s32.totalorder %s46, %s49
    %p58 = scmp.eq.s32.totalorder %s15, 1
    %p59 = por %p57, %p58
    %p60 = scmp.ne.s32.totalorder %s49, %s50
    %p61 = scmp.eq.s32.totalorder %s15, 0
    %p62 = por %p60, %p61
    %p63 = scmp.ne.s32.totalorder %s49, %s50
    %p64 = scmp.eq.s32.totalorder %s16, 1
    %p65 = por %p63, %p64
    %p67 = scmp.ne.s32.totalorder %s50, %s66
    %p68 = scmp.eq.s32.totalorder %s16, 0
    %p69 = por %p67, %p68
    %s70 = ssub.s32 %s10, %s17
    %p71 = scmp.eq.s32.totalorder %s70, 0
    %s73 = sadd.s32 %s72, 1
    %s74 = scalar_select %p71, %s72, %s73
    %p77 = pneg %p71
    %p78 = scmp.eq.s32.totalorder %s10, 1
    %p79 = por %p77, %p78
    %p80 = scmp.ne.s32.totalorder %s72, %s75
    %p81 = scmp.eq.s32.totalorder %s10, 0
    %p82 = por %p80, %p81
    %p83 = scmp.ne.s32.totalorder %s72, %s75
    %p84 = scmp.eq.s32.totalorder %s15, 1
    %p85 = por %p83, %p84
    %p86 = scmp.ne.s32.totalorder %s75, %s76
    %p87 = scmp.eq.s32.totalorder %s15, 0
    %p88 = por %p86, %p87
    %p89 = scmp.ne.s32.totalorder %s75, %s76
    %p90 = scmp.eq.s32.totalorder %s16, 1
    %p91 = por %p89, %p90
    %p93 = scmp.ne.s32.totalorder %s76, %s92
    %p94 = scmp.eq.s32.totalorder %s16, 0
    %p95 = por %p93, %p94
    %s96 = ssub.s32 %s10, %s17
    %p97 = scmp.eq.s32.totalorder %s96, 0
    %s99 = sadd.s32 %s98, 1
    %s100 = scalar_select %p97, %s98, %s99
    %p103 = pneg %p97
    %p104 = scmp.eq.s32.totalorder %s10, 1
    %p105 = por %p103, %p104
    %p106 = scmp.ne.s32.totalorder %s98, %s101
    %p107 = scmp.eq.s32.totalorder %s10, 0
    %p108 = por %p106, %p107
    %p109 = scmp.ne.s32.totalorder %s98, %s101
    %p110 = scmp.eq.s32.totalorder %s15, 1
    %p111 = por %p109, %p110
    %p112 = scmp.ne.s32.totalorder %s101, %s102
    %p113 = scmp.eq.s32.totalorder %s15, 0
    %p114 = por %p112, %p113
    %p115 = scmp.ne.s32.totalorder %s101, %s102
    %p116 = scmp.eq.s32.totalorder %s16, 1
    %p117 = por %p115, %p116
    %p119 = scmp.ne.s32.totalorder %s102, %s118
    %p120 = scmp.eq.s32.totalorder %s16, 0
    %p121 = por %p119, %p120
    %p122 = scmp.le.s32.totalorder 1, %s10
    %p123 = scmp.lt.s32.totalorder %s10, 3
    %p124 = pnand %p122, %p123
    %p125 = pneg %p124
    // Predicated region
    $region9: #{meta_forward.7} parent=5 // pred_check
      _
    $region10: #{meta_forward.7} parent=5 // pred_check_branch
      %127 = sbr.rel (%p124) target = $region12
    $region11: #{meta_forward.7} parent=5 // pred_region
      %s128 = ssub.s32 %s10, 1
    $region12: #{meta_forward.7} parent=5 // pred_fallthru
      _
    %p129 = scmp.lt.s32.totalorder %s10, 2
    // Predicated region
    $region13: #{meta_forward.7} parent=5 // pred_check
      %p130 = pneg %p129
    $region14: #{meta_forward.7} parent=5 // pred_check_branch
      %132 = sbr.rel (%p130) target = $region16
    $region15: #{meta_forward.7} parent=5 // pred_region
      // Predicated region
      $region17: #{meta_forward.7} parent=15 // pred_check
        %p133 = pneg %p30
      $region18: #{meta_forward.7} parent=15 // pred_check_branch
        %135 = sbr.rel (%p133) target = $region20
      $region19: #{meta_forward.7} parent=15 // pred_region
        %p136 = scmp.lt.s32.totalorder %s10, 1
        %s137 = scalar_select %p136, %s10, 1
        %s138 = scalar_lea.vmem %s0, %s137
      $region20: #{meta_forward.7} parent=15 // pred_fallthru
        _
      // Predicated region
      $region21: #{meta_forward.7} parent=15 // pred_check
        %p139 = pneg %p56
      $region22: #{meta_forward.7} parent=15 // pred_check_branch
        %141 = sbr.rel (%p139) target = $region24
      $region23: #{meta_forward.7} parent=15 // pred_region
        %p142 = scmp.lt.s32.totalorder %s10, 1
        %s143 = scalar_select %p142, %s10, 1
        %s144 = scalar_lea.vmem %s1, %s143
      $region24: #{meta_forward.7} parent=15 // pred_fallthru
        _
    $region16: #{meta_forward.7} parent=5 // pred_fallthru
      _
    %p145 = scmp.le.s32.totalorder 1, %s10
    %p146 = scmp.lt.s32.totalorder %s10, 3
    %p147 = pnand %p145, %p146
    %p148 = pneg %p147
    // Predicated region
    $region25: #{meta_forward.7} parent=5 // pred_check
      _
    $region26: #{meta_forward.7} parent=5 // pred_check_branch
      %150 = sbr.rel (%p147) target = $region28
    $region27: #{meta_forward.7} parent=5 // pred_region
      %s151 = ssub.s32 %s10, 1
      %p152 = scmp.lt.s32.totalorder %s15, 1
      %s153 = scalar_select %p152, %s15, 1
      %s154 = scalar_lea.vmem %s0, %s153
      %p155 = pneg %p36
      %p156 = pneg %p33
      %p157 = scmp.lt.s32.totalorder %s15, 1
      %s158 = scalar_select %p157, %s15, 1
      %s159 = scalar_lea.vmem %s1, %s158
      %p160 = pneg %p62
      %p161 = pneg %p59
      %p162 = pneg %p88
      %p163 = pneg %p85
      %p164 = scmp.lt.s32.totalorder %s15, 1
      %s165 = scalar_select %p164, %s15, 1
      %s166 = scalar_lea.vmem %s2, %s165
      %p167 = pneg %p114
      %p168 = pneg %p111
      %p169 = scmp.lt.s32.totalorder %s15, 1
      %s170 = scalar_select %p169, %s15, 1
      %s171 = scalar_lea.vmem %s3, %s170
      %p172 = scmp.lt.s32.totalorder %s15, 1
      %s173 = scalar_select %p172, %s15, 1
      %s174 = scalar_lea.vmem %s0, %s173
      %p175 = scmp.lt.s32.totalorder %s15, 1
      %s176 = scalar_select %p175, %s15, 1
      %s177 = scalar_lea.vmem %s1, %s176
      %p178 = scmp.lt.s32.totalorder %s15, 1
      %s179 = scalar_select %p178, %s15, 1
      %s180 = scalar_lea.vmem %s2, %s179
      %p181 = scmp.lt.s32.totalorder %s15, 1
      %s182 = scalar_select %p181, %s15, 1
      %s183 = scalar_lea.vmem %s3, %s182
      %v185 = vld [vmem:[%s174] sm:$0x1]
      %v186 = vld [vmem:[%s177] sm:$0x1]
      %vm187 = vcmask 130048
      %v189 = vsel %vm187, %v185, 0
      %v192 = vsel %vm187, %v186, 0
      %194 = vmatprep.subr.bf16.mxu0 0
      %195 = vmatpush1.bf16.xpose.msra.mxu0 0
      %196 = vmatprep.subr.bf16.mxu0 0
      %197 = vmatpush1.bf16.xpose.msra.mxu0 0
      %198 = vmatprep.subr.bf16.mxu0 0
      %199 = vmatpush1.bf16.xpose.msra.mxu0 0
      %200 = vmatprep.subr.bf16.mxu0 0
      %201 = vmatpush1.bf16.xpose.msra.mxu0 0
      %202 = vmatprep.subr.bf16.mxu0 0
      %203 = vmatpush1.bf16.xpose.msra.mxu0 0
      %204 = vmatprep.subr.bf16.mxu0 0
      %205 = vmatpush1.bf16.xpose.msra.mxu0 0
      %206 = vmatprep.subr.bf16.mxu0 0
      %207 = vmatpush1.bf16.xpose.msra.mxu0 0
      %208 = vmatprep.subr.bf16.mxu0 0
      %209 = vmatpush1.bf16.xpose.msra.mxu0 %v192
      %210 = vmatprep.subr.bf16.mxu0 0
      %211 = vmatpush2.bf16.xpose.msra.mxu0 0
      %212 = vmatprep.subr.bf16.mxu0 0
      %213 = vmatpush2.bf16.xpose.msra.mxu0 0
      %214 = vmatprep.subr.bf16.mxu0 0
      %215 = vmatpush2.bf16.xpose.msra.mxu0 0
      %216 = vmatprep.subr.bf16.mxu0 0
      %217 = vmatpush2.bf16.xpose.msra.mxu0 0
      %218 = vmatprep.subr.bf16.mxu0 0
      %219 = vmatpush2.bf16.xpose.msra.mxu0 0
      %220 = vmatprep.subr.bf16.mxu0 0
      %221 = vmatpush2.bf16.xpose.msra.mxu0 0
      %222 = vmatprep.subr.bf16.mxu0 0
      %223 = vmatpush2.bf16.xpose.msra.mxu0 0
      %224 = vmatprep.subr.bf16.mxu0 0
      %225 = vmatpush2.bf16.xpose.msra.mxu0 0
      %226 = vmatprep.mubr.bf16.mxu0 0
      %227 = vmatmul.mubr.bf16.gmra.mxu0 %v189
      %v228 = vpop.f32.mrf.mxu0
      %v229 = vadd.f32 0.0, %v228
      %v230 = vpop.f32.mrf.mxu0
      %v231 = vpop.f32.mrf.mxu0
      %v232 = vpop.f32.mrf.mxu0
      %233 = vdwg.mxu0
      %vm234 = vcmask 8192
      %v235 = vsel %vm234, %v229, -inf
      %236 = vmax.xlane.f32.xlu0 %v235
      %v237 = vpop.xlane.xlu0 %236
      %v238 = vsub.f32 %v229, %v237
      %v239 = vmul.f32 %v238, 1.442695
      %v240 = vpow.pop %v239
      %v241 = vsel %vm234, %v240, 0.0
      %242 = vadd.xlane.f32.xlu0 %v241
      %v243 = vpop.xlane.xlu0 %242
      %v244 = vlog2.pop %v243
      %v245 = vmul.f32 %v244, 0.6931472
      %v246 = vadd.f32 %v245, %v237
      %v247 = vsub.f32 %v229, %v246
      %248 = vst.msk [vmem:[%s180] sm:$0x1] %vm234, %v247
      %v249 = vlaneseq
      %v250 = vand.u32 %v249, 127
      %vm251 = vcmp.ge.f32.partialorder %v229, %v237
      %v252 = vsel %vm251, %v250, 2
      %v253 = vsel %vm234, %v252, 2147483647
      %v254 = vand.u32 %v253, 65535
      %v255 = vshra.s32 %v253, 16
      %v256 = vcvt.s32.f32 %v254
      %v257 = vcvt.s32.f32 %v255
      %258 = vmin.xlane.f32.xlu0 %v257
      %v259 = vpop.xlane.xlu0 %258
      %vm260 = vcmp.eq.f32.partialorder %v257, %v259
      %v261 = vsel %vm260, %v256, inf
      %262 = vmin.xlane.f32.xlu0 %v261
      %v263 = vpop.xlane.xlu0 %262
      %v264 = vcvt.f32.s32 %v263
      %v265 = vcvt.f32.s32 %v259
      %v266 = vshll.u32 %v265, 16
      %v267 = vadd.s32 %v266, %v264
      %vm268 = vcmask 0
      %269 = vst.msk [vmem:[%s183] sm:$0x1] %vm268, %v267
      %p270 = scmp.lt.s32.totalorder %s15, 1
      %s271 = scalar_select %p270, %s15, 1
      %s272 = scalar_lea.vmem %s2, %s271
      %p273 = scmp.lt.s32.totalorder %s15, 1
      %s274 = scalar_select %p273, %s15, 1
      %s275 = scalar_lea.vmem %s3, %s274
      // Predicated region
      $region29: #{meta_forward.7} parent=27 // pred_check
        %p276 = pneg %p85
      $region30: #{meta_forward.7} parent=27 // pred_check_branch
        %278 = sbr.rel (%p276) target = $region32
      $region31: #{meta_forward.7} parent=27 // pred_region
        _
      $region32: #{meta_forward.7} parent=27 // pred_fallthru
        _
      // Predicated region
      $region33: #{meta_forward.7} parent=27 // pred_check
        %p279 = pneg %p111
      $region34: #{meta_forward.7} parent=27 // pred_check_branch
        %281 = sbr.rel (%p279) target = $region36
      $region35: #{meta_forward.7} parent=27 // pred_region
        _
      $region36: #{meta_forward.7} parent=27 // pred_fallthru
        _
    $region28: #{meta_forward.7} parent=5 // pred_fallthru
      _
    %p282 = scmp.le.s32.totalorder 2, %s10
    // Predicated region
    $region37: #{meta_forward.7} parent=5 // pred_check
      %p283 = pneg %p282
    $region38: #{meta_forward.7} parent=5 // pred_check_branch
      %285 = sbr.rel (%p283) target = $region40
    $region39: #{meta_forward.7} parent=5 // pred_region
      %s286 = ssub.s32 %s10, 2
      // Predicated region
      $region41: #{meta_forward.7} parent=39 // pred_check
        %p287 = pneg %p91
      $region42: #{meta_forward.7} parent=39 // pred_check_branch
        %289 = sbr.rel (%p287) target = $region44
      $region43: #{meta_forward.7} parent=39 // pred_region
        %p290 = scmp.lt.s32.totalorder %s16, 1
        %s291 = scalar_select %p290, %s16, 1
        %s292 = scalar_lea.vmem %s2, %s291
      $region44: #{meta_forward.7} parent=39 // pred_fallthru
        _
      // Predicated region
      $region45: #{meta_forward.7} parent=39 // pred_check
        %p293 = pneg %p117
      $region46: #{meta_forward.7} parent=39 // pred_check_branch
        %295 = sbr.rel (%p293) target = $region48
      $region47: #{meta_forward.7} parent=39 // pred_region
        %p296 = scmp.lt.s32.totalorder %s16, 1
        %s297 = scalar_select %p296, %s16, 1
        %s298 = scalar_lea.vmem %s3, %s297
      $region48: #{meta_forward.7} parent=39 // pred_fallthru
        _
    $region40: #{meta_forward.7} parent=5 // pred_fallthru
      _
  $region6: #{meta_forward.7} parent=0 // loop_footer
    %s14 = sadd.s32 1, %s10
  $region7: #{meta_forward.7} parent=0 // loop_footer_branch
    %9 = sbr.rel target = $region3
  $region8: #{meta_forward.7} parent=0 // loop_exit
    _

// kernel: meta_forward.4
$region0: #{meta_forward.4}
  #allocation0 [shape = 'u32[]', space=smem, size = 0x4, offset = 0x4, fixed_abs, tag = 'smem constant byte address 0x4 - core index']
  #allocation1 [shape = 'u32[144,128]{1,0:T(1,128)}', space=vmem, size = 0x12000, scoped, tag = 'internal scratch']
  #allocation2 [shape = 'f32[8,8,16]{2,1,0:T(8,128)}', space=vmem, size = 0x8000, scoped, tag = 'scratch operand']
  %s0 = inlined_call_operand.vmem [shape: f32[8,8,8], index: 0, kind: input, shape index: {}]
  %s1 = inlined_call_operand.vmem [shape: bf16[8,64], index: 1, kind: input, shape index: {}]
  %s2 = inlined_call_operand.vmem [shape: bf16[16,64], index: 2, kind: input, shape index: {}]
  %s3 = inlined_call_operand.vmem [shape: f32[1,64], index: 3, kind: input, shape index: {}]
  %s4 = inlined_call_operand.vmem [shape: f32[1,16], index: 4, kind: input, shape index: {}]
  %s5 = inlined_call_operand.vmem [shape: f32[1,16], index: 5, kind: input, shape index: {}]
  %s6 = inlined_call_operand.vmem [shape: f32[1,16], index: 6, kind: input, shape index: {}]
  %s7 = inlined_call_operand.vmem [shape: f32[1,16], index: 7, kind: input, shape index: {}]
  %s8 = inlined_call_operand.vmem [shape: f32[8,16], index: 8, kind: output, shape index: {0}]
  %s9 = inlined_call_operand.vmem [shape: f32[1,8,8,1], index: 9, kind: output, shape index: {1}]
  %10 = xla_tuple %s8, %s9
  %s11 = sld [smem:[#allocation0]]
  $region50: #{meta_forward.4} parent=0
    _
  %s13 = ssub.s32 1, %s11
  %s14 = scalar_select 0, %s13, %s11
  // Predicated region
  $region2: #{meta_forward.4} parent=0 // pred_check
    _
  $region3: #{meta_forward.4} parent=0 // pred_check_branch
    %16 = sbr.rel (0) target = $region5
  $region4: #{meta_forward.4} parent=0 // pred_region
    _
  $region5: #{meta_forward.4} parent=0 // pred_fallthru
    _
  // Predicated region
  $region6: #{meta_forward.4} parent=0 // pred_check
    _
  $region7: #{meta_forward.4} parent=0 // pred_check_branch
    %18 = sbr.rel (0) target = $region9
  $region8: #{meta_forward.4} parent=0 // pred_region
    _
  $region9: #{meta_forward.4} parent=0 // pred_fallthru
    _
  // Predicated region
  $region10: #{meta_forward.4} parent=0 // pred_check
    _
  $region11: #{meta_forward.4} parent=0 // pred_check_branch
    %20 = sbr.rel (0) target = $region13
  $region12: #{meta_forward.4} parent=0 // pred_region
    _
  $region13: #{meta_forward.4} parent=0 // pred_fallthru
    _
  // Predicated region
  $region14: #{meta_forward.4} parent=0 // pred_check
    _
  $region15: #{meta_forward.4} parent=0 // pred_check_branch
    %22 = sbr.rel (0) target = $region17
  $region16: #{meta_forward.4} parent=0 // pred_region
    _
  $region17: #{meta_forward.4} parent=0 // pred_fallthru
    _
  // Predicated region
  $region18: #{meta_forward.4} parent=0 // pred_check
    _
  $region19: #{meta_forward.4} parent=0 // pred_check_branch
    %24 = sbr.rel (0) target = $region21
  $region20: #{meta_forward.4} parent=0 // pred_region
    _
  $region21: #{meta_forward.4} parent=0 // pred_fallthru
    _
  // Predicated region
  $region22: #{meta_forward.4} parent=0 // pred_check
    _
  $region23: #{meta_forward.4} parent=0 // pred_check_branch
    %26 = sbr.rel (0) target = $region25
  $region24: #{meta_forward.4} parent=0 // pred_region
    _
  $region25: #{meta_forward.4} parent=0 // pred_fallthru
    _
  // Predicated region
  $region26: #{meta_forward.4} parent=0 // pred_check
    _
  $region27: #{meta_forward.4} parent=0 // pred_check_branch
    %28 = sbr.rel (0) target = $region29
  $region28: #{meta_forward.4} parent=0 // pred_region
    _
  $region29: #{meta_forward.4} parent=0 // pred_fallthru
    _
  // Predicated region
  $region30: #{meta_forward.4} parent=0 // pred_check
    _
  $region31: #{meta_forward.4} parent=0 // pred_check_branch
    %30 = sbr.rel (0) target = $region33
  $region32: #{meta_forward.4} parent=0 // pred_region
    _
  $region33: #{meta_forward.4} parent=0 // pred_fallthru
    _
  %v32 = vld [vmem:[%s0] sm:$0xff]
  %v33 = vld [vmem:[%s0 + $0x8] sm:$0xff]
  %v34 = vld [vmem:[%s0 + $0x10] sm:$0xff]
  %v35 = vld [vmem:[%s0 + $0x18] sm:$0xff]
  %v36 = vld [vmem:[%s0 + $0x20] sm:$0xff]
  %v37 = vld [vmem:[%s0 + $0x28] sm:$0xff]
  %v38 = vld [vmem:[%s0 + $0x30] sm:$0xff]
  %v39 = vld [vmem:[%s0 + $0x38] sm:$0xff]
  %v40 = vld [vmem:[%s1] sm:$0xf]
  %v41 = vld [vmem:[%s2] sm:$0xf]
  %v42 = vld [vmem:[%s2 + $0x4] sm:$0xf]
  %v43 = vld [vmem:[%s3] sm:$0x1]
  %v44 = vpack.c.bf16 %v33, %v32
  %v45 = vpack.c.bf16 %v35, %v34
  %v46 = vpack.c.bf16 %v37, %v36
  %v47 = vpack.c.bf16 %v39, %v38
  %v49 = vlaneseq
  %v50 = vshrl.u32 %v49, 7
  %v51 = vsub.s32 0, %v50
  %v52 = vrot.slane %v43, %v51
  %vm54 = vcmask 64512
  %v56 = vsel %vm54, %v44, 0
  %v59 = vsel %vm54, %v45, 0
  %v62 = vsel %vm54, %v46, 0
  %v65 = vsel %vm54, %v47, 0
  %vm67 = vcmask 1043456
  %v69 = vsel %vm67, %v40, 0
  %71 = vmatprep.subr.bf16.mxu0 0
  %72 = vmatpush1.bf16.msra.mxu0 0
  %73 = vmatprep.subr.bf16.mxu0 0
  %74 = vmatpush1.bf16.msra.mxu0 0
  %75 = vmatprep.subr.bf16.mxu0 0
  %76 = vmatpush1.bf16.msra.mxu0 0
  %77 = vmatprep.subr.bf16.mxu0 0
  %78 = vmatpush1.bf16.msra.mxu0 0
  %79 = vmatprep.subr.bf16.mxu0 0
  %80 = vmatpush1.bf16.msra.mxu0 0
  %81 = vmatprep.subr.bf16.mxu0 0
  %82 = vmatpush1.bf16.msra.mxu0 0
  %83 = vmatprep.subr.bf16.mxu0 0
  %84 = vmatpush1.bf16.msra.mxu0 0
  %85 = vmatprep.subr.bf16.mxu0 0
  %86 = vmatpush1.bf16.msra.mxu0 %v69
  %87 = vmatprep.subr.bf16.mxu0 0
  %88 = vmatpush2.bf16.msra.mxu0 0
  %89 = vmatprep.subr.bf16.mxu0 0
  %90 = vmatpush2.bf16.msra.mxu0 0
  %91 = vmatprep.subr.bf16.mxu0 0
  %92 = vmatpush2.bf16.msra.mxu0 0
  %93 = vmatprep.subr.bf16.mxu0 0
  %94 = vmatpush2.bf16.msra.mxu0 0
  %95 = vmatprep.subr.bf16.mxu0 0
  %96 = vmatpush2.bf16.msra.mxu0 0
  %97 = vmatprep.subr.bf16.mxu0 0
  %98 = vmatpush2.bf16.msra.mxu0 0
  %99 = vmatprep.subr.bf16.mxu0 0
  %100 = vmatpush2.bf16.msra.mxu0 0
  %101 = vmatprep.subr.bf16.mxu0 0
  %102 = vmatpush2.bf16.msra.mxu0 0
  %103 = vmatprep.mubr.bf16.mxu0 0
  %104 = vmatmul.mubr.bf16.gmra.mxu0 %v56
  %v105 = vpop.f32.mrf.mxu0
  %v106 = vadd.f32 %v52, %v105
  %v107 = vpop.f32.mrf.mxu0
  %v108 = vpop.f32.mrf.mxu0
  %v109 = vadd.f32 %v52, %v108
  %v110 = vpop.f32.mrf.mxu0
  %111 = vmatprep.mubr.bf16.mxu0 0
  %112 = vmatmul.mubr.bf16.gmra.mxu0 %v59
  %v113 = vpop.f32.mrf.mxu0
  %v114 = vadd.f32 %v52, %v113
  %v115 = vpop.f32.mrf.mxu0
  %v116 = vpop.f32.mrf.mxu0
  %v117 = vadd.f32 %v52, %v116
  %v118 = vpop.f32.mrf.mxu0
  %119 = vmatprep.mubr.bf16.mxu0 0
  %120 = vmatmul.mubr.bf16.gmra.mxu0 %v62
  %v121 = vpop.f32.mrf.mxu0
  %v122 = vadd.f32 %v52, %v121
  %v123 = vpop.f32.mrf.mxu0
  %v124 = vpop.f32.mrf.mxu0
  %v125 = vadd.f32 %v52, %v124
  %v126 = vpop.f32.mrf.mxu0
  %127 = vmatprep.mubr.bf16.mxu0 0
  %128 = vmatmul.mubr.bf16.gmra.mxu0 %v65
  %v129 = vpop.f32.mrf.mxu0
  %v130 = vadd.f32 %v52, %v129
  %v131 = vpop.f32.mrf.mxu0
  %v132 = vpop.f32.mrf.mxu0
  %v133 = vadd.f32 %v52, %v132
  %v134 = vpop.f32.mrf.mxu0
  %135 = vdwg.mxu0
  %v138 = vunpack.c.l.b16 %v41
  %v139 = vunpack.c.l.b16 %v42
  %v140 = vpack.c.b16 %v139, %v138
  %vm142 = vcmask 130048
  %v144 = vsel %vm142, 0, 0
  %146 = vmatprep.subr.bf16.mxu0 0
  %147 = vmatpush1.bf16.msra.mxu0 0
  %148 = vmatprep.subr.bf16.mxu0 0
  %149 = vmatpush1.bf16.msra.mxu0 0
  %150 = vmatprep.subr.bf16.mxu0 0
  %151 = vmatpush1.bf16.msra.mxu0 0
  %152 = vmatprep.subr.bf16.mxu0 0
  %153 = vmatpush1.bf16.msra.mxu0 0
  %154 = vmatprep.subr.bf16.mxu0 0
  %155 = vmatpush1.bf16.msra.mxu0 0
  %156 = vmatprep.subr.bf16.mxu0 0
  %157 = vmatpush1.bf16.msra.mxu0 0
  %158 = vmatprep.subr.bf16.mxu0 0
  %159 = vmatpush1.bf16.msra.mxu0 0
  %160 = vmatprep.subr.bf16.mxu0 0
  %161 = vmatpush1.bf16.msra.mxu0 %v140
  %162 = vmatprep.subr.bf16.mxu0 0
  %163 = vmatpush2.bf16.msra.mxu0 0
  %164 = vmatprep.subr.bf16.mxu0 0
  %165 = vmatpush2.bf16.msra.mxu0 0
  %166 = vmatprep.subr.bf16.mxu0 0
  %167 = vmatpush2.bf16.msra.mxu0 0
  %168 = vmatprep.subr.bf16.mxu0 0
  %169 = vmatpush2.bf16.msra.mxu0 0
  %170 = vmatprep.subr.bf16.mxu0 0
  %171 = vmatpush2.bf16.msra.mxu0 0
  %172 = vmatprep.subr.bf16.mxu0 0
  %173 = vmatpush2.bf16.msra.mxu0 0
  %174 = vmatprep.subr.bf16.mxu0 0
  %175 = vmatpush2.bf16.msra.mxu0 0
  %176 = vmatprep.subr.bf16.mxu0 0
  %177 = vmatpush2.bf16.msra.mxu0 0
  %178 = vmatprep.mubr.bf16.mxu0 0
  %179 = vmatmul.mubr.bf16.gmra.mxu0 %v144
  %v180 = vpop.f32.mrf.mxu0
  %v181 = vadd.f32 0.0, %v180
  %v182 = vpop.f32.mrf.mxu0
  %v183 = vpop.f32.mrf.mxu0
  %v184 = vpop.f32.mrf.mxu0
  %185 = vdwg.mxu0
  %v186 = vadd.f32 %v106, %v181
  %v187 = vxor.u32 %v186, 2147483648
  %v188 = vmul.f32 %v187, 1.442695
  %v189 = vpow.pop %v188
  %v190 = vadd.f32 %v189, 1.0
  %v191 = vrcp.pop %v190
  %v192 = vmul.f32 1.0, %v191
  %v193 = vtanh.pop %v186
  %v194 = vmul.f32 %v192, 0.0
  %196 = vrot.lane.b32.xlu0 %v193, 96
  %v197 = vpop.permute.xlu0 %196
  %v199 = vmul.f32 %v192, %v197
  %201 = vrot.lane.b32.xlu0 %v199, 16
  %v202 = vpop.permute.xlu0 %201
  %v204 = vadd.f32 %v194, %v202
  %v205 = vtanh.pop %v204
  %207 = vrot.lane.b32.xlu0 %v205, 32
  %v208 = vpop.permute.xlu0 %207
  %v210 = vmul.f32 %v192, %v208
  %212 = vrot.lane.b32.xlu0 %v210, 80
  %v213 = vpop.permute.xlu0 %212
  %215 = vst.msk [vmem:[#allocation2] sm:$0xff] %vm142, %v213
  %v216 = vpack.c.bf16 %v210, %v210
  %218 = vrot.lane.b32.xlu0 %v216, 80
  %v219 = vpop.permute.xlu0 %218
  %v221 = vsel %vm142, %v219, 0
  %223 = vmatprep.subr.bf16.mxu0 0
  %224 = vmatpush1.bf16.msra.mxu0 0
  %225 = vmatprep.subr.bf16.mxu0 0
  %226 = vmatpush1.bf16.msra.mxu0 0
  %227 = vmatprep.subr.bf16.mxu0 0
  %228 = vmatpush1.bf16.msra.mxu0 0
  %229 = vmatprep.subr.bf16.mxu0 0
  %230 = vmatpush1.bf16.msra.mxu0 0
  %231 = vmatprep.subr.bf16.mxu0 0
  %232 = vmatpush1.bf16.msra.mxu0 0
  %233 = vmatprep.subr.bf16.mxu0 0
  %234 = vmatpush1.bf16.msra.mxu0 0
  %235 = vmatprep.subr.bf16.mxu0 0
  %236 = vmatpush1.bf16.msra.mxu0 0
  %237 = vmatprep.subr.bf16.mxu0 0
  %238 = vmatpush1.bf16.msra.mxu0 %v140
  %239 = vmatprep.subr.bf16.mxu0 0
  %240 = vmatpush2.bf16.msra.mxu0 0
  %241 = vmatprep.subr.bf16.mxu0 0
  %242 = vmatpush2.bf16.msra.mxu0 0
  %243 = vmatprep.subr.bf16.mxu0 0
  %244 = vmatpush2.bf16.msra.mxu0 0
  %245 = vmatprep.subr.bf16.mxu0 0
  %246 = vmatpush2.bf16.msra.mxu0 0
  %247 = vmatprep.subr.bf16.mxu0 0
  %248 = vmatpush2.bf16.msra.mxu0 0
  %249 = vmatprep.subr.bf16.mxu0 0
  %250 = vmatpush2.bf16.msra.mxu0 0
  %251 = vmatprep.subr.bf16.mxu0 0
  %252 = vmatpush2.bf16.msra.mxu0 0
  %253 = vmatprep.subr.bf16.mxu0 0
  %254 = vmatpush2.bf16.msra.mxu0 0
  %255 = vmatprep.mubr.bf16.mxu0 0
  %256 = vmatmul.mubr.bf16.gmra.mxu0 %v221
  %v257 = vpop.f32.mrf.mxu0
  %v258 = vadd.f32 0.0, %v257
  %v259 = vpop.f32.mrf.mxu0
  %v260 = vpop.f32.mrf.mxu0
  %v261 = vpop.f32.mrf.mxu0
  %262 = vdwg.mxu0
  %v263 = vadd.f32 %v109, %v258
  %v264 = vxor.u32 %v263, 2147483648
  %v265 = vmul.f32 %v264, 1.442695
  %v266 = vpow.pop %v265
  %v267 = vadd.f32 %v266, 1.0
  %v268 = vrcp.pop %v267
  %v269 = vmul.f32 1.0, %v268
  %v270 = vtanh.pop %v263
  %v271 = vmul.f32 %v269, %v204
  %273 = vrot.lane.b32.xlu0 %v270, 96
  %v274 = vpop.permute.xlu0 %273
  %v276 = vmul.f32 %v269, %v274
  %278 = vrot.lane.b32.xlu0 %v276, 16
  %v279 = vpop.permute.xlu0 %278
  %v281 = vadd.f32 %v271, %v279
  %v282 = vtanh.pop %v281
  %284 = vrot.lane.b32.xlu0 %v282, 32
  %v285 = vpop.permute.xlu0 %284
  %v287 = vmul.f32 %v269, %v285
  %289 = vrot.lane.b32.xlu0 %v287, 80
  %v290 = vpop.permute.xlu0 %289
  %s292 = scalar_lea.vmem [#allocation2], 8
  %293 = vst.msk [vmem:[%s292] sm:$0xff] %vm142, %v290
  %v294 = vpack.c.bf16 %v287, %v287
  %296 = vrot.lane.b32.xlu0 %v294, 80
  %v297 = vpop.permute.xlu0 %296
  %v299 = vsel %vm142, %v297, 0
  %301 = vmatprep.subr.bf16.mxu0 0
  %302 = vmatpush1.bf16.msra.mxu0 0
  %303 = vmatprep.subr.bf16.mxu0 0
  %304 = vmatpush1.bf16.msra.mxu0 0
  %305 = vmatprep.subr.bf16.mxu0 0
  %306 = vmatpush1.bf16.msra.mxu0 0
  %307 = vmatprep.subr.bf16.mxu0 0
  %308 = vmatpush1.bf16.msra.mxu0 0
  %309 = vmatprep.subr.bf16.mxu0 0
  %310 = vmatpush1.bf16.msra.mxu0 0
  %311 = vmatprep.subr.bf16.mxu0 0
  %312 = vmatpush1.bf16.msra.mxu0 0
  %313 = vmatprep.subr.bf16.mxu0 0
  %314 = vmatpush1.bf16.msra.mxu0 0
  %315 = vmatprep.subr.bf16.mxu0 0
  %316 = vmatpush1.bf16.msra.mxu0 %v140
  %317 = vmatprep.subr.bf16.mxu0 0
  %318 = vmatpush2.bf16.msra.mxu0 0
  %319 = vmatprep.subr.bf16.mxu0 0
  %320 = vmatpush2.bf16.msra.mxu0 0
  %321 = vmatprep.subr.bf16.mxu0 0
  %322 = vmatpush2.bf16.msra.mxu0 0
  %323 = vmatprep.subr.bf16.mxu0 0
  %324 = vmatpush2.bf16.msra.mxu0 0
  %325 = vmatprep.subr.bf16.mxu0 0
  %326 = vmatpush2.bf16.msra.mxu0 0
  %327 = vmatprep.subr.bf16.mxu0 0
  %328 = vmatpush2.bf16.msra.mxu0 0
  %329 = vmatprep.subr.bf16.mxu0 0
  %330 = vmatpush2.bf16.msra.mxu0 0
  %331 = vmatprep.subr.bf16.mxu0 0
  %332 = vmatpush2.bf16.msra.mxu0 0
  %333 = vmatprep.mubr.bf16.mxu0 0
  %334 = vmatmul.mubr.bf16.gmra.mxu0 %v299
  %v335 = vpop.f32.mrf.mxu0
  %v336 = vadd.f32 0.0, %v335
  %v337 = vpop.f32.mrf.mxu0
  %v338 = vpop.f32.mrf.mxu0
  %v339 = vpop.f32.mrf.mxu0
  %340 = vdwg.mxu0
  %v341 = vadd.f32 %v114, %v336
  %v342 = vxor.u32 %v341, 2147483648
  %v343 = vmul.f32 %v342, 1.442695
  %v344 = vpow.pop %v343
  %v345 = vadd.f32 %v344, 1.0
  %v346 = vrcp.pop %v345
  %v347 = vmul.f32 1.0, %v346
  %v348 = vtanh.pop %v341
  %v349 = vmul.f32 %v347, %v281
  %351 = vrot.lane.b32.xlu0 %v348, 96
  %v352 = vpop.permute.xlu0 %351
  %v354 = vmul.f32 %v347, %v352
  %356 = vrot.lane.b32.xlu0 %v354, 16
  %v357 = vpop.permute.xlu0 %356
  %v359 = vadd.f32 %v349, %v357
  %v360 = vtanh.pop %v359
  %362 = vrot.lane.b32.xlu0 %v360, 32
  %v363 = vpop.permute.xlu0 %362
  %v365 = vmul.f32 %v347, %v363
  %367 = vrot.lane.b32.xlu0 %v365, 80
  %v368 = vpop.permute.xlu0 %367
  %s370 = scalar_lea.vmem [#allocation2], 16
  %371 = vst.msk [vmem:[%s370] sm:$0xff] %vm142, %v368
  %v372 = vpack.c.bf16 %v365, %v365
  %374 = vrot.lane.b32.xlu0 %v372, 80
  %v375 = vpop.permute.xlu0 %374
  %v377 = vsel %vm142, %v375, 0
  %379 = vmatprep.subr.bf16.mxu0 0
  %380 = vmatpush1.bf16.msra.mxu0 0
  %381 = vmatprep.subr.bf16.mxu0 0
  %382 = vmatpush1.bf16.msra.mxu0 0
  %383 = vmatprep.subr.bf16.mxu0 0
  %384 = vmatpush1.bf16.msra.mxu0 0
  %385 = vmatprep.subr.bf16.mxu0 0
  %386 = vmatpush1.bf16.msra.mxu0 0
  %387 = vmatprep.subr.bf16.mxu0 0
  %388 = vmatpush1.bf16.msra.mxu0 0
  %389 = vmatprep.subr.bf16.mxu0 0
  %390 = vmatpush1.bf16.msra.mxu0 0
  %391 = vmatprep.subr.bf16.mxu0 0
  %392 = vmatpush1.bf16.msra.mxu0 0
  %393 = vmatprep.subr.bf16.mxu0 0
  %394 = vmatpush1.bf16.msra.mxu0 %v140
  %395 = vmatprep.subr.bf16.mxu0 0
  %396 = vmatpush2.bf16.msra.mxu0 0
  %397 = vmatprep.subr.bf16.mxu0 0
  %398 = vmatpush2.bf16.msra.mxu0 0
  %399 = vmatprep.subr.bf16.mxu0 0
  %400 = vmatpush2.bf16.msra.mxu0 0
  %401 = vmatprep.subr.bf16.mxu0 0
  %402 = vmatpush2.bf16.msra.mxu0 0
  %403 = vmatprep.subr.bf16.mxu0 0
  %404 = vmatpush2.bf16.msra.mxu0 0
  %405 = vmatprep.subr.bf16.mxu0 0
  %406 = vmatpush2.bf16.msra.mxu0 0
  %407 = vmatprep.subr.bf16.mxu0 0
  %408 = vmatpush2.bf16.msra.mxu0 0
  %409 = vmatprep.subr.bf16.mxu0 0
  %410 = vmatpush2.bf16.msra.mxu0 0
  %411 = vmatprep.mubr.bf16.mxu0 0
  %412 = vmatmul.mubr.bf16.gmra.mxu0 %v377
  %v413 = vpop.f32.mrf.mxu0
  %v414 = vadd.f32 0.0, %v413
  %v415 = vpop.f32.mrf.mxu0
  %v416 = vpop.f32.mrf.mxu0
  %v417 = vpop.f32.mrf.mxu0
  %418 = vdwg.mxu0
  %v419 = vadd.f32 %v117, %v414
  %v420 = vxor.u32 %v419, 2147483648
  %v421 = vmul.f32 %v420, 1.442695
  %v422 = vpow.pop %v421
  %v423 = vadd.f32 %v422, 1.0
  %v424 = vrcp.pop %v423
  %v425 = vmul.f32 1.0, %v424
  %v426 = vtanh.pop %v419
  %v427 = vmul.f32 %v425, %v359
  %429 = vrot.lane.b32.xlu0 %v426, 96
  %v430 = vpop.permute.xlu0 %429
  %v432 = vmul.f32 %v425, %v430
  %434 = vrot.lane.b32.xlu0 %v432, 16
  %v435 = vpop.permute.xlu0 %434
  %v437 = vadd.f32 %v427, %v435
  %v438 = vtanh.pop %v437
  %440 = vrot.lane.b32.xlu0 %v438, 32
  %v441 = vpop.permute.xlu0 %440
  %v443 = vmul.f32 %v425, %v441
  %445 = vrot.lane.b32.xlu0 %v443, 80
  %v446 = vpop.permute.xlu0 %445
  %s448 = scalar_lea.vmem [#allocation2], 24
  %449 = vst.msk [vmem:[%s448] sm:$0xff] %vm142, %v446
  %v450 = vpack.c.bf16 %v443, %v443
  %452 = vrot.lane.b32.xlu0 %v450, 80
  %v453 = vpop.permute.xlu0 %452
  %v455 = vsel %vm142, %v453, 0
  %457 = vmatprep.subr.bf16.mxu0 0
  %458 = vmatpush1.bf16.msra.mxu0 0
  %459 = vmatprep.subr.bf16.mxu0 0
  %460 = vmatpush1.bf16.msra.mxu0 0
  %461 = vmatprep.subr.bf16.mxu0 0
  %462 = vmatpush1.bf16.msra.mxu0 0
  %463 = vmatprep.subr.bf16.mxu0 0
  %464 = vmatpush1.bf16.msra.mxu0 0
  %465 = vmatprep.subr.bf16.mxu0 0
  %466 = vmatpush1.bf16.msra.mxu0 0
  %467 = vmatprep.subr.bf16.mxu0 0
  %468 = vmatpush1.bf16.msra.mxu0 0
  %469 = vmatprep.subr.bf16.mxu0 0
  %470 = vmatpush1.bf16.msra.mxu0 0
  %471 = vmatprep.subr.bf16.mxu0 0
  %472 = vmatpush1.bf16.msra.mxu0 %v140
  %473 = vmatprep.subr.bf16.mxu0 0
  %474 = vmatpush2.bf16.msra.mxu0 0
  %475 = vmatprep.subr.bf16.mxu0 0
  %476 = vmatpush2.bf16.msra.mxu0 0
  %477 = vmatprep.subr.bf16.mxu0 0
  %478 = vmatpush2.bf16.msra.mxu0 0
  %479 = vmatprep.subr.bf16.mxu0 0
  %480 = vmatpush2.bf16.msra.mxu0 0
  %481 = vmatprep.subr.bf16.mxu0 0
  %482 = vmatpush2.bf16.msra.mxu0 0
  %483 = vmatprep.subr.bf16.mxu0 0
  %484 = vmatpush2.bf16.msra.mxu0 0
  %485 = vmatprep.subr.bf16.mxu0 0
  %486 = vmatpush2.bf16.msra.mxu0 0
  %487 = vmatprep.subr.bf16.mxu0 0
  %488 = vmatpush2.bf16.msra.mxu0 0
  %489 = vmatprep.mubr.bf16.mxu0 0
  %490 = vmatmul.mubr.bf16.gmra.mxu0 %v455
  %v491 = vpop.f32.mrf.mxu0
  %v492 = vadd.f32 0.0, %v491
  %v493 = vpop.f32.mrf.mxu0
  %v494 = vpop.f32.mrf.mxu0
  %v495 = vpop.f32.mrf.mxu0
  %496 = vdwg.mxu0
  %v497 = vadd.f32 %v122, %v492
  %v498 = vxor.u32 %v497, 2147483648
  %v499 = vmul.f32 %v498, 1.442695
  %v500 = vpow.pop %v499
  %v501 = vadd.f32 %v500, 1.0
  %v502 = vrcp.pop %v501
  %v503 = vmul.f32 1.0, %v502
  %v504 = vtanh.pop %v497
  %v505 = vmul.f32 %v503, %v437
  %507 = vrot.lane.b32.xlu0 %v504, 96
  %v508 = vpop.permute.xlu0 %507
  %v510 = vmul.f32 %v503, %v508
  %512 = vrot.lane.b32.xlu0 %v510, 16
  %v513 = vpop.permute.xlu0 %512
  %v515 = vadd.f32 %v505, %v513
  %v516 = vtanh.pop %v515
  %518 = vrot.lane.b32.xlu0 %v516, 32
  %v519 = vpop.permute.xlu0 %518
  %v521 = vmul.f32 %v503, %v519
  %523 = vrot.lane.b32.xlu0 %v521, 80
  %v524 = vpop.permute.xlu0 %523
  %s526 = scalar_lea.vmem [#allocation2], 32
  %527 = vst.msk [vmem:[%s526] sm:$0xff] %vm142, %v524
  %v528 = vpack.c.bf16 %v521, %v521
  %530 = vrot.lane.b32.xlu0 %v528, 80
  %v531 = vpop.permute.xlu0 %530
  %v533 = vsel %vm142, %v531, 0
  %535 = vmatprep.subr.bf16.mxu0 0
  %536 = vmatpush1.bf16.msra.mxu0 0
  %537 = vmatprep.subr.bf16.mxu0 0
  %538 = vmatpush1.bf16.msra.mxu0 0
  %539 = vmatprep.subr.bf16.mxu0 0
  %540 = vmatpush1.bf16.msra.mxu0 0
  %541 = vmatprep.subr.bf16.mxu0 0
  %542 = vmatpush1.bf16.msra.mxu0 0
  %543 = vmatprep.subr.bf16.mxu0 0
  %544 = vmatpush1.bf16.msra.mxu0 0
  %545 = vmatprep.subr.bf16.mxu0 0
  %546 = vmatpush1.bf16.msra.mxu0 0
  %547 = vmatprep.subr.bf16.mxu0 0
  %548 = vmatpush1.bf16.msra.mxu0 0
  %549 = vmatprep.subr.bf16.mxu0 0
  %550 = vmatpush1.bf16.msra.mxu0 %v140
  %551 = vmatprep.subr.bf16.mxu0 0
  %552 = vmatpush2.bf16.msra.mxu0 0
  %553 = vmatprep.subr.bf16.mxu0 0
  %554 = vmatpush2.bf16.msra.mxu0 0
  %555 = vmatprep.subr.bf16.mxu0 0
  %556 = vmatpush2.bf16.msra.mxu0 0
  %557 = vmatprep.subr.bf16.mxu0 0
  %558 = vmatpush2.bf16.msra.mxu0 0
  %559 = vmatprep.subr.bf16.mxu0 0
  %560 = vmatpush2.bf16.msra.mxu0 0
  %561 = vmatprep.subr.bf16.mxu0 0
  %562 = vmatpush2.bf16.msra.mxu0 0
  %563 = vmatprep.subr.bf16.mxu0 0
  %564 = vmatpush2.bf16.msra.mxu0 0
  %565 = vmatprep.subr.bf16.mxu0 0
  %566 = vmatpush2.bf16.msra.mxu0 0
  %567 = vmatprep.mubr.bf16.mxu0 0
  %568 = vmatmul.mubr.bf16.gmra.mxu0 %v533
  %v569 = vpop.f32.mrf.mxu0
  %v570 = vadd.f32 0.0, %v569
  %v571 = vpop.f32.mrf.mxu0
  %v572 = vpop.f32.mrf.mxu0
  %v573 = vpop.f32.mrf.mxu0
  %574 = vdwg.mxu0
  %v575 = vadd.f32 %v125, %v570
  %v576 = vxor.u32 %v575, 2147483648
  %v577 = vmul.f32 %v576, 1.442695
  %v578 = vpow.pop %v577
  %v579 = vadd.f32 %v578, 1.0
  %v580 = vrcp.pop %v579
  %v581 = vmul.f32 1.0, %v580
  %v582 = vtanh.pop %v575
  %v583 = vmul.f32 %v581, %v515
  %585 = vrot.lane.b32.xlu0 %v582, 96
  %v586 = vpop.permute.xlu0 %585
  %v588 = vmul.f32 %v581, %v586
  %590 = vrot.lane.b32.xlu0 %v588, 16
  %v591 = vpop.permute.xlu0 %590
  %v593 = vadd.f32 %v583, %v591
  %v594 = vtanh.pop %v593
  %596 = vrot.lane.b32.xlu0 %v594, 32
  %v597 = vpop.permute.xlu0 %596
  %v599 = vmul.f32 %v581, %v597
  %601 = vrot.lane.b32.xlu0 %v599, 80
  %v602 = vpop.permute.xlu0 %601
  %s604 = scalar_lea.vmem [#allocation2], 40
  %605 = vst.msk [vmem:[%s604] sm:$0xff] %vm142, %v602
  %v606 = vpack.c.bf16 %v599, %v599
  %608 = vrot.lane.b32.xlu0 %v606, 80
  %v609 = vpop.permute.xlu0 %608
  %v611 = vsel %vm142, %v609, 0
  %613 = vmatprep.subr.bf16.mxu0 0
  %614 = vmatpush1.bf16.msra.mxu0 0
  %615 = vmatprep.subr.bf16.mxu0 0
  %616 = vmatpush1.bf16.msra.mxu0 0
  %617 = vmatprep.subr.bf16.mxu0 0
  %618 = vmatpush1.bf16.msra.mxu0 0
  %619 = vmatprep.subr.bf16.mxu0 0
  %620 = vmatpush1.bf16.msra.mxu0 0
  %621 = vmatprep.subr.bf16.mxu0 0
  %622 = vmatpush1.bf16.msra.mxu0 0
  %623 = vmatprep.subr.bf16.mxu0 0
  %624 = vmatpush1.bf16.msra.mxu0 0
  %625 = vmatprep.subr.bf16.mxu0 0
  %626 = vmatpush1.bf16.msra.mxu0 0
  %627 = vmatprep.subr.bf16.mxu0 0
  %628 = vmatpush1.bf16.msra.mxu0 %v140
  %629 = vmatprep.subr.bf16.mxu0 0
  %630 = vmatpush2.bf16.msra.mxu0 0
  %631 = vmatprep.subr.bf16.mxu0 0
  %632 = vmatpush2.bf16.msra.mxu0 0
  %633 = vmatprep.subr.bf16.mxu0 0
  %634 = vmatpush2.bf16.msra.mxu0 0
  %635 = vmatprep.subr.bf16.mxu0 0
  %636 = vmatpush2.bf16.msra.mxu0 0
  %637 = vmatprep.subr.bf16.mxu0 0
  %638 = vmatpush2.bf16.msra.mxu0 0
  %639 = vmatprep.subr.bf16.mxu0 0
  %640 = vmatpush2.bf16.msra.mxu0 0
  %641 = vmatprep.subr.bf16.mxu0 0
  %642 = vmatpush2.bf16.msra.mxu0 0
  %643 = vmatprep.subr.bf16.mxu0 0
  %644 = vmatpush2.bf16.msra.mxu0 0
  %645 = vmatprep.mubr.bf16.mxu0 0
  %646 = vmatmul.mubr.bf16.gmra.mxu0 %v611
  %v647 = vpop.f32.mrf.mxu0
  %v648 = vadd.f32 0.0, %v647
  %v649 = vpop.f32.mrf.mxu0
  %v650 = vpop.f32.mrf.mxu0
  %v651 = vpop.f32.mrf.mxu0
  %652 = vdwg.mxu0
  %v653 = vadd.f32 %v130, %v648
  %v654 = vxor.u32 %v653, 2147483648
  %v655 = vmul.f32 %v654, 1.442695
  %v656 = vpow.pop %v655
  %v657 = vadd.f32 %v656, 1.0
  %v658 = vrcp.pop %v657
  %v659 = vmul.f32 1.0, %v658
  %v660 = vtanh.pop %v653
  %v661 = vmul.f32 %v659, %v593
  %663 = vrot.lane.b32.xlu0 %v660, 96
  %v664 = vpop.permute.xlu0 %663
  %v666 = vmul.f32 %v659, %v664
  %668 = vrot.lane.b32.xlu0 %v666, 16
  %v669 = vpop.permute.xlu0 %668
  %v671 = vadd.f32 %v661, %v669
  %v672 = vtanh.pop %v671
  %674 = vrot.lane.b32.xlu0 %v672, 32
  %v675 = vpop.permute.xlu0 %674
  %v677 = vmul.f32 %v659, %v675
  %679 = vrot.lane.b32.xlu0 %v677, 80
  %v680 = vpop.permute.xlu0 %679
  %s682 = scalar_lea.vmem [#allocation2], 48
  %683 = vst.msk [vmem:[%s682] sm:$0xff] %vm142, %v680
  %v684 = vpack.c.bf16 %v677, %v677
  %686 = vrot.lane.b32.xlu0 %v684, 80
  %v687 = vpop.permute.xlu0 %686
  %v689 = vsel %vm142, %v687, 0
  %691 = vmatprep.subr.bf16.mxu0 0
  %692 = vmatpush1.bf16.msra.mxu0 0
  %693 = vmatprep.subr.bf16.mxu0 0
  %694 = vmatpush1.bf16.msra.mxu0 0
  %695 = vmatprep.subr.bf16.mxu0 0
  %696 = vmatpush1.bf16.msra.mxu0 0
  %697 = vmatprep.subr.bf16.mxu0 0
  %698 = vmatpush1.bf16.msra.mxu0 0
  %699 = vmatprep.subr.bf16.mxu0 0
  %700 = vmatpush1.bf16.msra.mxu0 0
  %701 = vmatprep.subr.bf16.mxu0 0
  %702 = vmatpush1.bf16.msra.mxu0 0
  %703 = vmatprep.subr.bf16.mxu0 0
  %704 = vmatpush1.bf16.msra.mxu0 0
  %705 = vmatprep.subr.bf16.mxu0 0
  %706 = vmatpush1.bf16.msra.mxu0 %v140
  %707 = vmatprep.subr.bf16.mxu0 0
  %708 = vmatpush2.bf16.msra.mxu0 0
  %709 = vmatprep.subr.bf16.mxu0 0
  %710 = vmatpush2.bf16.msra.mxu0 0
  %711 = vmatprep.subr.bf16.mxu0 0
  %712 = vmatpush2.bf16.msra.mxu0 0
  %713 = vmatprep.subr.bf16.mxu0 0
  %714 = vmatpush2.bf16.msra.mxu0 0
  %715 = vmatprep.subr.bf16.mxu0 0
  %716 = vmatpush2.bf16.msra.mxu0 0
  %717 = vmatprep.subr.bf16.mxu0 0
  %718 = vmatpush2.bf16.msra.mxu0 0
  %719 = vmatprep.subr.bf16.mxu0 0
  %720 = vmatpush2.bf16.msra.mxu0 0
  %721 = vmatprep.subr.bf16.mxu0 0
  %722 = vmatpush2.bf16.msra.mxu0 0
  %723 = vmatprep.mubr.bf16.mxu0 0
  %724 = vmatmul.mubr.bf16.gmra.mxu0 %v689
  %v725 = vpop.f32.mrf.mxu0
  %v726 = vadd.f32 0.0, %v725
  %v727 = vpop.f32.mrf.mxu0
  %v728 = vpop.f32.mrf.mxu0
  %v729 = vpop.f32.mrf.mxu0
  %730 = vdwg.mxu0
  %v731 = vadd.f32 %v133, %v726
  %v732 = vxor.u32 %v731, 2147483648
  %v733 = vmul.f32 %v732, 1.442695
  %v734 = vpow.pop %v733
  %v735 = vadd.f32 %v734, 1.0
  %v736 = vrcp.pop %v735
  %v737 = vmul.f32 1.0, %v736
  %v738 = vtanh.pop %v731
  %v739 = vmul.f32 %v737, %v671
  %741 = vrot.lane.b32.xlu0 %v738, 96
  %v742 = vpop.permute.xlu0 %741
  %v744 = vmul.f32 %v737, %v742
  %746 = vrot.lane.b32.xlu0 %v744, 16
  %v747 = vpop.permute.xlu0 %746
  %v749 = vadd.f32 %v739, %v747
  %v750 = vtanh.pop %v749
  %752 = vrot.lane.b32.xlu0 %v750, 32
  %v753 = vpop.permute.xlu0 %752
  %v755 = vmul.f32 %v737, %v753
  %757 = vrot.lane.b32.xlu0 %v755, 80
  %v758 = vpop.permute.xlu0 %757
  %s760 = scalar_lea.vmem [#allocation2], 56
  %761 = vst.msk [vmem:[%s760] sm:$0xff] %vm142, %v758
  %v762 = vld [vmem:[#allocation2] sm:$0xff]
  %v763 = vld [vmem:[#allocation2 + $0x8] sm:$0xff]
  %v764 = vld [vmem:[#allocation2 + $0x10] sm:$0xff]
  %v765 = vld [vmem:[#allocation2 + $0x18] sm:$0xff]
  %v766 = vld [vmem:[#allocation2 + $0x20] sm:$0xff]
  %v767 = vld [vmem:[#allocation2 + $0x28] sm:$0xff]
  %v768 = vld [vmem:[#allocation2 + $0x30] sm:$0xff]
  %v769 = vld [vmem:[#allocation2 + $0x38] sm:$0xff]
  %v770 = vmul.f32 %v762, %v758
  %v771 = vmul.f32 %v763, %v758
  %v772 = vmul.f32 %v764, %v758
  %v773 = vmul.f32 %v765, %v758
  %v774 = vmul.f32 %v766, %v758
  %v775 = vmul.f32 %v767, %v758
  %v776 = vmul.f32 %v768, %v758
  %v777 = vmul.f32 %v769, %v758
  %v778 = vsel %vm142, %v770, 0.0
  %779 = vadd.xlane.f32.xlu0 %v778
  %v780 = vpop.xlane.xlu0 %779
  %v781 = vsel %vm142, %v771, 0.0
  %782 = vadd.xlane.f32.xlu0 %v781
  %v783 = vpop.xlane.xlu0 %782
  %v784 = vsel %vm142, %v772, 0.0
  %785 = vadd.xlane.f32.xlu0 %v784
  %v786 = vpop.xlane.xlu0 %785
  %v787 = vsel %vm142, %v773, 0.0
  %788 = vadd.xlane.f32.xlu0 %v787
  %v789 = vpop.xlane.xlu0 %788
  %v790 = vsel %vm142, %v774, 0.0
  %791 = vadd.xlane.f32.xlu0 %v790
  %v792 = vpop.xlane.xlu0 %791
  %v793 = vsel %vm142, %v775, 0.0
  %794 = vadd.xlane.f32.xlu0 %v793
  %v795 = vpop.xlane.xlu0 %794
  %v796 = vsel %vm142, %v776, 0.0
  %797 = vadd.xlane.f32.xlu0 %v796
  %v798 = vpop.xlane.xlu0 %797
  %v799 = vsel %vm142, %v777, 0.0
  %800 = vadd.xlane.f32.xlu0 %v799
  %v801 = vpop.xlane.xlu0 %800
  %v802 = vmax.f32 %v780, %v792
  %v803 = vmax.f32 %v783, %v795
  %v804 = vmax.f32 %v786, %v798
  %v805 = vmax.f32 %v789, %v801
  %v806 = vmax.f32 %v802, %v803
  %v807 = vmax.f32 %v804, %v805
  %v808 = vmax.f32 %v806, %v807
  %v809 = vsub.f32 %v780, %v808
  %v810 = vsub.f32 %v783, %v808
  %v811 = vsub.f32 %v786, %v808
  %v812 = vsub.f32 %v789, %v808
  %v813 = vsub.f32 %v792, %v808
  %v814 = vsub.f32 %v795, %v808
  %v815 = vsub.f32 %v798, %v808
  %v816 = vsub.f32 %v801, %v808
  %v817 = vmul.f32 %v809, 1.442695
  %v818 = vpow.pop %v817
  %v819 = vmul.f32 %v810, 1.442695
  %v820 = vpow.pop %v819
  %v821 = vmul.f32 %v811, 1.442695
  %v822 = vpow.pop %v821
  %v823 = vmul.f32 %v812, 1.442695
  %v824 = vpow.pop %v823
  %v825 = vmul.f32 %v813, 1.442695
  %v826 = vpow.pop %v825
  %v827 = vmul.f32 %v814, 1.442695
  %v828 = vpow.pop %v827
  %v829 = vmul.f32 %v815, 1.442695
  %v830 = vpow.pop %v829
  %v831 = vmul.f32 %v816, 1.442695
  %v832 = vpow.pop %v831
  %v833 = vadd.f32 %v818, %v820
  %v834 = vadd.f32 %v833, %v822
  %v835 = vadd.f32 %v834, %v824
  %v836 = vadd.f32 %v835, %v826
  %v837 = vadd.f32 %v836, %v828
  %v838 = vadd.f32 %v837, %v830
  %v839 = vadd.f32 %v838, %v832
  %v840 = vrcp.pop %v839
  %v841 = vmul.f32 %v818, %v840
  %v842 = vmul.f32 %v820, %v840
  %v843 = vmul.f32 %v822, %v840
  %v844 = vmul.f32 %v824, %v840
  %v845 = vmul.f32 %v826, %v840
  %v846 = vmul.f32 %v828, %v840
  %v847 = vmul.f32 %v830, %v840
  %v848 = vmul.f32 %v832, %v840
  %vm849 = vcmask 7168
  %850 = vst.msk [vmem:[%s9] sm:$0xff] %vm849, %v841
  %851 = vst.msk [vmem:[%s9 + $0x8] sm:$0xff] %vm849, %v842
  %852 = vst.msk [vmem:[%s9 + $0x10] sm:$0xff] %vm849, %v843
  %853 = vst.msk [vmem:[%s9 + $0x18] sm:$0xff] %vm849, %v844
  %854 = vst.msk [vmem:[%s9 + $0x20] sm:$0xff] %vm849, %v845
  %855 = vst.msk [vmem:[%s9 + $0x28] sm:$0xff] %vm849, %v846
  %856 = vst.msk [vmem:[%s9 + $0x30] sm:$0xff] %vm849, %v847
  %857 = vst.msk [vmem:[%s9 + $0x38] sm:$0xff] %vm849, %v848
  %v858 = vmul.f32 %v762, %v841
  %v859 = vmul.f32 %v763, %v842
  %v860 = vmul.f32 %v764, %v843
  %v861 = vmul.f32 %v765, %v844
  %v862 = vmul.f32 %v766, %v845
  %v863 = vmul.f32 %v767, %v846
  %v864 = vmul.f32 %v768, %v847
  %v865 = vmul.f32 %v769, %v848
  %v866 = vsel %vm142, %v858, 0.0
  %v867 = vsel %vm142, %v859, 0.0
  %v868 = vadd.f32 %v866, %v867
  %v869 = vsel %vm142, %v860, 0.0
  %v870 = vadd.f32 %v868, %v869
  %v871 = vsel %vm142, %v861, 0.0
  %v872 = vadd.f32 %v870, %v871
  %v873 = vsel %vm142, %v862, 0.0
  %v874 = vadd.f32 %v872, %v873
  %v875 = vsel %vm142, %v863, 0.0
  %v876 = vadd.f32 %v874, %v875
  %v877 = vsel %vm142, %v864, 0.0
  %v878 = vadd.f32 %v876, %v877
  %v879 = vsel %vm142, %v865, 0.0
  %v880 = vadd.f32 %v878, %v879
  %v881 = vld [vmem:[%s4] sm:$0x1]
  %v882 = vld [vmem:[%s5] sm:$0x1]
  %v883 = vsel %vm142, %v880, 0.0
  %884 = vadd.xlane.f32.xlu0 %v883
  %v885 = vpop.xlane.xlu0 %884
  %v886 = vrcp.pop 16.0
  %v887 = vmul.f32 %v885, %v886
  %v888 = vsub.f32 %v880, %v887
  %v889 = vmul.f32 %v888, %v888
  %v890 = vsel %vm142, %v889, 0.0
  %891 = vadd.xlane.f32.xlu0 %v890
  %v892 = vpop.xlane.xlu0 %891
  %v893 = vmul.f32 %v892, %v886
  %v894 = vadd.f32 %v893, 1e-05
  %v895 = vrsqrt.pop %v894
  %v896 = vmul.f32 %v888, %v895
  %v898 = vlaneseq
  %v899 = vshrl.u32 %v898, 7
  %v900 = vsub.s32 0, %v899
  %v901 = vrot.slane %v881, %v900
  %v903 = vmul.f32 %v896, %v901
  %v905 = vlaneseq
  %v906 = vshrl.u32 %v905, 7
  %v907 = vsub.s32 0, %v906
  %v908 = vrot.slane %v882, %v907
  %v910 = vadd.f32 %v903, %v908
  %v911 = vld [vmem:[%s6] sm:$0x1]
  %v912 = vld [vmem:[%s7] sm:$0x1]
  %v913 = vsel %vm142, %v910, 0.0
  %914 = vadd.xlane.f32.xlu0 %v913
  %v915 = vpop.xlane.xlu0 %914
  %v916 = vmul.f32 %v915, %v886
  %v917 = vsub.f32 %v910, %v916
  %v918 = vmul.f32 %v917, %v917
  %v919 = vsel %vm142, %v918, 0.0
  %920 = vadd.xlane.f32.xlu0 %v919
  %v921 = vpop.xlane.xlu0 %920
  %v922 = vmul.f32 %v921, %v886
  %v923 = vadd.f32 %v922, 1e-05
  %v924 = vrsqrt.pop %v923
  %v925 = vmul.f32 %v917, %v924
  %v927 = vlaneseq
  %v928 = vshrl.u32 %v927, 7
  %v929 = vsub.s32 0, %v928
  %v930 = vrot.slane %v911, %v929
  %v932 = vmul.f32 %v925, %v930
  %v934 = vlaneseq
  %v935 = vshrl.u32 %v934, 7
  %v936 = vsub.s32 0, %v935
  %v937 = vrot.slane %v912, %v936
  %v939 = vadd.f32 %v932, %v937
  %940 = vst.msk [vmem:[%s8] sm:$0xff] %vm142, %v939
  // Predicated region
  $region34: #{meta_forward.4} parent=0 // pred_check
    _
  $region35: #{meta_forward.4} parent=0 // pred_check_branch
    %942 = sbr.rel (0) target = $region37
  $region36: #{meta_forward.4} parent=0 // pred_region
    _
  $region37: #{meta_forward.4} parent=0 // pred_fallthru
    _
  // Predicated region
  $region38: #{meta_forward.4} parent=0 // pred_check
    _
  $region39: #{meta_forward.4} parent=0 // pred_check_branch
    %944 = sbr.rel (0) target = $region41
  $region40: #{meta_forward.4} parent=0 // pred_region
    _
  $region41: #{meta_forward.4} parent=0 // pred_fallthru
    _
  // Predicated region
  $region42: #{meta_forward.4} parent=0 // pred_check
    _
  $region43: #{meta_forward.4} parent=0 // pred_check_branch
    %946 = sbr.rel (0) target = $region45
  $region44: #{meta_forward.4} parent=0 // pred_region
    _
  $region45: #{meta_forward.4} parent=0 // pred_fallthru
    _
  // Predicated region
  $region46: #{meta_forward.4} parent=0 // pred_check
    _
  $region47: #{meta_forward.4} parent=0 // pred_check_branch
    %948 = sbr.rel (0) target = $region49
  $region48: #{meta_forward.4} parent=0 // pred_region
    _
  $region49: #{meta_forward.4} parent=0 // pred_fallthru
    _

</llo_original>
